<compile_context>
chip_gen: v7x
topology: tpu7x:2x2x1
jax: 0.10.0
libtpu: 0.0.40
codegen_flags: <defaults>
</compile_context>

<pallas_src>
import functools
import math

import jax
import jax.numpy as jnp
from jax import lax
from jax.experimental import pallas as pl
from jax.experimental.pallas import tpu as pltpu

BN_EPS = 1e-5
LEAKY_SLOPE = 0.2
O_LANE = 128                      # output channels padded to a lane-dense width


def _leaky(x):
    return jnp.where(x > 0, x, LEAKY_SLOPE * x)


def _round_up(x, m):
    return -(-x // m) * m


def _vmem_limit(block_bytes):
    """Per-call VMEM budget: 2x (double buffering) the live blocks + margin,
    clamped so it also fits v7x's 64 MiB physical VMEM (v5e/v6e have 128 MiB)."""
    need = 2 * int(block_bytes) + (4 << 20)
    return int(min(max(need, 16 << 20), 48 << 20))


# --------------------------- 4x4 / stride-2 conv ------------------------------

def _conv4x4s2_kernel(p00_ref, p01_ref, p10_ref, p11_ref, w_ref, y_ref,
                      *stat_refs, oh, ow, cin, o_pad, act, stats):
    """One image of a 4x4 / stride-2 / pad-1 conv.

    p{r}{c}_ref : [1, OH+1, OW+1, C]  parity phase (padded rows 2a+r, cols 2b+c);
                  together the 4 phases hold each padded input element once.
    w_ref       : [16, C, O_pad]      tap-major pre-transposed weights.
    y_ref       : [OH*OW, O_pad]      raw conv output, rows in (oh, ow) order.
    stat_refs   : optional ([1,1,O_pad], [1,1,O_pad]) per-image sum / sum-of-sq.
    """
    phases = (p00_ref, p01_ref, p10_ref, p11_ref)
    acc = jnp.zeros((oh * ow, o_pad), jnp.float32)
    for i in range(4):
        for j in range(4):
            p_ref = phases[(i % 2) * 2 + (j % 2)]
            # contiguous static slice of the phase block held in VMEM
            v = p_ref[0, pl.ds(i // 2, oh), pl.ds(j // 2, ow), :]     # [oh, ow, C]
            acc = acc + jnp.dot(v.reshape(oh * ow, cin), w_ref[i * 4 + j],
                                preferred_element_type=jnp.float32)
    if act == "leaky":
        acc = _leaky(acc)
    y = acc.astype(y_ref.dtype)
    y_ref[...] = y
    if stats:
        sum_ref, ssq_ref = stat_refs
        yf = y.astype(jnp.float32)   # stats of the values that get normalized
        sum_ref[...] = jnp.sum(yf, axis=0, keepdims=True)[None]
        ssq_ref[...] = jnp.sum(yf * yf, axis=0, keepdims=True)[None]


def conv4x4_s2(x_nhwc, wm, *, act, stats):
    """4x4 / stride-2 / pad-1 conv.  Returns y [N*OH*OW, O_pad] (+ per-image stats)."""
    n, h, w, c = x_nhwc.shape
    oh, ow = h // 2, w // 2
    o_pad = wm.shape[-1]

    # Pad once, split into the 4 (row, col) parity phases: each padded element
    # appears in exactly one phase, so the kernel reads the activation 1x.
    xp = jnp.pad(x_nhwc, ((0, 0), (1, 1), (1, 1), (0, 0)))
    phases = [xp[:, pi::2, pj::2, :] for pi in (0, 1) for pj in (0, 1)]
    # each phase: [N, OH+1, OW+1, C]

    kern = functools.partial(_conv4x4s2_kernel, oh=oh, ow=ow, cin=c,
                             o_pad=o_pad, act=act, stats=stats)
    phase_spec = pl.BlockSpec((1, oh + 1, ow + 1, c), lambda i: (i, 0, 0, 0))
    w_spec = pl.BlockSpec(wm.shape, lambda i: (0, 0, 0))
    y_spec = pl.BlockSpec((oh * ow, o_pad), lambda i: (i, 0))
    y_shape = jax.ShapeDtypeStruct((n * oh * ow, o_pad), jnp.bfloat16)

    if stats:
        stat_spec = pl.BlockSpec((1, 1, o_pad), lambda i: (i, 0, 0))
        stat_shape = jax.ShapeDtypeStruct((n, 1, o_pad), jnp.float32)
        out_shape = (y_shape, stat_shape, stat_shape)
        out_specs = (y_spec, stat_spec, stat_spec)
    else:
        out_shape = y_shape
        out_specs = y_spec

    block_bytes = (4 * (oh + 1) * (ow + 1) * c * 2 + wm.size * 2
                   + oh * ow * o_pad * 2 + (2 * o_pad * 4 if stats else 0))
    cost = pl.CostEstimate(
        flops=int(2 * n * oh * ow * 16 * c * o_pad),
        transcendentals=0,
        bytes_accessed=int(4 * n * (oh + 1) * (ow + 1) * c * 2 + wm.size * 2
                           + n * oh * ow * o_pad * 2
                           + (2 * n * o_pad * 4 if stats else 0)))

    return pl.pallas_call(
        kern,
        out_shape=out_shape,
        grid=(n,),
        in_specs=[phase_spec] * 4 + [w_spec],
        out_specs=out_specs,
        compiler_params=pltpu.CompilerParams(
            dimension_semantics=("parallel",),
            vmem_limit_bytes=_vmem_limit(block_bytes)),
        cost_estimate=cost,
    )(*phases, wm)


# ----------------------- final 4x4 conv (flatten + matmul) --------------------

def _dense_sigmoid_kernel(a_ref, w_ref, o_ref):
    acc = jnp.dot(a_ref[...], w_ref[...], preferred_element_type=jnp.float32)
    # exact sigmoid: exp on the EUP + true divide (final layer is tiny)
    o_ref[...] = (1.0 / (1.0 + jnp.exp(-acc))).astype(o_ref.dtype)


def dense_sigmoid(a, wm):
    m, k = a.shape
    o_pad = wm.shape[1]
    block_bytes = m * k * 2 + k * o_pad * 2 + m * o_pad * 4
    return pl.pallas_call(
        _dense_sigmoid_kernel,
        out_shape=jax.ShapeDtypeStruct((m, o_pad), jnp.float32),
        grid=(1,),
        in_specs=[pl.BlockSpec((m, k), lambda i: (0, 0)),
                  pl.BlockSpec((k, o_pad), lambda i: (0, 0))],
        out_specs=pl.BlockSpec((m, o_pad), lambda i: (0, 0)),
        compiler_params=pltpu.CompilerParams(
            dimension_semantics=("arbitrary",),
            vmem_limit_bytes=_vmem_limit(block_bytes)),
        cost_estimate=pl.CostEstimate(
            flops=int(2 * m * k * o_pad), transcendentals=int(m * o_pad),
            bytes_accessed=int(block_bytes)),
    )(a, wm)


# --------------------------------- model --------------------------------------

def init_discriminator_params(key, img_size, nc=3, n_filter=64):
    """DCGAN-style init: conv ~ N(0, 0.02); BN gamma=1 / beta=0.
    Conv weights are pre-transposed ONCE into tap-major matmul layout
    [kh*kw, C_in, O_pad] (bf16) with output channels padded to 128 lanes."""
    base = int(math.log2(img_size)) - 3
    keys = jax.random.split(key, base + 2)

    def conv_weight(k, cout, cin):
        w = jax.random.normal(k, (cout, cin, 4, 4), jnp.float32) * 0.02
        o_pad = _round_up(cout, O_LANE)
        wm = jnp.transpose(w, (2, 3, 1, 0)).reshape(16, cin, cout)   # (i,j,c,o)
        return jnp.pad(wm, ((0, 0), (0, 0), (0, o_pad - cout))).astype(jnp.bfloat16)

    convs = [dict(wm=conv_weight(keys[0], n_filter, nc), cout=n_filter, bn=None)]
    for i in range(1, base + 1):
        cin, cout = n_filter * 2 ** (i - 1), n_filter * 2 ** i
        convs.append(dict(wm=conv_weight(keys[i], cout, cin), cout=cout,
                          bn=(jnp.ones((cout,), jnp.float32),
                              jnp.zeros((cout,), jnp.float32))))

    # Final conv: 4x4 spatial input, 4x4 kernel, stride 1, pad 0 -> flatten + matmul.
    cin = n_filter * 2 ** base
    w = jax.random.normal(keys[base + 1], (1, cin, 4, 4), jnp.float32) * 0.02
    wfin = jnp.transpose(w, (2, 3, 1, 0)).reshape(16 * cin, 1)
    wfin = jnp.pad(wfin, ((0, 0), (0, O_LANE - 1))).astype(jnp.bfloat16)
    return dict(convs=convs, final=wfin)


def discriminator_forward(params, x_nchw):
    # NCHW -> NHWC once; bf16 activations between layers, f32 accumulation inside.
    h = jnp.transpose(x_nchw, (0, 2, 3, 1)).astype(jnp.bfloat16)
    n = h.shape[0]
    for lyr in params["convs"]:
        cout = lyr["cout"]
        oh, ow = h.shape[1] // 2, h.shape[2] // 2
        if lyr["bn"] is None:
            y = conv4x4_s2(h, lyr["wm"], act="leaky", stats=False)
            h = y[:, :cout].reshape(n, oh, ow, cout)
        else:
            gamma, beta = lyr["bn"]
            y, s, ss = conv4x4_s2(h, lyr["wm"], act=None, stats=True)
            cnt = n * oh * ow
            tot = jnp.sum(s, axis=0)[0, :cout]
            tot2 = jnp.sum(ss, axis=0)[0, :cout]
            mean = tot / cnt
            var = jnp.maximum(tot2 / cnt - mean * mean, 0.0)   # biased batch var
            # TODO(synk): E[x^2]-E[x]^2 can cancel for very large activations;
            # use a shifted / Welford formulation if BN stats accuracy matters.
            scale = gamma * lax.rsqrt(var + BN_EPS)
            shift = beta - mean * scale
            # Folded BN + LeakyReLU as plain jnp: XLA fuses this with the next
            # layer's pad/phase-split, so y makes exactly one HBM round trip.
            yv = y[:, :cout].astype(jnp.float32)
            h = _leaky(yv * scale + shift).astype(jnp.bfloat16).reshape(n, oh, ow, cout)
    a = h.reshape(n, -1)          # final 4x4 window == exact flatten, order (i,j,c)
    probs = dense_sigmoid(a, params["final"])
    return probs[:, :1].reshape(n, 1, 1, 1)


# ---------------------------------- main ---------------------------------------

if __name__ == "__main__":
    img_size = 16     # base = log2(16)-3 = 1 -> conv / conv+BN / final conv+sigmoid
    nc = 3
    n_filter = 8
    batch = 2

    key = jax.random.PRNGKey(0)
    k_params, k_x = jax.random.split(key)
    params = init_discriminator_params(k_params, img_size, nc=nc, n_filter=n_filter)
    x = jax.random.normal(k_x, (batch, nc, img_size, img_size), jnp.float32)

    fwd = jax.jit(functools.partial(discriminator_forward, params))
    out = jax.block_until_ready(fwd(x))

    assert out.shape == (batch, 1, 1, 1), out.shape
    assert bool(jnp.all(jnp.isfinite(out)))
    assert bool(jnp.all((out >= 0.0) & (out <= 1.0)))   # sigmoid range
    print("KERNEL_OK")
</pallas_src>

<mosaic_0001>
module attributes {stable_mosaic.version = 11 : i64} {
  func.func @_conv4x4s2_kernel(%arg0: i32, %arg1: memref<1x9x9x3xbf16, #tpu.memory_space<vmem>>, %arg2: memref<1x9x9x3xbf16, #tpu.memory_space<vmem>>, %arg3: memref<1x9x9x3xbf16, #tpu.memory_space<vmem>>, %arg4: memref<1x9x9x3xbf16, #tpu.memory_space<vmem>>, %arg5: memref<16x3x128xbf16, #tpu.memory_space<vmem>>, %arg6: memref<64x128xbf16, #tpu.memory_space<vmem>>) attributes {dimension_semantics = [#tpu.dimension_semantics<parallel>], iteration_bounds = array<i64: 2>, scalar_prefetch = 0 : i64, scratch_operands = 0 : i64, tpu.core_type = #tpu.core_type<tc>, window_params = [{transform_indices = @transform_0, window_bounds = array<i64: 1, 9, 9, 3>}, {transform_indices = @transform_1, window_bounds = array<i64: 1, 9, 9, 3>}, {transform_indices = @transform_2, window_bounds = array<i64: 1, 9, 9, 3>}, {transform_indices = @transform_3, window_bounds = array<i64: 1, 9, 9, 3>}, {pipeline_mode = #tpu.pipeline_mode<synchronous>, transform_indices = @transform_4, window_bounds = array<i64: 16, 3, 128>}, {transform_indices = @transform_5, window_bounds = array<i64: 64, 128>}]} {
    %cst = arith.constant 0.000000e+00 : f32
    %0 = vector.broadcast %cst : f32 to vector<64x128xf32>
    %c0 = arith.constant 0 : index
    %c0_0 = arith.constant 0 : index
    %c0_1 = arith.constant 0 : index
    %c0_2 = arith.constant 0 : index
    %1 = vector.load %arg1[%c0, %c0_0, %c0_1, %c0_2] : memref<1x9x9x3xbf16, #tpu.memory_space<vmem>>, vector<1x8x8x3xbf16>
    %2 = vector.shape_cast %1 : vector<1x8x8x3xbf16> to vector<8x8x3xbf16>
    %3 = vector.shape_cast %2 : vector<8x8x3xbf16> to vector<64x3xbf16>
    %c0_3 = arith.constant 0 : index
    %c0_4 = arith.constant 0 : index
    %c0_5 = arith.constant 0 : index
    %4 = vector.load %arg5[%c0_3, %c0_4, %c0_5] : memref<16x3x128xbf16, #tpu.memory_space<vmem>>, vector<1x3x128xbf16>
    %5 = vector.shape_cast %4 : vector<1x3x128xbf16> to vector<3x128xbf16>
    %cst_6 = arith.constant dense<0.000000e+00> : vector<64x128xf32>
    %6 = tpu.matmul %3, %5, %cst_6 {dimension_numbers = #tpu.dot_dimension_numbers<[1], [0], [0], [1], [0, 0, 1, 1], [], []>} : vector<64x3xbf16>, vector<3x128xbf16>, vector<64x128xf32> -> vector<64x128xf32>
    %7 = arith.addf %0, %6 : vector<64x128xf32>
    %c0_7 = arith.constant 0 : index
    %c0_8 = arith.constant 0 : index
    %c0_9 = arith.constant 0 : index
    %c0_10 = arith.constant 0 : index
    %8 = vector.load %arg2[%c0_7, %c0_8, %c0_9, %c0_10] : memref<1x9x9x3xbf16, #tpu.memory_space<vmem>>, vector<1x8x8x3xbf16>
    %9 = vector.shape_cast %8 : vector<1x8x8x3xbf16> to vector<8x8x3xbf16>
    %10 = vector.shape_cast %9 : vector<8x8x3xbf16> to vector<64x3xbf16>
    %c1 = arith.constant 1 : index
    %c0_11 = arith.constant 0 : index
    %c0_12 = arith.constant 0 : index
    %11 = vector.load %arg5[%c1, %c0_11, %c0_12] : memref<16x3x128xbf16, #tpu.memory_space<vmem>>, vector<1x3x128xbf16>
    %12 = vector.shape_cast %11 : vector<1x3x128xbf16> to vector<3x128xbf16>
    %cst_13 = arith.constant dense<0.000000e+00> : vector<64x128xf32>
    %13 = tpu.matmul %10, %12, %cst_13 {dimension_numbers = #tpu.dot_dimension_numbers<[1], [0], [0], [1], [0, 0, 1, 1], [], []>} : vector<64x3xbf16>, vector<3x128xbf16>, vector<64x128xf32> -> vector<64x128xf32>
    %14 = arith.addf %7, %13 : vector<64x128xf32>
    %c0_14 = arith.constant 0 : index
    %c0_15 = arith.constant 0 : index
    %c1_16 = arith.constant 1 : index
    %c0_17 = arith.constant 0 : index
    %15 = vector.load %arg1[%c0_14, %c0_15, %c1_16, %c0_17] : memref<1x9x9x3xbf16, #tpu.memory_space<vmem>>, vector<1x8x8x3xbf16>
    %16 = vector.shape_cast %15 : vector<1x8x8x3xbf16> to vector<8x8x3xbf16>
    %17 = vector.shape_cast %16 : vector<8x8x3xbf16> to vector<64x3xbf16>
    %c2 = arith.constant 2 : index
    %c0_18 = arith.constant 0 : index
    %c0_19 = arith.constant 0 : index
    %18 = vector.load %arg5[%c2, %c0_18, %c0_19] : memref<16x3x128xbf16, #tpu.memory_space<vmem>>, vector<1x3x128xbf16>
    %19 = vector.shape_cast %18 : vector<1x3x128xbf16> to vector<3x128xbf16>
    %cst_20 = arith.constant dense<0.000000e+00> : vector<64x128xf32>
    %20 = tpu.matmul %17, %19, %cst_20 {dimension_numbers = #tpu.dot_dimension_numbers<[1], [0], [0], [1], [0, 0, 1, 1], [], []>} : vector<64x3xbf16>, vector<3x128xbf16>, vector<64x128xf32> -> vector<64x128xf32>
    %21 = arith.addf %14, %20 : vector<64x128xf32>
    %c0_21 = arith.constant 0 : index
    %c0_22 = arith.constant 0 : index
    %c1_23 = arith.constant 1 : index
    %c0_24 = arith.constant 0 : index
    %22 = vector.load %arg2[%c0_21, %c0_22, %c1_23, %c0_24] : memref<1x9x9x3xbf16, #tpu.memory_space<vmem>>, vector<1x8x8x3xbf16>
    %23 = vector.shape_cast %22 : vector<1x8x8x3xbf16> to vector<8x8x3xbf16>
    %24 = vector.shape_cast %23 : vector<8x8x3xbf16> to vector<64x3xbf16>
    %c3 = arith.constant 3 : index
    %c0_25 = arith.constant 0 : index
    %c0_26 = arith.constant 0 : index
    %25 = vector.load %arg5[%c3, %c0_25, %c0_26] : memref<16x3x128xbf16, #tpu.memory_space<vmem>>, vector<1x3x128xbf16>
    %26 = vector.shape_cast %25 : vector<1x3x128xbf16> to vector<3x128xbf16>
    %cst_27 = arith.constant dense<0.000000e+00> : vector<64x128xf32>
    %27 = tpu.matmul %24, %26, %cst_27 {dimension_numbers = #tpu.dot_dimension_numbers<[1], [0], [0], [1], [0, 0, 1, 1], [], []>} : vector<64x3xbf16>, vector<3x128xbf16>, vector<64x128xf32> -> vector<64x128xf32>
    %28 = arith.addf %21, %27 : vector<64x128xf32>
    %c0_28 = arith.constant 0 : index
    %c0_29 = arith.constant 0 : index
    %c0_30 = arith.constant 0 : index
    %c0_31 = arith.constant 0 : index
    %29 = vector.load %arg3[%c0_28, %c0_29, %c0_30, %c0_31] : memref<1x9x9x3xbf16, #tpu.memory_space<vmem>>, vector<1x8x8x3xbf16>
    %30 = vector.shape_cast %29 : vector<1x8x8x3xbf16> to vector<8x8x3xbf16>
    %31 = vector.shape_cast %30 : vector<8x8x3xbf16> to vector<64x3xbf16>
    %c4 = arith.constant 4 : index
    %c0_32 = arith.constant 0 : index
    %c0_33 = arith.constant 0 : index
    %32 = vector.load %arg5[%c4, %c0_32, %c0_33] : memref<16x3x128xbf16, #tpu.memory_space<vmem>>, vector<1x3x128xbf16>
    %33 = vector.shape_cast %32 : vector<1x3x128xbf16> to vector<3x128xbf16>
    %cst_34 = arith.constant dense<0.000000e+00> : vector<64x128xf32>
    %34 = tpu.matmul %31, %33, %cst_34 {dimension_numbers = #tpu.dot_dimension_numbers<[1], [0], [0], [1], [0, 0, 1, 1], [], []>} : vector<64x3xbf16>, vector<3x128xbf16>, vector<64x128xf32> -> vector<64x128xf32>
    %35 = arith.addf %28, %34 : vector<64x128xf32>
    %c0_35 = arith.constant 0 : index
    %c0_36 = arith.constant 0 : index
    %c0_37 = arith.constant 0 : index
    %c0_38 = arith.constant 0 : index
    %36 = vector.load %arg4[%c0_35, %c0_36, %c0_37, %c0_38] : memref<1x9x9x3xbf16, #tpu.memory_space<vmem>>, vector<1x8x8x3xbf16>
    %37 = vector.shape_cast %36 : vector<1x8x8x3xbf16> to vector<8x8x3xbf16>
    %38 = vector.shape_cast %37 : vector<8x8x3xbf16> to vector<64x3xbf16>
    %c5 = arith.constant 5 : index
    %c0_39 = arith.constant 0 : index
    %c0_40 = arith.constant 0 : index
    %39 = vector.load %arg5[%c5, %c0_39, %c0_40] : memref<16x3x128xbf16, #tpu.memory_space<vmem>>, vector<1x3x128xbf16>
    %40 = vector.shape_cast %39 : vector<1x3x128xbf16> to vector<3x128xbf16>
    %cst_41 = arith.constant dense<0.000000e+00> : vector<64x128xf32>
    %41 = tpu.matmul %38, %40, %cst_41 {dimension_numbers = #tpu.dot_dimension_numbers<[1], [0], [0], [1], [0, 0, 1, 1], [], []>} : vector<64x3xbf16>, vector<3x128xbf16>, vector<64x128xf32> -> vector<64x128xf32>
    %42 = arith.addf %35, %41 : vector<64x128xf32>
    %c0_42 = arith.constant 0 : index
    %c0_43 = arith.constant 0 : index
    %c1_44 = arith.constant 1 : index
    %c0_45 = arith.constant 0 : index
    %43 = vector.load %arg3[%c0_42, %c0_43, %c1_44, %c0_45] : memref<1x9x9x3xbf16, #tpu.memory_space<vmem>>, vector<1x8x8x3xbf16>
    %44 = vector.shape_cast %43 : vector<1x8x8x3xbf16> to vector<8x8x3xbf16>
    %45 = vector.shape_cast %44 : vector<8x8x3xbf16> to vector<64x3xbf16>
    %c6 = arith.constant 6 : index
    %c0_46 = arith.constant 0 : index
    %c0_47 = arith.constant 0 : index
    %46 = vector.load %arg5[%c6, %c0_46, %c0_47] : memref<16x3x128xbf16, #tpu.memory_space<vmem>>, vector<1x3x128xbf16>
    %47 = vector.shape_cast %46 : vector<1x3x128xbf16> to vector<3x128xbf16>
    %cst_48 = arith.constant dense<0.000000e+00> : vector<64x128xf32>
    %48 = tpu.matmul %45, %47, %cst_48 {dimension_numbers = #tpu.dot_dimension_numbers<[1], [0], [0], [1], [0, 0, 1, 1], [], []>} : vector<64x3xbf16>, vector<3x128xbf16>, vector<64x128xf32> -> vector<64x128xf32>
    %49 = arith.addf %42, %48 : vector<64x128xf32>
    %c0_49 = arith.constant 0 : index
    %c0_50 = arith.constant 0 : index
    %c1_51 = arith.constant 1 : index
    %c0_52 = arith.constant 0 : index
    %50 = vector.load %arg4[%c0_49, %c0_50, %c1_51, %c0_52] : memref<1x9x9x3xbf16, #tpu.memory_space<vmem>>, vector<1x8x8x3xbf16>
    %51 = vector.shape_cast %50 : vector<1x8x8x3xbf16> to vector<8x8x3xbf16>
    %52 = vector.shape_cast %51 : vector<8x8x3xbf16> to vector<64x3xbf16>
    %c7 = arith.constant 7 : index
    %c0_53 = arith.constant 0 : index
    %c0_54 = arith.constant 0 : index
    %53 = vector.load %arg5[%c7, %c0_53, %c0_54] : memref<16x3x128xbf16, #tpu.memory_space<vmem>>, vector<1x3x128xbf16>
    %54 = vector.shape_cast %53 : vector<1x3x128xbf16> to vector<3x128xbf16>
    %cst_55 = arith.constant dense<0.000000e+00> : vector<64x128xf32>
    %55 = tpu.matmul %52, %54, %cst_55 {dimension_numbers = #tpu.dot_dimension_numbers<[1], [0], [0], [1], [0, 0, 1, 1], [], []>} : vector<64x3xbf16>, vector<3x128xbf16>, vector<64x128xf32> -> vector<64x128xf32>
    %56 = arith.addf %49, %55 : vector<64x128xf32>
    %c0_56 = arith.constant 0 : index
    %c1_57 = arith.constant 1 : index
    %c0_58 = arith.constant 0 : index
    %c0_59 = arith.constant 0 : index
    %57 = vector.load %arg1[%c0_56, %c1_57, %c0_58, %c0_59] : memref<1x9x9x3xbf16, #tpu.memory_space<vmem>>, vector<1x8x8x3xbf16>
    %58 = vector.shape_cast %57 : vector<1x8x8x3xbf16> to vector<8x8x3xbf16>
    %59 = vector.shape_cast %58 : vector<8x8x3xbf16> to vector<64x3xbf16>
    %c8 = arith.constant 8 : index
    %c0_60 = arith.constant 0 : index
    %c0_61 = arith.constant 0 : index
    %60 = vector.load %arg5[%c8, %c0_60, %c0_61] : memref<16x3x128xbf16, #tpu.memory_space<vmem>>, vector<1x3x128xbf16>
    %61 = vector.shape_cast %60 : vector<1x3x128xbf16> to vector<3x128xbf16>
    %cst_62 = arith.constant dense<0.000000e+00> : vector<64x128xf32>
    %62 = tpu.matmul %59, %61, %cst_62 {dimension_numbers = #tpu.dot_dimension_numbers<[1], [0], [0], [1], [0, 0, 1, 1], [], []>} : vector<64x3xbf16>, vector<3x128xbf16>, vector<64x128xf32> -> vector<64x128xf32>
    %63 = arith.addf %56, %62 : vector<64x128xf32>
    %c0_63 = arith.constant 0 : index
    %c1_64 = arith.constant 1 : index
    %c0_65 = arith.constant 0 : index
    %c0_66 = arith.constant 0 : index
    %64 = vector.load %arg2[%c0_63, %c1_64, %c0_65, %c0_66] : memref<1x9x9x3xbf16, #tpu.memory_space<vmem>>, vector<1x8x8x3xbf16>
    %65 = vector.shape_cast %64 : vector<1x8x8x3xbf16> to vector<8x8x3xbf16>
    %66 = vector.shape_cast %65 : vector<8x8x3xbf16> to vector<64x3xbf16>
    %c9 = arith.constant 9 : index
    %c0_67 = arith.constant 0 : index
    %c0_68 = arith.constant 0 : index
    %67 = vector.load %arg5[%c9, %c0_67, %c0_68] : memref<16x3x128xbf16, #tpu.memory_space<vmem>>, vector<1x3x128xbf16>
    %68 = vector.shape_cast %67 : vector<1x3x128xbf16> to vector<3x128xbf16>
    %cst_69 = arith.constant dense<0.000000e+00> : vector<64x128xf32>
    %69 = tpu.matmul %66, %68, %cst_69 {dimension_numbers = #tpu.dot_dimension_numbers<[1], [0], [0], [1], [0, 0, 1, 1], [], []>} : vector<64x3xbf16>, vector<3x128xbf16>, vector<64x128xf32> -> vector<64x128xf32>
    %70 = arith.addf %63, %69 : vector<64x128xf32>
    %c0_70 = arith.constant 0 : index
    %c1_71 = arith.constant 1 : index
    %c1_72 = arith.constant 1 : index
    %c0_73 = arith.constant 0 : index
    %71 = vector.load %arg1[%c0_70, %c1_71, %c1_72, %c0_73] : memref<1x9x9x3xbf16, #tpu.memory_space<vmem>>, vector<1x8x8x3xbf16>
    %72 = vector.shape_cast %71 : vector<1x8x8x3xbf16> to vector<8x8x3xbf16>
    %73 = vector.shape_cast %72 : vector<8x8x3xbf16> to vector<64x3xbf16>
    %c10 = arith.constant 10 : index
    %c0_74 = arith.constant 0 : index
    %c0_75 = arith.constant 0 : index
    %74 = vector.load %arg5[%c10, %c0_74, %c0_75] : memref<16x3x128xbf16, #tpu.memory_space<vmem>>, vector<1x3x128xbf16>
    %75 = vector.shape_cast %74 : vector<1x3x128xbf16> to vector<3x128xbf16>
    %cst_76 = arith.constant dense<0.000000e+00> : vector<64x128xf32>
    %76 = tpu.matmul %73, %75, %cst_76 {dimension_numbers = #tpu.dot_dimension_numbers<[1], [0], [0], [1], [0, 0, 1, 1], [], []>} : vector<64x3xbf16>, vector<3x128xbf16>, vector<64x128xf32> -> vector<64x128xf32>
    %77 = arith.addf %70, %76 : vector<64x128xf32>
    %c0_77 = arith.constant 0 : index
    %c1_78 = arith.constant 1 : index
    %c1_79 = arith.constant 1 : index
    %c0_80 = arith.constant 0 : index
    %78 = vector.load %arg2[%c0_77, %c1_78, %c1_79, %c0_80] : memref<1x9x9x3xbf16, #tpu.memory_space<vmem>>, vector<1x8x8x3xbf16>
    %79 = vector.shape_cast %78 : vector<1x8x8x3xbf16> to vector<8x8x3xbf16>
    %80 = vector.shape_cast %79 : vector<8x8x3xbf16> to vector<64x3xbf16>
    %c11 = arith.constant 11 : index
    %c0_81 = arith.constant 0 : index
    %c0_82 = arith.constant 0 : index
    %81 = vector.load %arg5[%c11, %c0_81, %c0_82] : memref<16x3x128xbf16, #tpu.memory_space<vmem>>, vector<1x3x128xbf16>
    %82 = vector.shape_cast %81 : vector<1x3x128xbf16> to vector<3x128xbf16>
    %cst_83 = arith.constant dense<0.000000e+00> : vector<64x128xf32>
    %83 = tpu.matmul %80, %82, %cst_83 {dimension_numbers = #tpu.dot_dimension_numbers<[1], [0], [0], [1], [0, 0, 1, 1], [], []>} : vector<64x3xbf16>, vector<3x128xbf16>, vector<64x128xf32> -> vector<64x128xf32>
    %84 = arith.addf %77, %83 : vector<64x128xf32>
    %c0_84 = arith.constant 0 : index
    %c1_85 = arith.constant 1 : index
    %c0_86 = arith.constant 0 : index
    %c0_87 = arith.constant 0 : index
    %85 = vector.load %arg3[%c0_84, %c1_85, %c0_86, %c0_87] : memref<1x9x9x3xbf16, #tpu.memory_space<vmem>>, vector<1x8x8x3xbf16>
    %86 = vector.shape_cast %85 : vector<1x8x8x3xbf16> to vector<8x8x3xbf16>
    %87 = vector.shape_cast %86 : vector<8x8x3xbf16> to vector<64x3xbf16>
    %c12 = arith.constant 12 : index
    %c0_88 = arith.constant 0 : index
    %c0_89 = arith.constant 0 : index
    %88 = vector.load %arg5[%c12, %c0_88, %c0_89] : memref<16x3x128xbf16, #tpu.memory_space<vmem>>, vector<1x3x128xbf16>
    %89 = vector.shape_cast %88 : vector<1x3x128xbf16> to vector<3x128xbf16>
    %cst_90 = arith.constant dense<0.000000e+00> : vector<64x128xf32>
    %90 = tpu.matmul %87, %89, %cst_90 {dimension_numbers = #tpu.dot_dimension_numbers<[1], [0], [0], [1], [0, 0, 1, 1], [], []>} : vector<64x3xbf16>, vector<3x128xbf16>, vector<64x128xf32> -> vector<64x128xf32>
    %91 = arith.addf %84, %90 : vector<64x128xf32>
    %c0_91 = arith.constant 0 : index
    %c1_92 = arith.constant 1 : index
    %c0_93 = arith.constant 0 : index
    %c0_94 = arith.constant 0 : index
    %92 = vector.load %arg4[%c0_91, %c1_92, %c0_93, %c0_94] : memref<1x9x9x3xbf16, #tpu.memory_space<vmem>>, vector<1x8x8x3xbf16>
    %93 = vector.shape_cast %92 : vector<1x8x8x3xbf16> to vector<8x8x3xbf16>
    %94 = vector.shape_cast %93 : vector<8x8x3xbf16> to vector<64x3xbf16>
    %c13 = arith.constant 13 : index
    %c0_95 = arith.constant 0 : index
    %c0_96 = arith.constant 0 : index
    %95 = vector.load %arg5[%c13, %c0_95, %c0_96] : memref<16x3x128xbf16, #tpu.memory_space<vmem>>, vector<1x3x128xbf16>
    %96 = vector.shape_cast %95 : vector<1x3x128xbf16> to vector<3x128xbf16>
    %cst_97 = arith.constant dense<0.000000e+00> : vector<64x128xf32>
    %97 = tpu.matmul %94, %96, %cst_97 {dimension_numbers = #tpu.dot_dimension_numbers<[1], [0], [0], [1], [0, 0, 1, 1], [], []>} : vector<64x3xbf16>, vector<3x128xbf16>, vector<64x128xf32> -> vector<64x128xf32>
    %98 = arith.addf %91, %97 : vector<64x128xf32>
    %c0_98 = arith.constant 0 : index
    %c1_99 = arith.constant 1 : index
    %c1_100 = arith.constant 1 : index
    %c0_101 = arith.constant 0 : index
    %99 = vector.load %arg3[%c0_98, %c1_99, %c1_100, %c0_101] : memref<1x9x9x3xbf16, #tpu.memory_space<vmem>>, vector<1x8x8x3xbf16>
    %100 = vector.shape_cast %99 : vector<1x8x8x3xbf16> to vector<8x8x3xbf16>
    %101 = vector.shape_cast %100 : vector<8x8x3xbf16> to vector<64x3xbf16>
    %c14 = arith.constant 14 : index
    %c0_102 = arith.constant 0 : index
    %c0_103 = arith.constant 0 : index
    %102 = vector.load %arg5[%c14, %c0_102, %c0_103] : memref<16x3x128xbf16, #tpu.memory_space<vmem>>, vector<1x3x128xbf16>
    %103 = vector.shape_cast %102 : vector<1x3x128xbf16> to vector<3x128xbf16>
    %cst_104 = arith.constant dense<0.000000e+00> : vector<64x128xf32>
    %104 = tpu.matmul %101, %103, %cst_104 {dimension_numbers = #tpu.dot_dimension_numbers<[1], [0], [0], [1], [0, 0, 1, 1], [], []>} : vector<64x3xbf16>, vector<3x128xbf16>, vector<64x128xf32> -> vector<64x128xf32>
    %105 = arith.addf %98, %104 : vector<64x128xf32>
    %c0_105 = arith.constant 0 : index
    %c1_106 = arith.constant 1 : index
    %c1_107 = arith.constant 1 : index
    %c0_108 = arith.constant 0 : index
    %106 = vector.load %arg4[%c0_105, %c1_106, %c1_107, %c0_108] : memref<1x9x9x3xbf16, #tpu.memory_space<vmem>>, vector<1x8x8x3xbf16>
    %107 = vector.shape_cast %106 : vector<1x8x8x3xbf16> to vector<8x8x3xbf16>
    %108 = vector.shape_cast %107 : vector<8x8x3xbf16> to vector<64x3xbf16>
    %c15 = arith.constant 15 : index
    %c0_109 = arith.constant 0 : index
    %c0_110 = arith.constant 0 : index
    %109 = vector.load %arg5[%c15, %c0_109, %c0_110] : memref<16x3x128xbf16, #tpu.memory_space<vmem>>, vector<1x3x128xbf16>
    %110 = vector.shape_cast %109 : vector<1x3x128xbf16> to vector<3x128xbf16>
    %cst_111 = arith.constant dense<0.000000e+00> : vector<64x128xf32>
    %111 = tpu.matmul %108, %110, %cst_111 {dimension_numbers = #tpu.dot_dimension_numbers<[1], [0], [0], [1], [0, 0, 1, 1], [], []>} : vector<64x3xbf16>, vector<3x128xbf16>, vector<64x128xf32> -> vector<64x128xf32>
    %112 = arith.addf %105, %111 : vector<64x128xf32>
    %cst_112 = arith.constant 0.000000e+00 : f32
    %113 = vector.broadcast %cst_112 : f32 to vector<64x128xf32>
    %114 = arith.cmpf ogt, %112, %113 : vector<64x128xf32>
    %cst_113 = arith.constant 2.000000e-01 : f32
    %115 = vector.broadcast %cst_113 : f32 to vector<64x128xf32>
    %116 = arith.mulf %115, %112 : vector<64x128xf32>
    %117 = arith.select %114, %112, %116 : vector<64x128xi1>, vector<64x128xf32>
    %118 = arith.truncf %117 : vector<64x128xf32> to vector<64x128xbf16>
    %c0_114 = arith.constant 0 : index
    %c0_115 = arith.constant 0 : index
    %119 = vector.load %arg6[%c0_114, %c0_115] : memref<64x128xbf16, #tpu.memory_space<vmem>>, vector<64x128xbf16>
    tpu.vector_store %arg6[%c0_114, %c0_115], %118 {strides = array<i32>} : memref<64x128xbf16, #tpu.memory_space<vmem>>, vector<64x128xbf16>,
    return
  }
  func.func @transform_0(%arg0: i32) -> (i32, i32, i32, i32) {
    %c0_i32 = arith.constant 0 : i32
    %c0_i32_0 = arith.constant 0 : i32
    %c0_i32_1 = arith.constant 0 : i32
    %c0_i32_2 = arith.constant 0 : i32
    return %arg0, %c0_i32, %c0_i32_0, %c0_i32_1 : i32, i32, i32, i32
  }
  func.func @transform_1(%arg0: i32) -> (i32, i32, i32, i32) {
    %c0_i32 = arith.constant 0 : i32
    %c0_i32_0 = arith.constant 0 : i32
    %c0_i32_1 = arith.constant 0 : i32
    %c0_i32_2 = arith.constant 0 : i32
    return %arg0, %c0_i32, %c0_i32_0, %c0_i32_1 : i32, i32, i32, i32
  }
  func.func @transform_2(%arg0: i32) -> (i32, i32, i32, i32) {
    %c0_i32 = arith.constant 0 : i32
    %c0_i32_0 = arith.constant 0 : i32
    %c0_i32_1 = arith.constant 0 : i32
    %c0_i32_2 = arith.constant 0 : i32
    return %arg0, %c0_i32, %c0_i32_0, %c0_i32_1 : i32, i32, i32, i32
  }
  func.func @transform_3(%arg0: i32) -> (i32, i32, i32, i32) {
    %c0_i32 = arith.constant 0 : i32
    %c0_i32_0 = arith.constant 0 : i32
    %c0_i32_1 = arith.constant 0 : i32
    %c0_i32_2 = arith.constant 0 : i32
    return %arg0, %c0_i32, %c0_i32_0, %c0_i32_1 : i32, i32, i32, i32
  }
  func.func @transform_4(%arg0: i32) -> (i32, i32, i32) {
    %c0_i32 = arith.constant 0 : i32
    %c0_i32_0 = arith.constant 0 : i32
    %c0_i32_1 = arith.constant 0 : i32
    %c0_i32_2 = arith.constant 0 : i32
    return %c0_i32, %c0_i32_0, %c0_i32_1 : i32, i32, i32
  }
  func.func @transform_5(%arg0: i32) -> (i32, i32) {
    %c0_i32 = arith.constant 0 : i32
    %c0_i32_0 = arith.constant 0 : i32
    return %arg0, %c0_i32 : i32, i32
  }
}

module attributes {stable_mosaic.version = 11 : i64} {
  func.func @_conv4x4s2_kernel(%arg0: i32, %arg1: memref<1x5x5x8xbf16, #tpu.memory_space<vmem>>, %arg2: memref<1x5x5x8xbf16, #tpu.memory_space<vmem>>, %arg3: memref<1x5x5x8xbf16, #tpu.memory_space<vmem>>, %arg4: memref<1x5x5x8xbf16, #tpu.memory_space<vmem>>, %arg5: memref<16x8x128xbf16, #tpu.memory_space<vmem>>, %arg6: memref<16x128xbf16, #tpu.memory_space<vmem>>, %arg7: memref<1x1x128xf32, #tpu.memory_space<vmem>>, %arg8: memref<1x1x128xf32, #tpu.memory_space<vmem>>) attributes {dimension_semantics = [#tpu.dimension_semantics<parallel>], iteration_bounds = array<i64: 2>, scalar_prefetch = 0 : i64, scratch_operands = 0 : i64, tpu.core_type = #tpu.core_type<tc>, window_params = [{transform_indices = @transform_0, window_bounds = array<i64: 1, 5, 5, 8>}, {transform_indices = @transform_1, window_bounds = array<i64: 1, 5, 5, 8>}, {transform_indices = @transform_2, window_bounds = array<i64: 1, 5, 5, 8>}, {transform_indices = @transform_3, window_bounds = array<i64: 1, 5, 5, 8>}, {pipeline_mode = #tpu.pipeline_mode<synchronous>, transform_indices = @transform_4, window_bounds = array<i64: 16, 8, 128>}, {transform_indices = @transform_5, window_bounds = array<i64: 16, 128>}, {transform_indices = @transform_6, window_bounds = array<i64: 1, 1, 128>}, {transform_indices = @transform_7, window_bounds = array<i64: 1, 1, 128>}]} {
    %cst = arith.constant 0.000000e+00 : f32
    %0 = vector.broadcast %cst : f32 to vector<16x128xf32>
    %c0 = arith.constant 0 : index
    %c0_0 = arith.constant 0 : index
    %c0_1 = arith.constant 0 : index
    %c0_2 = arith.constant 0 : index
    %1 = vector.load %arg1[%c0, %c0_0, %c0_1, %c0_2] : memref<1x5x5x8xbf16, #tpu.memory_space<vmem>>, vector<1x4x4x8xbf16>
    %2 = vector.shape_cast %1 : vector<1x4x4x8xbf16> to vector<4x4x8xbf16>
    %3 = vector.shape_cast %2 : vector<4x4x8xbf16> to vector<16x8xbf16>
    %c0_3 = arith.constant 0 : index
    %c0_4 = arith.constant 0 : index
    %c0_5 = arith.constant 0 : index
    %4 = vector.load %arg5[%c0_3, %c0_4, %c0_5] : memref<16x8x128xbf16, #tpu.memory_space<vmem>>, vector<1x8x128xbf16>
    %5 = vector.shape_cast %4 : vector<1x8x128xbf16> to vector<8x128xbf16>
    %cst_6 = arith.constant dense<0.000000e+00> : vector<16x128xf32>
    %6 = tpu.matmul %3, %5, %cst_6 {dimension_numbers = #tpu.dot_dimension_numbers<[1], [0], [0], [1], [0, 0, 1, 1], [], []>} : vector<16x8xbf16>, vector<8x128xbf16>, vector<16x128xf32> -> vector<16x128xf32>
    %7 = arith.addf %0, %6 : vector<16x128xf32>
    %c0_7 = arith.constant 0 : index
    %c0_8 = arith.constant 0 : index
    %c0_9 = arith.constant 0 : index
    %c0_10 = arith.constant 0 : index
    %8 = vector.load %arg2[%c0_7, %c0_8, %c0_9, %c0_10] : memref<1x5x5x8xbf16, #tpu.memory_space<vmem>>, vector<1x4x4x8xbf16>
    %9 = vector.shape_cast %8 : vector<1x4x4x8xbf16> to vector<4x4x8xbf16>
    %10 = vector.shape_cast %9 : vector<4x4x8xbf16> to vector<16x8xbf16>
    %c1 = arith.constant 1 : index
    %c0_11 = arith.constant 0 : index
    %c0_12 = arith.constant 0 : index
    %11 = vector.load %arg5[%c1, %c0_11, %c0_12] : memref<16x8x128xbf16, #tpu.memory_space<vmem>>, vector<1x8x128xbf16>
    %12 = vector.shape_cast %11 : vector<1x8x128xbf16> to vector<8x128xbf16>
    %cst_13 = arith.constant dense<0.000000e+00> : vector<16x128xf32>
    %13 = tpu.matmul %10, %12, %cst_13 {dimension_numbers = #tpu.dot_dimension_numbers<[1], [0], [0], [1], [0, 0, 1, 1], [], []>} : vector<16x8xbf16>, vector<8x128xbf16>, vector<16x128xf32> -> vector<16x128xf32>
    %14 = arith.addf %7, %13 : vector<16x128xf32>
    %c0_14 = arith.constant 0 : index
    %c0_15 = arith.constant 0 : index
    %c1_16 = arith.constant 1 : index
    %c0_17 = arith.constant 0 : index
    %15 = vector.load %arg1[%c0_14, %c0_15, %c1_16, %c0_17] : memref<1x5x5x8xbf16, #tpu.memory_space<vmem>>, vector<1x4x4x8xbf16>
    %16 = vector.shape_cast %15 : vector<1x4x4x8xbf16> to vector<4x4x8xbf16>
    %17 = vector.shape_cast %16 : vector<4x4x8xbf16> to vector<16x8xbf16>
    %c2 = arith.constant 2 : index
    %c0_18 = arith.constant 0 : index
    %c0_19 = arith.constant 0 : index
    %18 = vector.load %arg5[%c2, %c0_18, %c0_19] : memref<16x8x128xbf16, #tpu.memory_space<vmem>>, vector<1x8x128xbf16>
    %19 = vector.shape_cast %18 : vector<1x8x128xbf16> to vector<8x128xbf16>
    %cst_20 = arith.constant dense<0.000000e+00> : vector<16x128xf32>
    %20 = tpu.matmul %17, %19, %cst_20 {dimension_numbers = #tpu.dot_dimension_numbers<[1], [0], [0], [1], [0, 0, 1, 1], [], []>} : vector<16x8xbf16>, vector<8x128xbf16>, vector<16x128xf32> -> vector<16x128xf32>
    %21 = arith.addf %14, %20 : vector<16x128xf32>
    %c0_21 = arith.constant 0 : index
    %c0_22 = arith.constant 0 : index
    %c1_23 = arith.constant 1 : index
    %c0_24 = arith.constant 0 : index
    %22 = vector.load %arg2[%c0_21, %c0_22, %c1_23, %c0_24] : memref<1x5x5x8xbf16, #tpu.memory_space<vmem>>, vector<1x4x4x8xbf16>
    %23 = vector.shape_cast %22 : vector<1x4x4x8xbf16> to vector<4x4x8xbf16>
    %24 = vector.shape_cast %23 : vector<4x4x8xbf16> to vector<16x8xbf16>
    %c3 = arith.constant 3 : index
    %c0_25 = arith.constant 0 : index
    %c0_26 = arith.constant 0 : index
    %25 = vector.load %arg5[%c3, %c0_25, %c0_26] : memref<16x8x128xbf16, #tpu.memory_space<vmem>>, vector<1x8x128xbf16>
    %26 = vector.shape_cast %25 : vector<1x8x128xbf16> to vector<8x128xbf16>
    %cst_27 = arith.constant dense<0.000000e+00> : vector<16x128xf32>
    %27 = tpu.matmul %24, %26, %cst_27 {dimension_numbers = #tpu.dot_dimension_numbers<[1], [0], [0], [1], [0, 0, 1, 1], [], []>} : vector<16x8xbf16>, vector<8x128xbf16>, vector<16x128xf32> -> vector<16x128xf32>
    %28 = arith.addf %21, %27 : vector<16x128xf32>
    %c0_28 = arith.constant 0 : index
    %c0_29 = arith.constant 0 : index
    %c0_30 = arith.constant 0 : index
    %c0_31 = arith.constant 0 : index
    %29 = vector.load %arg3[%c0_28, %c0_29, %c0_30, %c0_31] : memref<1x5x5x8xbf16, #tpu.memory_space<vmem>>, vector<1x4x4x8xbf16>
    %30 = vector.shape_cast %29 : vector<1x4x4x8xbf16> to vector<4x4x8xbf16>
    %31 = vector.shape_cast %30 : vector<4x4x8xbf16> to vector<16x8xbf16>
    %c4 = arith.constant 4 : index
    %c0_32 = arith.constant 0 : index
    %c0_33 = arith.constant 0 : index
    %32 = vector.load %arg5[%c4, %c0_32, %c0_33] : memref<16x8x128xbf16, #tpu.memory_space<vmem>>, vector<1x8x128xbf16>
    %33 = vector.shape_cast %32 : vector<1x8x128xbf16> to vector<8x128xbf16>
    %cst_34 = arith.constant dense<0.000000e+00> : vector<16x128xf32>
    %34 = tpu.matmul %31, %33, %cst_34 {dimension_numbers = #tpu.dot_dimension_numbers<[1], [0], [0], [1], [0, 0, 1, 1], [], []>} : vector<16x8xbf16>, vector<8x128xbf16>, vector<16x128xf32> -> vector<16x128xf32>
    %35 = arith.addf %28, %34 : vector<16x128xf32>
    %c0_35 = arith.constant 0 : index
    %c0_36 = arith.constant 0 : index
    %c0_37 = arith.constant 0 : index
    %c0_38 = arith.constant 0 : index
    %36 = vector.load %arg4[%c0_35, %c0_36, %c0_37, %c0_38] : memref<1x5x5x8xbf16, #tpu.memory_space<vmem>>, vector<1x4x4x8xbf16>
    %37 = vector.shape_cast %36 : vector<1x4x4x8xbf16> to vector<4x4x8xbf16>
    %38 = vector.shape_cast %37 : vector<4x4x8xbf16> to vector<16x8xbf16>
    %c5 = arith.constant 5 : index
    %c0_39 = arith.constant 0 : index
    %c0_40 = arith.constant 0 : index
    %39 = vector.load %arg5[%c5, %c0_39, %c0_40] : memref<16x8x128xbf16, #tpu.memory_space<vmem>>, vector<1x8x128xbf16>
    %40 = vector.shape_cast %39 : vector<1x8x128xbf16> to vector<8x128xbf16>
    %cst_41 = arith.constant dense<0.000000e+00> : vector<16x128xf32>
    %41 = tpu.matmul %38, %40, %cst_41 {dimension_numbers = #tpu.dot_dimension_numbers<[1], [0], [0], [1], [0, 0, 1, 1], [], []>} : vector<16x8xbf16>, vector<8x128xbf16>, vector<16x128xf32> -> vector<16x128xf32>
    %42 = arith.addf %35, %41 : vector<16x128xf32>
    %c0_42 = arith.constant 0 : index
    %c0_43 = arith.constant 0 : index
    %c1_44 = arith.constant 1 : index
    %c0_45 = arith.constant 0 : index
    %43 = vector.load %arg3[%c0_42, %c0_43, %c1_44, %c0_45] : memref<1x5x5x8xbf16, #tpu.memory_space<vmem>>, vector<1x4x4x8xbf16>
    %44 = vector.shape_cast %43 : vector<1x4x4x8xbf16> to vector<4x4x8xbf16>
    %45 = vector.shape_cast %44 : vector<4x4x8xbf16> to vector<16x8xbf16>
    %c6 = arith.constant 6 : index
    %c0_46 = arith.constant 0 : index
    %c0_47 = arith.constant 0 : index
    %46 = vector.load %arg5[%c6, %c0_46, %c0_47] : memref<16x8x128xbf16, #tpu.memory_space<vmem>>, vector<1x8x128xbf16>
    %47 = vector.shape_cast %46 : vector<1x8x128xbf16> to vector<8x128xbf16>
    %cst_48 = arith.constant dense<0.000000e+00> : vector<16x128xf32>
    %48 = tpu.matmul %45, %47, %cst_48 {dimension_numbers = #tpu.dot_dimension_numbers<[1], [0], [0], [1], [0, 0, 1, 1], [], []>} : vector<16x8xbf16>, vector<8x128xbf16>, vector<16x128xf32> -> vector<16x128xf32>
    %49 = arith.addf %42, %48 : vector<16x128xf32>
    %c0_49 = arith.constant 0 : index
    %c0_50 = arith.constant 0 : index
    %c1_51 = arith.constant 1 : index
    %c0_52 = arith.constant 0 : index
    %50 = vector.load %arg4[%c0_49, %c0_50, %c1_51, %c0_52] : memref<1x5x5x8xbf16, #tpu.memory_space<vmem>>, vector<1x4x4x8xbf16>
    %51 = vector.shape_cast %50 : vector<1x4x4x8xbf16> to vector<4x4x8xbf16>
    %52 = vector.shape_cast %51 : vector<4x4x8xbf16> to vector<16x8xbf16>
    %c7 = arith.constant 7 : index
    %c0_53 = arith.constant 0 : index
    %c0_54 = arith.constant 0 : index
    %53 = vector.load %arg5[%c7, %c0_53, %c0_54] : memref<16x8x128xbf16, #tpu.memory_space<vmem>>, vector<1x8x128xbf16>
    %54 = vector.shape_cast %53 : vector<1x8x128xbf16> to vector<8x128xbf16>
    %cst_55 = arith.constant dense<0.000000e+00> : vector<16x128xf32>
    %55 = tpu.matmul %52, %54, %cst_55 {dimension_numbers = #tpu.dot_dimension_numbers<[1], [0], [0], [1], [0, 0, 1, 1], [], []>} : vector<16x8xbf16>, vector<8x128xbf16>, vector<16x128xf32> -> vector<16x128xf32>
    %56 = arith.addf %49, %55 : vector<16x128xf32>
    %c0_56 = arith.constant 0 : index
    %c1_57 = arith.constant 1 : index
    %c0_58 = arith.constant 0 : index
    %c0_59 = arith.constant 0 : index
    %57 = vector.load %arg1[%c0_56, %c1_57, %c0_58, %c0_59] : memref<1x5x5x8xbf16, #tpu.memory_space<vmem>>, vector<1x4x4x8xbf16>
    %58 = vector.shape_cast %57 : vector<1x4x4x8xbf16> to vector<4x4x8xbf16>
    %59 = vector.shape_cast %58 : vector<4x4x8xbf16> to vector<16x8xbf16>
    %c8 = arith.constant 8 : index
    %c0_60 = arith.constant 0 : index
    %c0_61 = arith.constant 0 : index
    %60 = vector.load %arg5[%c8, %c0_60, %c0_61] : memref<16x8x128xbf16, #tpu.memory_space<vmem>>, vector<1x8x128xbf16>
    %61 = vector.shape_cast %60 : vector<1x8x128xbf16> to vector<8x128xbf16>
    %cst_62 = arith.constant dense<0.000000e+00> : vector<16x128xf32>
    %62 = tpu.matmul %59, %61, %cst_62 {dimension_numbers = #tpu.dot_dimension_numbers<[1], [0], [0], [1], [0, 0, 1, 1], [], []>} : vector<16x8xbf16>, vector<8x128xbf16>, vector<16x128xf32> -> vector<16x128xf32>
    %63 = arith.addf %56, %62 : vector<16x128xf32>
    %c0_63 = arith.constant 0 : index
    %c1_64 = arith.constant 1 : index
    %c0_65 = arith.constant 0 : index
    %c0_66 = arith.constant 0 : index
    %64 = vector.load %arg2[%c0_63, %c1_64, %c0_65, %c0_66] : memref<1x5x5x8xbf16, #tpu.memory_space<vmem>>, vector<1x4x4x8xbf16>
    %65 = vector.shape_cast %64 : vector<1x4x4x8xbf16> to vector<4x4x8xbf16>
    %66 = vector.shape_cast %65 : vector<4x4x8xbf16> to vector<16x8xbf16>
    %c9 = arith.constant 9 : index
    %c0_67 = arith.constant 0 : index
    %c0_68 = arith.constant 0 : index
    %67 = vector.load %arg5[%c9, %c0_67, %c0_68] : memref<16x8x128xbf16, #tpu.memory_space<vmem>>, vector<1x8x128xbf16>
    %68 = vector.shape_cast %67 : vector<1x8x128xbf16> to vector<8x128xbf16>
    %cst_69 = arith.constant dense<0.000000e+00> : vector<16x128xf32>
    %69 = tpu.matmul %66, %68, %cst_69 {dimension_numbers = #tpu.dot_dimension_numbers<[1], [0], [0], [1], [0, 0, 1, 1], [], []>} : vector<16x8xbf16>, vector<8x128xbf16>, vector<16x128xf32> -> vector<16x128xf32>
    %70 = arith.addf %63, %69 : vector<16x128xf32>
    %c0_70 = arith.constant 0 : index
    %c1_71 = arith.constant 1 : index
    %c1_72 = arith.constant 1 : index
    %c0_73 = arith.constant 0 : index
    %71 = vector.load %arg1[%c0_70, %c1_71, %c1_72, %c0_73] : memref<1x5x5x8xbf16, #tpu.memory_space<vmem>>, vector<1x4x4x8xbf16>
    %72 = vector.shape_cast %71 : vector<1x4x4x8xbf16> to vector<4x4x8xbf16>
    %73 = vector.shape_cast %72 : vector<4x4x8xbf16> to vector<16x8xbf16>
    %c10 = arith.constant 10 : index
    %c0_74 = arith.constant 0 : index
    %c0_75 = arith.constant 0 : index
    %74 = vector.load %arg5[%c10, %c0_74, %c0_75] : memref<16x8x128xbf16, #tpu.memory_space<vmem>>, vector<1x8x128xbf16>
    %75 = vector.shape_cast %74 : vector<1x8x128xbf16> to vector<8x128xbf16>
    %cst_76 = arith.constant dense<0.000000e+00> : vector<16x128xf32>
    %76 = tpu.matmul %73, %75, %cst_76 {dimension_numbers = #tpu.dot_dimension_numbers<[1], [0], [0], [1], [0, 0, 1, 1], [], []>} : vector<16x8xbf16>, vector<8x128xbf16>, vector<16x128xf32> -> vector<16x128xf32>
    %77 = arith.addf %70, %76 : vector<16x128xf32>
    %c0_77 = arith.constant 0 : index
    %c1_78 = arith.constant 1 : index
    %c1_79 = arith.constant 1 : index
    %c0_80 = arith.constant 0 : index
    %78 = vector.load %arg2[%c0_77, %c1_78, %c1_79, %c0_80] : memref<1x5x5x8xbf16, #tpu.memory_space<vmem>>, vector<1x4x4x8xbf16>
    %79 = vector.shape_cast %78 : vector<1x4x4x8xbf16> to vector<4x4x8xbf16>
    %80 = vector.shape_cast %79 : vector<4x4x8xbf16> to vector<16x8xbf16>
    %c11 = arith.constant 11 : index
    %c0_81 = arith.constant 0 : index
    %c0_82 = arith.constant 0 : index
    %81 = vector.load %arg5[%c11, %c0_81, %c0_82] : memref<16x8x128xbf16, #tpu.memory_space<vmem>>, vector<1x8x128xbf16>
    %82 = vector.shape_cast %81 : vector<1x8x128xbf16> to vector<8x128xbf16>
    %cst_83 = arith.constant dense<0.000000e+00> : vector<16x128xf32>
    %83 = tpu.matmul %80, %82, %cst_83 {dimension_numbers = #tpu.dot_dimension_numbers<[1], [0], [0], [1], [0, 0, 1, 1], [], []>} : vector<16x8xbf16>, vector<8x128xbf16>, vector<16x128xf32> -> vector<16x128xf32>
    %84 = arith.addf %77, %83 : vector<16x128xf32>
    %c0_84 = arith.constant 0 : index
    %c1_85 = arith.constant 1 : index
    %c0_86 = arith.constant 0 : index
    %c0_87 = arith.constant 0 : index
    %85 = vector.load %arg3[%c0_84, %c1_85, %c0_86, %c0_87] : memref<1x5x5x8xbf16, #tpu.memory_space<vmem>>, vector<1x4x4x8xbf16>
    %86 = vector.shape_cast %85 : vector<1x4x4x8xbf16> to vector<4x4x8xbf16>
    %87 = vector.shape_cast %86 : vector<4x4x8xbf16> to vector<16x8xbf16>
    %c12 = arith.constant 12 : index
    %c0_88 = arith.constant 0 : index
    %c0_89 = arith.constant 0 : index
    %88 = vector.load %arg5[%c12, %c0_88, %c0_89] : memref<16x8x128xbf16, #tpu.memory_space<vmem>>, vector<1x8x128xbf16>
    %89 = vector.shape_cast %88 : vector<1x8x128xbf16> to vector<8x128xbf16>
    %cst_90 = arith.constant dense<0.000000e+00> : vector<16x128xf32>
    %90 = tpu.matmul %87, %89, %cst_90 {dimension_numbers = #tpu.dot_dimension_numbers<[1], [0], [0], [1], [0, 0, 1, 1], [], []>} : vector<16x8xbf16>, vector<8x128xbf16>, vector<16x128xf32> -> vector<16x128xf32>
    %91 = arith.addf %84, %90 : vector<16x128xf32>
    %c0_91 = arith.constant 0 : index
    %c1_92 = arith.constant 1 : index
    %c0_93 = arith.constant 0 : index
    %c0_94 = arith.constant 0 : index
    %92 = vector.load %arg4[%c0_91, %c1_92, %c0_93, %c0_94] : memref<1x5x5x8xbf16, #tpu.memory_space<vmem>>, vector<1x4x4x8xbf16>
    %93 = vector.shape_cast %92 : vector<1x4x4x8xbf16> to vector<4x4x8xbf16>
    %94 = vector.shape_cast %93 : vector<4x4x8xbf16> to vector<16x8xbf16>
    %c13 = arith.constant 13 : index
    %c0_95 = arith.constant 0 : index
    %c0_96 = arith.constant 0 : index
    %95 = vector.load %arg5[%c13, %c0_95, %c0_96] : memref<16x8x128xbf16, #tpu.memory_space<vmem>>, vector<1x8x128xbf16>
    %96 = vector.shape_cast %95 : vector<1x8x128xbf16> to vector<8x128xbf16>
    %cst_97 = arith.constant dense<0.000000e+00> : vector<16x128xf32>
    %97 = tpu.matmul %94, %96, %cst_97 {dimension_numbers = #tpu.dot_dimension_numbers<[1], [0], [0], [1], [0, 0, 1, 1], [], []>} : vector<16x8xbf16>, vector<8x128xbf16>, vector<16x128xf32> -> vector<16x128xf32>
    %98 = arith.addf %91, %97 : vector<16x128xf32>
    %c0_98 = arith.constant 0 : index
    %c1_99 = arith.constant 1 : index
    %c1_100 = arith.constant 1 : index
    %c0_101 = arith.constant 0 : index
    %99 = vector.load %arg3[%c0_98, %c1_99, %c1_100, %c0_101] : memref<1x5x5x8xbf16, #tpu.memory_space<vmem>>, vector<1x4x4x8xbf16>
    %100 = vector.shape_cast %99 : vector<1x4x4x8xbf16> to vector<4x4x8xbf16>
    %101 = vector.shape_cast %100 : vector<4x4x8xbf16> to vector<16x8xbf16>
    %c14 = arith.constant 14 : index
    %c0_102 = arith.constant 0 : index
    %c0_103 = arith.constant 0 : index
    %102 = vector.load %arg5[%c14, %c0_102, %c0_103] : memref<16x8x128xbf16, #tpu.memory_space<vmem>>, vector<1x8x128xbf16>
    %103 = vector.shape_cast %102 : vector<1x8x128xbf16> to vector<8x128xbf16>
    %cst_104 = arith.constant dense<0.000000e+00> : vector<16x128xf32>
    %104 = tpu.matmul %101, %103, %cst_104 {dimension_numbers = #tpu.dot_dimension_numbers<[1], [0], [0], [1], [0, 0, 1, 1], [], []>} : vector<16x8xbf16>, vector<8x128xbf16>, vector<16x128xf32> -> vector<16x128xf32>
    %105 = arith.addf %98, %104 : vector<16x128xf32>
    %c0_105 = arith.constant 0 : index
    %c1_106 = arith.constant 1 : index
    %c1_107 = arith.constant 1 : index
    %c0_108 = arith.constant 0 : index
    %106 = vector.load %arg4[%c0_105, %c1_106, %c1_107, %c0_108] : memref<1x5x5x8xbf16, #tpu.memory_space<vmem>>, vector<1x4x4x8xbf16>
    %107 = vector.shape_cast %106 : vector<1x4x4x8xbf16> to vector<4x4x8xbf16>
    %108 = vector.shape_cast %107 : vector<4x4x8xbf16> to vector<16x8xbf16>
    %c15 = arith.constant 15 : index
    %c0_109 = arith.constant 0 : index
    %c0_110 = arith.constant 0 : index
    %109 = vector.load %arg5[%c15, %c0_109, %c0_110] : memref<16x8x128xbf16, #tpu.memory_space<vmem>>, vector<1x8x128xbf16>
    %110 = vector.shape_cast %109 : vector<1x8x128xbf16> to vector<8x128xbf16>
    %cst_111 = arith.constant dense<0.000000e+00> : vector<16x128xf32>
    %111 = tpu.matmul %108, %110, %cst_111 {dimension_numbers = #tpu.dot_dimension_numbers<[1], [0], [0], [1], [0, 0, 1, 1], [], []>} : vector<16x8xbf16>, vector<8x128xbf16>, vector<16x128xf32> -> vector<16x128xf32>
    %112 = arith.addf %105, %111 : vector<16x128xf32>
    %113 = arith.truncf %112 : vector<16x128xf32> to vector<16x128xbf16>
    %c0_112 = arith.constant 0 : index
    %c0_113 = arith.constant 0 : index
    %114 = vector.load %arg6[%c0_112, %c0_113] : memref<16x128xbf16, #tpu.memory_space<vmem>>, vector<16x128xbf16>
    tpu.vector_store %arg6[%c0_112, %c0_113], %113 {strides = array<i32>} : memref<16x128xbf16, #tpu.memory_space<vmem>>, vector<16x128xbf16>,
    %115 = arith.extf %113 : vector<16x128xbf16> to vector<16x128xf32>
    %cst_114 = arith.constant dense<0.000000e+00> : vector<128xf32>
    %116 = vector.multi_reduction <add>, %115, %cst_114 [0] : vector<16x128xf32> to vector<128xf32>
    %117 = vector.shape_cast %116 : vector<128xf32> to vector<1x128xf32>
    %118 = vector.shape_cast %117 : vector<1x128xf32> to vector<1x1x128xf32>
    %c0_115 = arith.constant 0 : index
    %c0_116 = arith.constant 0 : index
    %c0_117 = arith.constant 0 : index
    %119 = vector.load %arg7[%c0_115, %c0_116, %c0_117] : memref<1x1x128xf32, #tpu.memory_space<vmem>>, vector<1x1x128xf32>
    tpu.vector_store %arg7[%c0_115, %c0_116, %c0_117], %118 {strides = array<i32>} : memref<1x1x128xf32, #tpu.memory_space<vmem>>, vector<1x1x128xf32>,
    %120 = arith.mulf %115, %115 : vector<16x128xf32>
    %cst_118 = arith.constant dense<0.000000e+00> : vector<128xf32>
    %121 = vector.multi_reduction <add>, %120, %cst_118 [0] : vector<16x128xf32> to vector<128xf32>
    %122 = vector.shape_cast %121 : vector<128xf32> to vector<1x128xf32>
    %123 = vector.shape_cast %122 : vector<1x128xf32> to vector<1x1x128xf32>
    %c0_119 = arith.constant 0 : index
    %c0_120 = arith.constant 0 : index
    %c0_121 = arith.constant 0 : index
    %124 = vector.load %arg8[%c0_119, %c0_120, %c0_121] : memref<1x1x128xf32, #tpu.memory_space<vmem>>, vector<1x1x128xf32>
    tpu.vector_store %arg8[%c0_119, %c0_120, %c0_121], %123 {strides = array<i32>} : memref<1x1x128xf32, #tpu.memory_space<vmem>>, vector<1x1x128xf32>,
    return
  }
  func.func @transform_0(%arg0: i32) -> (i32, i32, i32, i32) {
    %c0_i32 = arith.constant 0 : i32
    %c0_i32_0 = arith.constant 0 : i32
    %c0_i32_1 = arith.constant 0 : i32
    %c0_i32_2 = arith.constant 0 : i32
    return %arg0, %c0_i32, %c0_i32_0, %c0_i32_1 : i32, i32, i32, i32
  }
  func.func @transform_1(%arg0: i32) -> (i32, i32, i32, i32) {
    %c0_i32 = arith.constant 0 : i32
    %c0_i32_0 = arith.constant 0 : i32
    %c0_i32_1 = arith.constant 0 : i32
    %c0_i32_2 = arith.constant 0 : i32
    return %arg0, %c0_i32, %c0_i32_0, %c0_i32_1 : i32, i32, i32, i32
  }
  func.func @transform_2(%arg0: i32) -> (i32, i32, i32, i32) {
    %c0_i32 = arith.constant 0 : i32
    %c0_i32_0 = arith.constant 0 : i32
    %c0_i32_1 = arith.constant 0 : i32
    %c0_i32_2 = arith.constant 0 : i32
    return %arg0, %c0_i32, %c0_i32_0, %c0_i32_1 : i32, i32, i32, i32
  }
  func.func @transform_3(%arg0: i32) -> (i32, i32, i32, i32) {
    %c0_i32 = arith.constant 0 : i32
    %c0_i32_0 = arith.constant 0 : i32
    %c0_i32_1 = arith.constant 0 : i32
    %c0_i32_2 = arith.constant 0 : i32
    return %arg0, %c0_i32, %c0_i32_0, %c0_i32_1 : i32, i32, i32, i32
  }
  func.func @transform_4(%arg0: i32) -> (i32, i32, i32) {
    %c0_i32 = arith.constant 0 : i32
    %c0_i32_0 = arith.constant 0 : i32
    %c0_i32_1 = arith.constant 0 : i32
    %c0_i32_2 = arith.constant 0 : i32
    return %c0_i32, %c0_i32_0, %c0_i32_1 : i32, i32, i32
  }
  func.func @transform_5(%arg0: i32) -> (i32, i32) {
    %c0_i32 = arith.constant 0 : i32
    %c0_i32_0 = arith.constant 0 : i32
    return %arg0, %c0_i32 : i32, i32
  }
  func.func @transform_6(%arg0: i32) -> (i32, i32, i32) {
    %c0_i32 = arith.constant 0 : i32
    %c0_i32_0 = arith.constant 0 : i32
    %c0_i32_1 = arith.constant 0 : i32
    return %arg0, %c0_i32, %c0_i32_0 : i32, i32, i32
  }
  func.func @transform_7(%arg0: i32) -> (i32, i32, i32) {
    %c0_i32 = arith.constant 0 : i32
    %c0_i32_0 = arith.constant 0 : i32
    %c0_i32_1 = arith.constant 0 : i32
    return %arg0, %c0_i32, %c0_i32_0 : i32, i32, i32
  }
}

module attributes {stable_mosaic.version = 11 : i64} {
  func.func @_dense_sigmoid_kernel(%arg0: i32, %arg1: memref<2x256xbf16, #tpu.memory_space<vmem>>, %arg2: memref<256x128xbf16, #tpu.memory_space<vmem>>, %arg3: memref<2x128xf32, #tpu.memory_space<vmem>>) attributes {dimension_semantics = [#tpu.dimension_semantics<arbitrary>], iteration_bounds = array<i64: 1>, scalar_prefetch = 0 : i64, scratch_operands = 0 : i64, tpu.core_type = #tpu.core_type<tc>, window_params = [{pipeline_mode = #tpu.pipeline_mode<synchronous>, transform_indices = @transform_0, window_bounds = array<i64: 2, 256>}, {pipeline_mode = #tpu.pipeline_mode<synchronous>, transform_indices = @transform_1, window_bounds = array<i64: 256, 128>}, {pipeline_mode = #tpu.pipeline_mode<synchronous>, transform_indices = @transform_2, window_bounds = array<i64: 2, 128>}]} {
    %c0 = arith.constant 0 : index
    %c0_0 = arith.constant 0 : index
    %0 = vector.load %arg1[%c0, %c0_0] : memref<2x256xbf16, #tpu.memory_space<vmem>>, vector<2x256xbf16>
    %c0_1 = arith.constant 0 : index
    %c0_2 = arith.constant 0 : index
    %1 = vector.load %arg2[%c0_1, %c0_2] : memref<256x128xbf16, #tpu.memory_space<vmem>>, vector<256x128xbf16>
    %cst = arith.constant dense<0.000000e+00> : vector<2x128xf32>
    %2 = tpu.matmul %0, %1, %cst {dimension_numbers = #tpu.dot_dimension_numbers<[1], [0], [0], [1], [0, 0, 1, 1], [], []>} : vector<2x256xbf16>, vector<256x128xbf16>, vector<2x128xf32> -> vector<2x128xf32>
    %cst_3 = arith.constant 0.000000e+00 : f32
    %3 = vector.broadcast %cst_3 : f32 to vector<2x128xf32>
    %4 = arith.subf %3, %2 : vector<2x128xf32>
    %5 = math.exp %4 : vector<2x128xf32>
    %cst_4 = arith.constant 1.000000e+00 : f32
    %6 = vector.broadcast %cst_4 : f32 to vector<2x128xf32>
    %7 = arith.addf %6, %5 : vector<2x128xf32>
    %cst_5 = arith.constant 1.000000e+00 : f32
    %8 = vector.broadcast %cst_5 : f32 to vector<2x128xf32>
    %9 = arith.divf %8, %7 : vector<2x128xf32>
    %c0_6 = arith.constant 0 : index
    %c0_7 = arith.constant 0 : index
    %10 = vector.load %arg3[%c0_6, %c0_7] : memref<2x128xf32, #tpu.memory_space<vmem>>, vector<2x128xf32>
    tpu.vector_store %arg3[%c0_6, %c0_7], %9 {strides = array<i32>} : memref<2x128xf32, #tpu.memory_space<vmem>>, vector<2x128xf32>,
    return
  }
  func.func @transform_0(%arg0: i32) -> (i32, i32) {
    %c0_i32 = arith.constant 0 : i32
    %c0_i32_0 = arith.constant 0 : i32
    %c0_i32_1 = arith.constant 0 : i32
    return %c0_i32, %c0_i32_0 : i32, i32
  }
  func.func @transform_1(%arg0: i32) -> (i32, i32) {
    %c0_i32 = arith.constant 0 : i32
    %c0_i32_0 = arith.constant 0 : i32
    %c0_i32_1 = arith.constant 0 : i32
    return %c0_i32, %c0_i32_0 : i32, i32
  }
  func.func @transform_2(%arg0: i32) -> (i32, i32) {
    %c0_i32 = arith.constant 0 : i32
    %c0_i32_0 = arith.constant 0 : i32
    %c0_i32_1 = arith.constant 0 : i32
    return %c0_i32, %c0_i32_0 : i32, i32
  }
}

</mosaic_0001>

<llo_original>
// kernel: discriminator_forward.5
$region0: #{discriminator_forward.5}
  #allocation0 [shape = 'u32[]', space=smem, size = 0x4, offset = 0x4, fixed_abs, tag = 'smem constant byte address 0x4 - core index']
  #allocation1 [shape = 'u32[144,128]{1,0:T(1,128)}', space=vmem, size = 0x12000, scoped, tag = 'internal scratch']
  %s0 = inlined_call_operand.vmem [shape: bf16[2,256], index: 0, kind: input, shape index: {}]
  %s1 = inlined_call_operand.vmem [shape: bf16[256,128], index: 1, kind: input, shape index: {}]
  %s2 = inlined_call_operand.vmem [shape: f32[2,128], index: 2, kind: output, shape index: {}]
  %s3 = sld [smem:[#allocation0]]
  $region18: #{discriminator_forward.5} parent=0
    _
  %s5 = ssub.s32 1, %s3
  %s6 = scalar_select 0, %s5, %s3
  // Predicated region
  $region2: #{discriminator_forward.5} parent=0 // pred_check
    _
  $region3: #{discriminator_forward.5} parent=0 // pred_check_branch
    %8 = sbr.rel (0) target = $region5
  $region4: #{discriminator_forward.5} parent=0 // pred_region
    _
  $region5: #{discriminator_forward.5} parent=0 // pred_fallthru
    _
  // Predicated region
  $region6: #{discriminator_forward.5} parent=0 // pred_check
    _
  $region7: #{discriminator_forward.5} parent=0 // pred_check_branch
    %10 = sbr.rel (0) target = $region9
  $region8: #{discriminator_forward.5} parent=0 // pred_region
    _
  $region9: #{discriminator_forward.5} parent=0 // pred_fallthru
    _
  %v12 = vld [vmem:[%s0] sm:$0x3]
  %v13 = vld [vmem:[%s1] sm:$0xf]
  %v14 = vld [vmem:[%s1 + $0x4] sm:$0xf]
  %v15 = vld [vmem:[%s1 + $0x8] sm:$0xf]
  %v16 = vld [vmem:[%s1 + $0xc] sm:$0xf]
  %v17 = vld [vmem:[%s1 + $0x10] sm:$0xf]
  %v18 = vld [vmem:[%s1 + $0x14] sm:$0xf]
  %v19 = vld [vmem:[%s1 + $0x18] sm:$0xf]
  %v20 = vld [vmem:[%s1 + $0x1c] sm:$0xf]
  %v21 = vld [vmem:[%s1 + $0x20] sm:$0xf]
  %v22 = vld [vmem:[%s1 + $0x24] sm:$0xf]
  %v23 = vld [vmem:[%s1 + $0x28] sm:$0xf]
  %v24 = vld [vmem:[%s1 + $0x2c] sm:$0xf]
  %v25 = vld [vmem:[%s1 + $0x30] sm:$0xf]
  %v26 = vld [vmem:[%s1 + $0x34] sm:$0xf]
  %v27 = vld [vmem:[%s1 + $0x38] sm:$0xf]
  %v28 = vld [vmem:[%s1 + $0x3c] sm:$0xf]
  %v29 = vld [vmem:[%s1 + $0x40] sm:$0xf]
  %v30 = vld [vmem:[%s1 + $0x44] sm:$0xf]
  %v31 = vld [vmem:[%s1 + $0x48] sm:$0xf]
  %v32 = vld [vmem:[%s1 + $0x4c] sm:$0xf]
  %v33 = vld [vmem:[%s1 + $0x50] sm:$0xf]
  %v34 = vld [vmem:[%s1 + $0x54] sm:$0xf]
  %v35 = vld [vmem:[%s1 + $0x58] sm:$0xf]
  %v36 = vld [vmem:[%s1 + $0x5c] sm:$0xf]
  %v37 = vld [vmem:[%s1 + $0x60] sm:$0xf]
  %v38 = vld [vmem:[%s1 + $0x64] sm:$0xf]
  %v39 = vld [vmem:[%s1 + $0x68] sm:$0xf]
  %v40 = vld [vmem:[%s1 + $0x6c] sm:$0xf]
  %v41 = vld [vmem:[%s1 + $0x70] sm:$0xf]
  %v42 = vld [vmem:[%s1 + $0x74] sm:$0xf]
  %v43 = vld [vmem:[%s1 + $0x78] sm:$0xf]
  %v44 = vld [vmem:[%s1 + $0x7c] sm:$0xf]
  %v47 = vunpack.c.l.s4 1966171168
  %v48 = vunpack.c.0.s8 %v47
  %v49 = vlaneseq
  %v50 = vshrl.u32 %v49, 7
  %v51 = vsub.s32 %v48, %v50
  %v52 = vrot.slane %v12, %v51
  %v53 = vcombine.high %v52, %v52
  %v55 = vunpack.c.l.s4 1966171168
  %v56 = vunpack.c.0.s8 %v55
  %v57 = vlaneseq
  %v58 = vshrl.u32 %v57, 7
  %v59 = vsub.s32 %v56, %v58
  %v60 = vrot.slane %v52, %v59
  %v62 = vunpack.c.l.s4 1966171168
  %v63 = vunpack.c.0.s8 %v62
  %v64 = vlaneseq
  %v65 = vshrl.u32 %v64, 7
  %v66 = vsub.s32 %v63, %v65
  %v67 = vrot.slane %v53, %v66
  %v102 = vunpack.c.l.b16 %v13
  %v103 = vunpack.c.l.b16 %v14
  %v104 = vunpack.c.l.b16 %v15
  %v105 = vunpack.c.l.b16 %v16
  %v106 = vunpack.c.l.b16 %v17
  %v107 = vunpack.c.l.b16 %v18
  %v108 = vunpack.c.l.b16 %v19
  %v109 = vunpack.c.l.b16 %v20
  %v110 = vunpack.c.l.b16 %v21
  %v111 = vunpack.c.l.b16 %v22
  %v112 = vunpack.c.l.b16 %v23
  %v113 = vunpack.c.l.b16 %v24
  %v114 = vunpack.c.l.b16 %v25
  %v115 = vunpack.c.l.b16 %v26
  %v116 = vunpack.c.l.b16 %v27
  %v117 = vunpack.c.l.b16 %v28
  %v118 = vunpack.c.l.b16 %v29
  %v119 = vunpack.c.l.b16 %v30
  %v120 = vunpack.c.l.b16 %v31
  %v121 = vunpack.c.l.b16 %v32
  %v122 = vunpack.c.l.b16 %v33
  %v123 = vunpack.c.l.b16 %v34
  %v124 = vunpack.c.l.b16 %v35
  %v125 = vunpack.c.l.b16 %v36
  %v126 = vunpack.c.l.b16 %v37
  %v127 = vunpack.c.l.b16 %v38
  %v128 = vunpack.c.l.b16 %v39
  %v129 = vunpack.c.l.b16 %v40
  %v130 = vunpack.c.l.b16 %v41
  %v131 = vunpack.c.l.b16 %v42
  %v132 = vunpack.c.l.b16 %v43
  %v133 = vunpack.c.l.b16 %v44
  %v134 = vpack.c.b16 %v103, %v102
  %v135 = vpack.c.b16 %v105, %v104
  %v136 = vpack.c.b16 %v107, %v106
  %v137 = vpack.c.b16 %v109, %v108
  %v138 = vpack.c.b16 %v111, %v110
  %v139 = vpack.c.b16 %v113, %v112
  %v140 = vpack.c.b16 %v115, %v114
  %v141 = vpack.c.b16 %v117, %v116
  %v142 = vpack.c.b16 %v119, %v118
  %v143 = vpack.c.b16 %v121, %v120
  %v144 = vpack.c.b16 %v123, %v122
  %v145 = vpack.c.b16 %v125, %v124
  %v146 = vpack.c.b16 %v127, %v126
  %v147 = vpack.c.b16 %v129, %v128
  %v148 = vpack.c.b16 %v131, %v130
  %v149 = vpack.c.b16 %v133, %v132
  %166 = vmatprep.subr.bf16.mxu0 0
  %167 = vmatpush1.bf16.msra.mxu0 %v134
  %168 = vmatprep.subr.bf16.mxu0 0
  %169 = vmatpush1.bf16.msra.mxu0 %v135
  %170 = vmatprep.subr.bf16.mxu0 0
  %171 = vmatpush1.bf16.msra.mxu0 %v136
  %172 = vmatprep.subr.bf16.mxu0 0
  %173 = vmatpush1.bf16.msra.mxu0 %v137
  %174 = vmatprep.subr.bf16.mxu0 0
  %175 = vmatpush1.bf16.msra.mxu0 %v138
  %176 = vmatprep.subr.bf16.mxu0 0
  %177 = vmatpush1.bf16.msra.mxu0 %v139
  %178 = vmatprep.subr.bf16.mxu0 0
  %179 = vmatpush1.bf16.msra.mxu0 %v140
  %180 = vmatprep.subr.bf16.mxu0 0
  %181 = vmatpush1.bf16.msra.mxu0 %v141
  %182 = vmatprep.subr.bf16.mxu0 0
  %183 = vmatpush1.bf16.msra.mxu0 %v142
  %184 = vmatprep.subr.bf16.mxu0 0
  %185 = vmatpush1.bf16.msra.mxu0 %v143
  %186 = vmatprep.subr.bf16.mxu0 0
  %187 = vmatpush1.bf16.msra.mxu0 %v144
  %188 = vmatprep.subr.bf16.mxu0 0
  %189 = vmatpush1.bf16.msra.mxu0 %v145
  %190 = vmatprep.subr.bf16.mxu0 0
  %191 = vmatpush1.bf16.msra.mxu0 %v146
  %192 = vmatprep.subr.bf16.mxu0 0
  %193 = vmatpush1.bf16.msra.mxu0 %v147
  %194 = vmatprep.subr.bf16.mxu0 0
  %195 = vmatpush1.bf16.msra.mxu0 %v148
  %196 = vmatprep.subr.bf16.mxu0 0
  %197 = vmatpush1.bf16.msra.mxu0 %v149
  %198 = vmatprep.mubr.bf16.mxu0 %v67
  %199 = vmatmul.mubr.bf16.gmra.mrb[0].mxu0 %v60
  %v200 = vpop.f32.mrb[0].mxu0
  %v201 = vadd.f32 0.0, %v200
  %v202 = vpop.f32.mrb[0].mxu0
  %v203 = vpop.f32.mrb[0].mxu0
  %v204 = vpop.f32.mrb[0].mxu0
  %205 = vdwg.mxu0
  %v206 = vsub.f32 0.0, %v201
  %v207 = vmul.f32 %v206, 1.442695
  %v208 = vpow.pop %v207
  %v209 = vadd.f32 %v208, 1.0
  %v210 = vrcp.pop %v209
  %v211 = vmul.f32 1.0, %v210
  %212 = vst [vmem:[%s2] sm:$0x3] %v211
  // Predicated region
  $region10: #{discriminator_forward.5} parent=0 // pred_check
    _
  $region11: #{discriminator_forward.5} parent=0 // pred_check_branch
    %214 = sbr.rel (0) target = $region13
  $region12: #{discriminator_forward.5} parent=0 // pred_region
    _
  $region13: #{discriminator_forward.5} parent=0 // pred_fallthru
    _
  // Predicated region
  $region14: #{discriminator_forward.5} parent=0 // pred_check
    _
  $region15: #{discriminator_forward.5} parent=0 // pred_check_branch
    %216 = sbr.rel (0) target = $region17
  $region16: #{discriminator_forward.5} parent=0 // pred_region
    _
  $region17: #{discriminator_forward.5} parent=0 // pred_fallthru
    _

// kernel: discriminator_forward.4
$region0: #{discriminator_forward.4}
  #allocation0 [shape = 'u32[]', space=smem, size = 0x4, offset = 0x4, fixed_abs, tag = 'smem constant byte address 0x4 - core index']
  #allocation1 [shape = 'u32[144,128]{1,0:T(1,128)}', space=vmem, size = 0x12000, scoped, tag = 'internal scratch']
  %s0 = inlined_call_operand.vmem [shape: bf16[2,5,5,8], index: 0, kind: input, shape index: {}]
  %s1 = inlined_call_operand.vmem [shape: bf16[2,5,5,8], index: 1, kind: input, shape index: {}]
  %s2 = inlined_call_operand.vmem [shape: bf16[2,5,5,8], index: 2, kind: input, shape index: {}]
  %s3 = inlined_call_operand.vmem [shape: bf16[2,5,5,8], index: 3, kind: input, shape index: {}]
  %s4 = inlined_call_operand.vmem [shape: bf16[16,8,128], index: 4, kind: input, shape index: {}]
  %s5 = inlined_call_operand.vmem [shape: bf16[32,128], index: 5, kind: output, shape index: {0}]
  %s6 = inlined_call_operand.vmem [shape: f32[2,1,128], index: 6, kind: output, shape index: {1}]
  %s7 = inlined_call_operand.vmem [shape: f32[2,1,128], index: 7, kind: output, shape index: {2}]
  %8 = xla_tuple %s5, %s6, %s7
  %s9 = sld [smem:[#allocation0]]
  $region69: #{discriminator_forward.4} parent=0
    _
  %s11 = ssub.s32 1, %s9
  %s12 = scalar_select 0, %s11, %s9
  loop: start=0, step=1, limit=4
  $region2: #{discriminator_forward.4} parent=0 // loop_pre_header
    _
  $region3: #{discriminator_forward.4} parent=0 // loop_header
    %s14 = sphi 0, %s18
    %p15 = scmp.ge.s32.totalorder %s14, 4
    %s24 = sphi 0, %s26
    %s27 = sphi 0, %s24
    %s28 = sphi 0, %s27
    %s44 = sphi 0, %s28
    %s50 = sphi 0, %s52
    %s53 = sphi 0, %s50
    %s54 = sphi 0, %s53
    %s70 = sphi 0, %s54
    %s76 = sphi 0, %s78
    %s79 = sphi 0, %s76
    %s80 = sphi 0, %s79
    %s96 = sphi 0, %s80
    %s102 = sphi 0, %s104
    %s105 = sphi 0, %s102
    %s106 = sphi 0, %s105
    %s122 = sphi 0, %s106
    %s126 = sphi 0, %s126
    %s128 = sphi 0, %s126
    %s129 = sphi 0, %s128
    %s143 = sphi 0, %s129
    %s149 = sphi 0, %s151
    %s152 = sphi 0, %s149
    %s153 = sphi 0, %s152
    %s169 = sphi 0, %s153
    %s175 = sphi 0, %s177
    %s178 = sphi 0, %s175
    %s179 = sphi 0, %s178
    %s195 = sphi 0, %s179
    %s201 = sphi 0, %s203
    %s204 = sphi 0, %s201
    %s205 = sphi 0, %s204
    %s221 = sphi 0, %s205
  $region4: #{discriminator_forward.4} parent=0 // loop_header_branch
    %17 = sbr.rel (%p15) target = $region8
  $region5: #{discriminator_forward.4} parent=0 // loop_body
    %s19 = ssub.s32 %s14, 1
    %s20 = ssub.s32 %s14, 2
    %s21 = sadd.s32 %s14, 1
    %s22 = ssub.s32 %s14, %s21
    %p23 = scmp.eq.s32.totalorder %s22, 0
    %s25 = sadd.s32 %s24, 1
    %s26 = scalar_select %p23, %s24, %s25
    %p29 = pneg %p23
    %p30 = scmp.eq.s32.totalorder %s14, 1
    %p31 = por %p29, %p30
    %p32 = scmp.ne.s32.totalorder %s24, %s27
    %p33 = scmp.eq.s32.totalorder %s14, 0
    %p34 = por %p32, %p33
    %p35 = scmp.ne.s32.totalorder %s24, %s27
    %p36 = scmp.eq.s32.totalorder %s19, 1
    %p37 = por %p35, %p36
    %p38 = scmp.ne.s32.totalorder %s27, %s28
    %p39 = scmp.eq.s32.totalorder %s19, 0
    %p40 = por %p38, %p39
    %p41 = scmp.ne.s32.totalorder %s27, %s28
    %p42 = scmp.eq.s32.totalorder %s20, 1
    %p43 = por %p41, %p42
    %p45 = scmp.ne.s32.totalorder %s28, %s44
    %p46 = scmp.eq.s32.totalorder %s20, 0
    %p47 = por %p45, %p46
    %s48 = ssub.s32 %s14, %s21
    %p49 = scmp.eq.s32.totalorder %s48, 0
    %s51 = sadd.s32 %s50, 1
    %s52 = scalar_select %p49, %s50, %s51
    %p55 = pneg %p49
    %p56 = scmp.eq.s32.totalorder %s14, 1
    %p57 = por %p55, %p56
    %p58 = scmp.ne.s32.totalorder %s50, %s53
    %p59 = scmp.eq.s32.totalorder %s14, 0
    %p60 = por %p58, %p59
    %p61 = scmp.ne.s32.totalorder %s50, %s53
    %p62 = scmp.eq.s32.totalorder %s19, 1
    %p63 = por %p61, %p62
    %p64 = scmp.ne.s32.totalorder %s53, %s54
    %p65 = scmp.eq.s32.totalorder %s19, 0
    %p66 = por %p64, %p65
    %p67 = scmp.ne.s32.totalorder %s53, %s54
    %p68 = scmp.eq.s32.totalorder %s20, 1
    %p69 = por %p67, %p68
    %p71 = scmp.ne.s32.totalorder %s54, %s70
    %p72 = scmp.eq.s32.totalorder %s20, 0
    %p73 = por %p71, %p72
    %s74 = ssub.s32 %s14, %s21
    %p75 = scmp.eq.s32.totalorder %s74, 0
    %s77 = sadd.s32 %s76, 1
    %s78 = scalar_select %p75, %s76, %s77
    %p81 = pneg %p75
    %p82 = scmp.eq.s32.totalorder %s14, 1
    %p83 = por %p81, %p82
    %p84 = scmp.ne.s32.totalorder %s76, %s79
    %p85 = scmp.eq.s32.totalorder %s14, 0
    %p86 = por %p84, %p85
    %p87 = scmp.ne.s32.totalorder %s76, %s79
    %p88 = scmp.eq.s32.totalorder %s19, 1
    %p89 = por %p87, %p88
    %p90 = scmp.ne.s32.totalorder %s79, %s80
    %p91 = scmp.eq.s32.totalorder %s19, 0
    %p92 = por %p90, %p91
    %p93 = scmp.ne.s32.totalorder %s79, %s80
    %p94 = scmp.eq.s32.totalorder %s20, 1
    %p95 = por %p93, %p94
    %p97 = scmp.ne.s32.totalorder %s80, %s96
    %p98 = scmp.eq.s32.totalorder %s20, 0
    %p99 = por %p97, %p98
    %s100 = ssub.s32 %s14, %s21
    %p101 = scmp.eq.s32.totalorder %s100, 0
    %s103 = sadd.s32 %s102, 1
    %s104 = scalar_select %p101, %s102, %s103
    %p107 = pneg %p101
    %p108 = scmp.eq.s32.totalorder %s14, 1
    %p109 = por %p107, %p108
    %p110 = scmp.ne.s32.totalorder %s102, %s105
    %p111 = scmp.eq.s32.totalorder %s14, 0
    %p112 = por %p110, %p111
    %p113 = scmp.ne.s32.totalorder %s102, %s105
    %p114 = scmp.eq.s32.totalorder %s19, 1
    %p115 = por %p113, %p114
    %p116 = scmp.ne.s32.totalorder %s105, %s106
    %p117 = scmp.eq.s32.totalorder %s19, 0
    %p118 = por %p116, %p117
    %p119 = scmp.ne.s32.totalorder %s105, %s106
    %p120 = scmp.eq.s32.totalorder %s20, 1
    %p121 = por %p119, %p120
    %p123 = scmp.ne.s32.totalorder %s106, %s122
    %p124 = scmp.eq.s32.totalorder %s20, 0
    %p125 = por %p123, %p124
    %s127 = sadd.s32 %s126, 1
    %p130 = scmp.eq.s32.totalorder %s14, 1
    %p131 = scmp.ne.s32.totalorder %s126, %s128
    %p132 = scmp.eq.s32.totalorder %s14, 0
    %p133 = por %p131, %p132
    %p134 = scmp.ne.s32.totalorder %s126, %s128
    %p135 = scmp.eq.s32.totalorder %s19, 1
    %p136 = por %p134, %p135
    %p137 = scmp.ne.s32.totalorder %s128, %s129
    %p138 = scmp.eq.s32.totalorder %s19, 0
    %p139 = por %p137, %p138
    %p140 = scmp.ne.s32.totalorder %s128, %s129
    %p141 = scmp.eq.s32.totalorder %s20, 1
    %p142 = por %p140, %p141
    %p144 = scmp.ne.s32.totalorder %s129, %s143
    %p145 = scmp.eq.s32.totalorder %s20, 0
    %p146 = por %p144, %p145
    %s147 = ssub.s32 %s14, %s21
    %p148 = scmp.eq.s32.totalorder %s147, 0
    %s150 = sadd.s32 %s149, 1
    %s151 = scalar_select %p148, %s149, %s150
    %p154 = pneg %p148
    %p155 = scmp.eq.s32.totalorder %s14, 1
    %p156 = por %p154, %p155
    %p157 = scmp.ne.s32.totalorder %s149, %s152
    %p158 = scmp.eq.s32.totalorder %s14, 0
    %p159 = por %p157, %p158
    %p160 = scmp.ne.s32.totalorder %s149, %s152
    %p161 = scmp.eq.s32.totalorder %s19, 1
    %p162 = por %p160, %p161
    %p163 = scmp.ne.s32.totalorder %s152, %s153
    %p164 = scmp.eq.s32.totalorder %s19, 0
    %p165 = por %p163, %p164
    %p166 = scmp.ne.s32.totalorder %s152, %s153
    %p167 = scmp.eq.s32.totalorder %s20, 1
    %p168 = por %p166, %p167
    %p170 = scmp.ne.s32.totalorder %s153, %s169
    %p171 = scmp.eq.s32.totalorder %s20, 0
    %p172 = por %p170, %p171
    %s173 = ssub.s32 %s14, %s21
    %p174 = scmp.eq.s32.totalorder %s173, 0
    %s176 = sadd.s32 %s175, 1
    %s177 = scalar_select %p174, %s175, %s176
    %p180 = pneg %p174
    %p181 = scmp.eq.s32.totalorder %s14, 1
    %p182 = por %p180, %p181
    %p183 = scmp.ne.s32.totalorder %s175, %s178
    %p184 = scmp.eq.s32.totalorder %s14, 0
    %p185 = por %p183, %p184
    %p186 = scmp.ne.s32.totalorder %s175, %s178
    %p187 = scmp.eq.s32.totalorder %s19, 1
    %p188 = por %p186, %p187
    %p189 = scmp.ne.s32.totalorder %s178, %s179
    %p190 = scmp.eq.s32.totalorder %s19, 0
    %p191 = por %p189, %p190
    %p192 = scmp.ne.s32.totalorder %s178, %s179
    %p193 = scmp.eq.s32.totalorder %s20, 1
    %p194 = por %p192, %p193
    %p196 = scmp.ne.s32.totalorder %s179, %s195
    %p197 = scmp.eq.s32.totalorder %s20, 0
    %p198 = por %p196, %p197
    %s199 = ssub.s32 %s14, %s21
    %p200 = scmp.eq.s32.totalorder %s199, 0
    %s202 = sadd.s32 %s201, 1
    %s203 = scalar_select %p200, %s201, %s202
    %p206 = pneg %p200
    %p207 = scmp.eq.s32.totalorder %s14, 1
    %p208 = por %p206, %p207
    %p209 = scmp.ne.s32.totalorder %s201, %s204
    %p210 = scmp.eq.s32.totalorder %s14, 0
    %p211 = por %p209, %p210
    %p212 = scmp.ne.s32.totalorder %s201, %s204
    %p213 = scmp.eq.s32.totalorder %s19, 1
    %p214 = por %p212, %p213
    %p215 = scmp.ne.s32.totalorder %s204, %s205
    %p216 = scmp.eq.s32.totalorder %s19, 0
    %p217 = por %p215, %p216
    %p218 = scmp.ne.s32.totalorder %s204, %s205
    %p219 = scmp.eq.s32.totalorder %s20, 1
    %p220 = por %p218, %p219
    %p222 = scmp.ne.s32.totalorder %s205, %s221
    %p223 = scmp.eq.s32.totalorder %s20, 0
    %p224 = por %p222, %p223
    %p225 = scmp.le.s32.totalorder 1, %s14
    %p226 = scmp.lt.s32.totalorder %s14, 3
    %p227 = pnand %p225, %p226
    %p228 = pneg %p227
    // Predicated region
    $region9: #{discriminator_forward.4} parent=5 // pred_check
      _
    $region10: #{discriminator_forward.4} parent=5 // pred_check_branch
      %230 = sbr.rel (%p227) target = $region12
    $region11: #{discriminator_forward.4} parent=5 // pred_region
      %s231 = ssub.s32 %s14, 1
      // Predicated region
      $region13: #{discriminator_forward.4} parent=11 // pred_check
        %p232 = pneg %p139
      $region14: #{discriminator_forward.4} parent=11 // pred_check_branch
        %234 = sbr.rel (%p232) target = $region16
      $region15: #{discriminator_forward.4} parent=11 // pred_region
        _
      $region16: #{discriminator_forward.4} parent=11 // pred_fallthru
        _
    $region12: #{discriminator_forward.4} parent=5 // pred_fallthru
      _
    %p235 = scmp.lt.s32.totalorder %s14, 2
    // Predicated region
    $region17: #{discriminator_forward.4} parent=5 // pred_check
      %p236 = pneg %p235
    $region18: #{discriminator_forward.4} parent=5 // pred_check_branch
      %238 = sbr.rel (%p236) target = $region20
    $region19: #{discriminator_forward.4} parent=5 // pred_region
      // Predicated region
      $region21: #{discriminator_forward.4} parent=19 // pred_check
        %p239 = pneg %p34
      $region22: #{discriminator_forward.4} parent=19 // pred_check_branch
        %241 = sbr.rel (%p239) target = $region24
      $region23: #{discriminator_forward.4} parent=19 // pred_region
        %p242 = scmp.lt.s32.totalorder %s14, 1
        %s243 = scalar_select %p242, %s14, 1
        %s244 = smul.addr %s243, 5
        %s245 = smul.addr %s244, 4
        %s246 = scalar_lea.vmem %s0, %s245
      $region24: #{discriminator_forward.4} parent=19 // pred_fallthru
        _
      // Predicated region
      $region25: #{discriminator_forward.4} parent=19 // pred_check
        %p247 = pneg %p60
      $region26: #{discriminator_forward.4} parent=19 // pred_check_branch
        %249 = sbr.rel (%p247) target = $region28
      $region27: #{discriminator_forward.4} parent=19 // pred_region
        %p250 = scmp.lt.s32.totalorder %s14, 1
        %s251 = scalar_select %p250, %s14, 1
        %s252 = smul.addr %s251, 5
        %s253 = smul.addr %s252, 4
        %s254 = scalar_lea.vmem %s1, %s253
      $region28: #{discriminator_forward.4} parent=19 // pred_fallthru
        _
      // Predicated region
      $region29: #{discriminator_forward.4} parent=19 // pred_check
        %p255 = pneg %p86
      $region30: #{discriminator_forward.4} parent=19 // pred_check_branch
        %257 = sbr.rel (%p255) target = $region32
      $region31: #{discriminator_forward.4} parent=19 // pred_region
        %p258 = scmp.lt.s32.totalorder %s14, 1
        %s259 = scalar_select %p258, %s14, 1
        %s260 = smul.addr %s259, 5
        %s261 = smul.addr %s260, 4
        %s262 = scalar_lea.vmem %s2, %s261
      $region32: #{discriminator_forward.4} parent=19 // pred_fallthru
        _
      // Predicated region
      $region33: #{discriminator_forward.4} parent=19 // pred_check
        %p263 = pneg %p112
      $region34: #{discriminator_forward.4} parent=19 // pred_check_branch
        %265 = sbr.rel (%p263) target = $region36
      $region35: #{discriminator_forward.4} parent=19 // pred_region
        %p266 = scmp.lt.s32.totalorder %s14, 1
        %s267 = scalar_select %p266, %s14, 1
        %s268 = smul.addr %s267, 5
        %s269 = smul.addr %s268, 4
        %s270 = scalar_lea.vmem %s3, %s269
      $region36: #{discriminator_forward.4} parent=19 // pred_fallthru
        _
    $region20: #{discriminator_forward.4} parent=5 // pred_fallthru
      _
    %p271 = scmp.le.s32.totalorder 1, %s14
    %p272 = scmp.lt.s32.totalorder %s14, 3
    %p273 = pnand %p271, %p272
    %p274 = pneg %p273
    // Predicated region
    $region37: #{discriminator_forward.4} parent=5 // pred_check
      _
    $region38: #{discriminator_forward.4} parent=5 // pred_check_branch
      %276 = sbr.rel (%p273) target = $region40
    $region39: #{discriminator_forward.4} parent=5 // pred_region
      %s277 = ssub.s32 %s14, 1
      %p278 = scmp.lt.s32.totalorder %s19, 1
      %s279 = scalar_select %p278, %s19, 1
      %s280 = smul.addr %s279, 5
      %s281 = smul.addr %s280, 4
      %s282 = scalar_lea.vmem %s0, %s281
      %p283 = pneg %p40
      %p284 = pneg %p37
      %p285 = scmp.lt.s32.totalorder %s19, 1
      %s286 = scalar_select %p285, %s19, 1
      %s287 = smul.addr %s286, 5
      %s288 = smul.addr %s287, 4
      %s289 = scalar_lea.vmem %s1, %s288
      %p290 = pneg %p66
      %p291 = pneg %p63
      %p292 = scmp.lt.s32.totalorder %s19, 1
      %s293 = scalar_select %p292, %s19, 1
      %s294 = smul.addr %s293, 5
      %s295 = smul.addr %s294, 4
      %s296 = scalar_lea.vmem %s2, %s295
      %p297 = pneg %p92
      %p298 = pneg %p89
      %p299 = scmp.lt.s32.totalorder %s19, 1
      %s300 = scalar_select %p299, %s19, 1
      %s301 = smul.addr %s300, 5
      %s302 = smul.addr %s301, 4
      %s303 = scalar_lea.vmem %s3, %s302
      %p304 = pneg %p118
      %p305 = pneg %p115
      %p306 = pneg %p139
      %p307 = pneg %p136
      %p308 = pneg %p165
      %p309 = pneg %p162
      %s310 = smul.u32 2, %s19
      %p311 = scmp.lt.s32.totalorder %s310, 3
      %s312 = scalar_select %p311, %s310, 3
      %s313 = smul.addr %s312, 4
      %s314 = scalar_lea.vmem %s5, %s313
      %p315 = pneg %p191
      %p316 = pneg %p188
      %p317 = scmp.lt.s32.totalorder %s19, 1
      %s318 = scalar_select %p317, %s19, 1
      %s319 = scalar_lea.vmem %s6, %s318
      %p320 = pneg %p217
      %p321 = pneg %p214
      %p322 = scmp.lt.s32.totalorder %s19, 1
      %s323 = scalar_select %p322, %s19, 1
      %s324 = scalar_lea.vmem %s7, %s323
      %p325 = scmp.lt.s32.totalorder %s19, 1
      %s326 = scalar_select %p325, %s19, 1
      %s327 = smul.addr %s326, 5
      %s328 = smul.addr %s327, 4
      %s329 = scalar_lea.vmem %s0, %s328
      %p330 = scmp.lt.s32.totalorder %s19, 1
      %s331 = scalar_select %p330, %s19, 1
      %s332 = smul.addr %s331, 5
      %s333 = smul.addr %s332, 4
      %s334 = scalar_lea.vmem %s1, %s333
      %p335 = scmp.lt.s32.totalorder %s19, 1
      %s336 = scalar_select %p335, %s19, 1
      %s337 = smul.addr %s336, 5
      %s338 = smul.addr %s337, 4
      %s339 = scalar_lea.vmem %s2, %s338
      %p340 = scmp.lt.s32.totalorder %s19, 1
      %s341 = scalar_select %p340, %s19, 1
      %s342 = smul.addr %s341, 5
      %s343 = smul.addr %s342, 4
      %s344 = scalar_lea.vmem %s3, %s343
      %s345 = smul.u32 2, %s19
      %p346 = scmp.lt.s32.totalorder %s345, 3
      %s347 = scalar_select %p346, %s345, 3
      %s348 = smul.addr %s347, 4
      %s349 = scalar_lea.vmem %s5, %s348
      %s350 = smul.u32 2, %s19
      %p351 = scmp.lt.s32.totalorder %s19, 1
      %s352 = scalar_select %p351, %s19, 1
      %s353 = scalar_lea.vmem %s6, %s352
      %p354 = scmp.lt.s32.totalorder %s19, 1
      %s355 = scalar_select %p354, %s19, 1
      %s356 = scalar_lea.vmem %s7, %s355
      %v358 = vld [vmem:[%s329] sm:$0x3]
      %v359 = vld [vmem:[%s329 + $0x4] sm:$0x3]
      %v360 = vld [vmem:[%s329 + $0x8] sm:$0x3]
      %v361 = vld [vmem:[%s329 + $0xc] sm:$0x3]
      %v362 = vld [vmem:[%s4] sm:$0xf]
      %v363 = vld [vmem:[%s334] sm:$0x3]
      %v364 = vld [vmem:[%s334 + $0x4] sm:$0x3]
      %v365 = vld [vmem:[%s334 + $0x8] sm:$0x3]
      %v366 = vld [vmem:[%s334 + $0xc] sm:$0x3]
      %s367 = scalar_lea.vmem %s4, 4
      %v368 = vld [vmem:[%s367] sm:$0xf]
      %v373 = vcombine.low %v363, %v364
      %v374 = vcombine.low %v365, %v366
      %v376 = vunpack.c.l.s4 1983009808
      %v377 = vunpack.c.0.s8 %v376
      %v378 = vlaneseq
      %v379 = vshrl.u32 %v378, 7
      %v380 = vsub.s32 %v377, %v379
      %v381 = vrot.slane %v373, %v380
      %v383 = vunpack.c.l.s4 1983009808
      %v384 = vunpack.c.0.s8 %v383
      %v385 = vlaneseq
      %v386 = vshrl.u32 %v385, 7
      %v387 = vsub.s32 %v384, %v386
      %v388 = vrot.slane %v374, %v387
      %v389 = vcombine.low %v381, %v388
      %vm390 = vcmask 64512
      %v392 = vsel %vm390, %v389, 0
      %vm394 = vcmask 1043456
      %v396 = vsel %vm394, %v368, 0
      %398 = vmatprep.subr.bf16.mxu0 0
      %399 = vmatpush1.bf16.msra.mxu0 %v396
      %400 = vmatprep.subr.bf16.mxu0 0
      %401 = vmatpush1.bf16.msra.mxu0 0
      %402 = vmatprep.subr.bf16.mxu0 0
      %403 = vmatpush1.bf16.msra.mxu0 0
      %404 = vmatprep.subr.bf16.mxu0 0
      %405 = vmatpush1.bf16.msra.mxu0 0
      %406 = vmatprep.subr.bf16.mxu0 0
      %407 = vmatpush1.bf16.msra.mxu0 0
      %408 = vmatprep.subr.bf16.mxu0 0
      %409 = vmatpush1.bf16.msra.mxu0 0
      %410 = vmatprep.subr.bf16.mxu0 0
      %411 = vmatpush1.bf16.msra.mxu0 0
      %412 = vmatprep.subr.bf16.mxu0 0
      %413 = vmatpush1.bf16.msra.mxu0 0
      %414 = vmatprep.subr.bf16.mxu0 0
      %415 = vmatpush1.bf16.msra.mxu0 0
      %416 = vmatprep.subr.bf16.mxu0 0
      %417 = vmatpush1.bf16.msra.mxu0 0
      %418 = vmatprep.subr.bf16.mxu0 0
      %419 = vmatpush1.bf16.msra.mxu0 0
      %420 = vmatprep.subr.bf16.mxu0 0
      %421 = vmatpush1.bf16.msra.mxu0 0
      %422 = vmatprep.subr.bf16.mxu0 0
      %423 = vmatpush1.bf16.msra.mxu0 0
      %424 = vmatprep.subr.bf16.mxu0 0
      %425 = vmatpush1.bf16.msra.mxu0 0
      %426 = vmatprep.subr.bf16.mxu0 0
      %427 = vmatpush1.bf16.msra.mxu0 0
      %428 = vmatprep.subr.bf16.mxu0 0
      %429 = vmatpush1.bf16.msra.mxu0 0
      %430 = vmatprep.mubr.bf16.mxu0 0
      %431 = vmatmul.mubr.bf16.gmra.mrb[0].mxu0 %v392
      %v432 = vpop.f32.mrb[0].mxu0
      %v433 = vadd.f32 0.0, %v432
      %v434 = vpop.f32.mrb[0].mxu0
      %v435 = vpop.f32.mrb[0].mxu0
      %v436 = vadd.f32 0.0, %v435
      %v437 = vpop.f32.mrb[0].mxu0
      %438 = vdwg.mxu0
      %v443 = vcombine.low %v358, %v359
      %v444 = vcombine.low %v360, %v361
      %v446 = vunpack.c.l.s4 1983009808
      %v447 = vunpack.c.0.s8 %v446
      %v448 = vlaneseq
      %v449 = vshrl.u32 %v448, 7
      %v450 = vsub.s32 %v447, %v449
      %v451 = vrot.slane %v443, %v450
      %v453 = vunpack.c.l.s4 1983009808
      %v454 = vunpack.c.0.s8 %v453
      %v455 = vlaneseq
      %v456 = vshrl.u32 %v455, 7
      %v457 = vsub.s32 %v454, %v456
      %v458 = vrot.slane %v444, %v457
      %v459 = vcombine.low %v451, %v458
      %v461 = vsel %vm390, %v459, 0
      %v464 = vsel %vm394, %v362, 0
      %466 = vmatprep.subr.bf16.mxu0 0
      %467 = vmatpush1.bf16.msra.mxu0 %v464
      %468 = vmatprep.subr.bf16.mxu0 0
      %469 = vmatpush1.bf16.msra.mxu0 0
      %470 = vmatprep.subr.bf16.mxu0 0
      %471 = vmatpush1.bf16.msra.mxu0 0
      %472 = vmatprep.subr.bf16.mxu0 0
      %473 = vmatpush1.bf16.msra.mxu0 0
      %474 = vmatprep.subr.bf16.mxu0 0
      %475 = vmatpush1.bf16.msra.mxu0 0
      %476 = vmatprep.subr.bf16.mxu0 0
      %477 = vmatpush1.bf16.msra.mxu0 0
      %478 = vmatprep.subr.bf16.mxu0 0
      %479 = vmatpush1.bf16.msra.mxu0 0
      %480 = vmatprep.subr.bf16.mxu0 0
      %481 = vmatpush1.bf16.msra.mxu0 0
      %482 = vmatprep.subr.bf16.mxu0 0
      %483 = vmatpush1.bf16.msra.mxu0 0
      %484 = vmatprep.subr.bf16.mxu0 0
      %485 = vmatpush1.bf16.msra.mxu0 0
      %486 = vmatprep.subr.bf16.mxu0 0
      %487 = vmatpush1.bf16.msra.mxu0 0
      %488 = vmatprep.subr.bf16.mxu0 0
      %489 = vmatpush1.bf16.msra.mxu0 0
      %490 = vmatprep.subr.bf16.mxu0 0
      %491 = vmatpush1.bf16.msra.mxu0 0
      %492 = vmatprep.subr.bf16.mxu0 0
      %493 = vmatpush1.bf16.msra.mxu0 0
      %494 = vmatprep.subr.bf16.mxu0 0
      %495 = vmatpush1.bf16.msra.mxu0 0
      %496 = vmatprep.subr.bf16.mxu0 0
      %497 = vmatpush1.bf16.msra.mxu0 0
      %498 = vmatprep.mubr.bf16.mxu0 0
      %499 = vmatmul.mubr.bf16.gmra.mrb[0].mxu0 %v461
      %v500 = vpop.f32.mrb[0].mxu0
      %v501 = vadd.f32 %v433, %v500
      %v502 = vpop.f32.mrb[0].mxu0
      %v503 = vpop.f32.mrb[0].mxu0
      %v504 = vadd.f32 %v436, %v503
      %v505 = vpop.f32.mrb[0].mxu0
      %506 = vdwg.mxu0
      %v507 = vld [vmem:[%s329] sm:$0x7]
      %v508 = vld [vmem:[%s329 + $0x4] sm:$0x7]
      %v509 = vld [vmem:[%s329 + $0x8] sm:$0x7]
      %v510 = vld [vmem:[%s329 + $0xc] sm:$0x7]
      %v516 = vunpack.c.l.s4 1983009808
      %v517 = vunpack.c.0.s8 %v516
      %v518 = vlaneseq
      %v519 = vshrl.u32 %v518, 7
      %v520 = vsub.s32 %v517, %v519
      %v521 = vrot.slane %v507, %v520
      %v522 = vcombine.high %v521, %v521
      %v524 = vunpack.c.l.s4 1983009808
      %v525 = vunpack.c.0.s8 %v524
      %v526 = vlaneseq
      %v527 = vshrl.u32 %v526, 7
      %v528 = vsub.s32 %v525, %v527
      %v529 = vrot.slane %v508, %v528
      %v530 = vcombine.high %v529, %v529
      %v532 = vunpack.c.l.s4 1983009808
      %v533 = vunpack.c.0.s8 %v532
      %v534 = vlaneseq
      %v535 = vshrl.u32 %v534, 7
      %v536 = vsub.s32 %v533, %v535
      %v537 = vrot.slane %v509, %v536
      %v538 = vcombine.high %v537, %v537
      %v540 = vunpack.c.l.s4 1983009808
      %v541 = vunpack.c.0.s8 %v540
      %v542 = vlaneseq
      %v543 = vshrl.u32 %v542, 7
      %v544 = vsub.s32 %v541, %v543
      %v545 = vrot.slane %v510, %v544
      %v546 = vcombine.high %v545, %v545
      %vm547 = vsmask.f32 1280
      %vm548 = vsmask.f32 3336
      %vm549 = vmor %vm547, %vm548
      %vm550 = vsmask.f32 5392
      %vm551 = vmor %vm549, %vm550
      %vm552 = vsmask.f32 7448
      %vm553 = vmor %vm551, %vm552
      %v555 = vshrl.u32 %v521, 16
      %v557 = vrot.slane %v555, 6
      %v558 = vshll.u32 %v521, 16
      %v560 = vrot.slane %v558, 7
      %v561 = vor.u32 %v557, %v560
      %v562 = vrot.slane %v561, 2
      %v564 = vshll.u32 %v522, 16
      %v566 = vrot.slane %v564, 7
      %v567 = vsel %vm553, %v562, %v566
      %v569 = vshrl.u32 %v529, 16
      %v571 = vrot.slane %v569, 6
      %v572 = vshll.u32 %v529, 16
      %v574 = vrot.slane %v572, 7
      %v575 = vor.u32 %v571, %v574
      %v576 = vrot.slane %v575, 2
      %v578 = vshll.u32 %v530, 16
      %v580 = vrot.slane %v578, 7
      %v581 = vsel %vm553, %v576, %v580
      %v583 = vshrl.u32 %v537, 16
      %v585 = vrot.slane %v583, 6
      %v586 = vshll.u32 %v537, 16
      %v588 = vrot.slane %v586, 7
      %v589 = vor.u32 %v585, %v588
      %v590 = vrot.slane %v589, 2
      %v592 = vshll.u32 %v538, 16
      %v594 = vrot.slane %v592, 7
      %v595 = vsel %vm553, %v590, %v594
      %v597 = vshrl.u32 %v545, 16
      %v599 = vrot.slane %v597, 6
      %v600 = vshll.u32 %v545, 16
      %v602 = vrot.slane %v600, 7
      %v603 = vor.u32 %v599, %v602
      %v604 = vrot.slane %v603, 2
      %v606 = vshll.u32 %v546, 16
      %v608 = vrot.slane %v606, 7
      %v609 = vsel %vm553, %v604, %v608
      %s610 = scalar_lea.vmem %s4, 8
      %v611 = vld [vmem:[%s610] sm:$0xf]
      %v612 = vcombine.low %v567, %v581
      %v613 = vcombine.low %v595, %v609
      %v615 = vunpack.c.l.s4 1983009808
      %v616 = vunpack.c.0.s8 %v615
      %v617 = vlaneseq
      %v618 = vshrl.u32 %v617, 7
      %v619 = vsub.s32 %v616, %v618
      %v620 = vrot.slane %v612, %v619
      %v622 = vunpack.c.l.s4 1983009808
      %v623 = vunpack.c.0.s8 %v622
      %v624 = vlaneseq
      %v625 = vshrl.u32 %v624, 7
      %v626 = vsub.s32 %v623, %v625
      %v627 = vrot.slane %v613, %v626
      %v628 = vcombine.low %v620, %v627
      %v630 = vsel %vm390, %v628, 0
      %v633 = vsel %vm394, %v611, 0
      %635 = vmatprep.subr.bf16.mxu0 0
      %636 = vmatpush1.bf16.msra.mxu0 %v633
      %637 = vmatprep.subr.bf16.mxu0 0
      %638 = vmatpush1.bf16.msra.mxu0 0
      %639 = vmatprep.subr.bf16.mxu0 0
      %640 = vmatpush1.bf16.msra.mxu0 0
      %641 = vmatprep.subr.bf16.mxu0 0
      %642 = vmatpush1.bf16.msra.mxu0 0
      %643 = vmatprep.subr.bf16.mxu0 0
      %644 = vmatpush1.bf16.msra.mxu0 0
      %645 = vmatprep.subr.bf16.mxu0 0
      %646 = vmatpush1.bf16.msra.mxu0 0
      %647 = vmatprep.subr.bf16.mxu0 0
      %648 = vmatpush1.bf16.msra.mxu0 0
      %649 = vmatprep.subr.bf16.mxu0 0
      %650 = vmatpush1.bf16.msra.mxu0 0
      %651 = vmatprep.subr.bf16.mxu0 0
      %652 = vmatpush1.bf16.msra.mxu0 0
      %653 = vmatprep.subr.bf16.mxu0 0
      %654 = vmatpush1.bf16.msra.mxu0 0
      %655 = vmatprep.subr.bf16.mxu0 0
      %656 = vmatpush1.bf16.msra.mxu0 0
      %657 = vmatprep.subr.bf16.mxu0 0
      %658 = vmatpush1.bf16.msra.mxu0 0
      %659 = vmatprep.subr.bf16.mxu0 0
      %660 = vmatpush1.bf16.msra.mxu0 0
      %661 = vmatprep.subr.bf16.mxu0 0
      %662 = vmatpush1.bf16.msra.mxu0 0
      %663 = vmatprep.subr.bf16.mxu0 0
      %664 = vmatpush1.bf16.msra.mxu0 0
      %665 = vmatprep.subr.bf16.mxu0 0
      %666 = vmatpush1.bf16.msra.mxu0 0
      %667 = vmatprep.mubr.bf16.mxu0 0
      %668 = vmatmul.mubr.bf16.gmra.mrb[0].mxu0 %v630
      %v669 = vpop.f32.mrb[0].mxu0
      %v670 = vadd.f32 0.0, %v669
      %v671 = vpop.f32.mrb[0].mxu0
      %v672 = vpop.f32.mrb[0].mxu0
      %v673 = vadd.f32 0.0, %v672
      %v674 = vpop.f32.mrb[0].mxu0
      %675 = vdwg.mxu0
      %v676 = vadd.f32 %v501, %v670
      %v677 = vadd.f32 %v504, %v673
      %v678 = vld [vmem:[%s334] sm:$0x7]
      %v679 = vld [vmem:[%s334 + $0x4] sm:$0x7]
      %v680 = vld [vmem:[%s334 + $0x8] sm:$0x7]
      %v681 = vld [vmem:[%s334 + $0xc] sm:$0x7]
      %v687 = vunpack.c.l.s4 1983009808
      %v688 = vunpack.c.0.s8 %v687
      %v689 = vlaneseq
      %v690 = vshrl.u32 %v689, 7
      %v691 = vsub.s32 %v688, %v690
      %v692 = vrot.slane %v678, %v691
      %v693 = vcombine.high %v692, %v692
      %v695 = vunpack.c.l.s4 1983009808
      %v696 = vunpack.c.0.s8 %v695
      %v697 = vlaneseq
      %v698 = vshrl.u32 %v697, 7
      %v699 = vsub.s32 %v696, %v698
      %v700 = vrot.slane %v679, %v699
      %v701 = vcombine.high %v700, %v700
      %v703 = vunpack.c.l.s4 1983009808
      %v704 = vunpack.c.0.s8 %v703
      %v705 = vlaneseq
      %v706 = vshrl.u32 %v705, 7
      %v707 = vsub.s32 %v704, %v706
      %v708 = vrot.slane %v680, %v707
      %v709 = vcombine.high %v708, %v708
      %v711 = vunpack.c.l.s4 1983009808
      %v712 = vunpack.c.0.s8 %v711
      %v713 = vlaneseq
      %v714 = vshrl.u32 %v713, 7
      %v715 = vsub.s32 %v712, %v714
      %v716 = vrot.slane %v681, %v715
      %v717 = vcombine.high %v716, %v716
      %v719 = vshrl.u32 %v692, 16
      %v721 = vrot.slane %v719, 6
      %v722 = vshll.u32 %v692, 16
      %v724 = vrot.slane %v722, 7
      %v725 = vor.u32 %v721, %v724
      %v726 = vrot.slane %v725, 2
      %v728 = vshll.u32 %v693, 16
      %v730 = vrot.slane %v728, 7
      %v731 = vsel %vm553, %v726, %v730
      %v733 = vshrl.u32 %v700, 16
      %v735 = vrot.slane %v733, 6
      %v736 = vshll.u32 %v700, 16
      %v738 = vrot.slane %v736, 7
      %v739 = vor.u32 %v735, %v738
      %v740 = vrot.slane %v739, 2
      %v742 = vshll.u32 %v701, 16
      %v744 = vrot.slane %v742, 7
      %v745 = vsel %vm553, %v740, %v744
      %v747 = vshrl.u32 %v708, 16
      %v749 = vrot.slane %v747, 6
      %v750 = vshll.u32 %v708, 16
      %v752 = vrot.slane %v750, 7
      %v753 = vor.u32 %v749, %v752
      %v754 = vrot.slane %v753, 2
      %v756 = vshll.u32 %v709, 16
      %v758 = vrot.slane %v756, 7
      %v759 = vsel %vm553, %v754, %v758
      %v761 = vshrl.u32 %v716, 16
      %v763 = vrot.slane %v761, 6
      %v764 = vshll.u32 %v716, 16
      %v766 = vrot.slane %v764, 7
      %v767 = vor.u32 %v763, %v766
      %v768 = vrot.slane %v767, 2
      %v770 = vshll.u32 %v717, 16
      %v772 = vrot.slane %v770, 7
      %v773 = vsel %vm553, %v768, %v772
      %s774 = scalar_lea.vmem %s4, 12
      %v775 = vld [vmem:[%s774] sm:$0xf]
      %v776 = vcombine.low %v731, %v745
      %v777 = vcombine.low %v759, %v773
      %v779 = vunpack.c.l.s4 1983009808
      %v780 = vunpack.c.0.s8 %v779
      %v781 = vlaneseq
      %v782 = vshrl.u32 %v781, 7
      %v783 = vsub.s32 %v780, %v782
      %v784 = vrot.slane %v776, %v783
      %v786 = vunpack.c.l.s4 1983009808
      %v787 = vunpack.c.0.s8 %v786
      %v788 = vlaneseq
      %v789 = vshrl.u32 %v788, 7
      %v790 = vsub.s32 %v787, %v789
      %v791 = vrot.slane %v777, %v790
      %v792 = vcombine.low %v784, %v791
      %v794 = vsel %vm390, %v792, 0
      %v797 = vsel %vm394, %v775, 0
      %799 = vmatprep.subr.bf16.mxu0 0
      %800 = vmatpush1.bf16.msra.mxu0 %v797
      %801 = vmatprep.subr.bf16.mxu0 0
      %802 = vmatpush1.bf16.msra.mxu0 0
      %803 = vmatprep.subr.bf16.mxu0 0
      %804 = vmatpush1.bf16.msra.mxu0 0
      %805 = vmatprep.subr.bf16.mxu0 0
      %806 = vmatpush1.bf16.msra.mxu0 0
      %807 = vmatprep.subr.bf16.mxu0 0
      %808 = vmatpush1.bf16.msra.mxu0 0
      %809 = vmatprep.subr.bf16.mxu0 0
      %810 = vmatpush1.bf16.msra.mxu0 0
      %811 = vmatprep.subr.bf16.mxu0 0
      %812 = vmatpush1.bf16.msra.mxu0 0
      %813 = vmatprep.subr.bf16.mxu0 0
      %814 = vmatpush1.bf16.msra.mxu0 0
      %815 = vmatprep.subr.bf16.mxu0 0
      %816 = vmatpush1.bf16.msra.mxu0 0
      %817 = vmatprep.subr.bf16.mxu0 0
      %818 = vmatpush1.bf16.msra.mxu0 0
      %819 = vmatprep.subr.bf16.mxu0 0
      %820 = vmatpush1.bf16.msra.mxu0 0
      %821 = vmatprep.subr.bf16.mxu0 0
      %822 = vmatpush1.bf16.msra.mxu0 0
      %823 = vmatprep.subr.bf16.mxu0 0
      %824 = vmatpush1.bf16.msra.mxu0 0
      %825 = vmatprep.subr.bf16.mxu0 0
      %826 = vmatpush1.bf16.msra.mxu0 0
      %827 = vmatprep.subr.bf16.mxu0 0
      %828 = vmatpush1.bf16.msra.mxu0 0
      %829 = vmatprep.subr.bf16.mxu0 0
      %830 = vmatpush1.bf16.msra.mxu0 0
      %831 = vmatprep.mubr.bf16.mxu0 0
      %832 = vmatmul.mubr.bf16.gmra.mrb[0].mxu0 %v794
      %v833 = vpop.f32.mrb[0].mxu0
      %v834 = vadd.f32 0.0, %v833
      %v835 = vpop.f32.mrb[0].mxu0
      %v836 = vpop.f32.mrb[0].mxu0
      %v837 = vadd.f32 0.0, %v836
      %v838 = vpop.f32.mrb[0].mxu0
      %839 = vdwg.mxu0
      %v840 = vadd.f32 %v676, %v834
      %v841 = vadd.f32 %v677, %v837
      %v842 = vld [vmem:[%s339] sm:$0x3]
      %v843 = vld [vmem:[%s339 + $0x4] sm:$0x3]
      %v844 = vld [vmem:[%s339 + $0x8] sm:$0x3]
      %v845 = vld [vmem:[%s339 + $0xc] sm:$0x3]
      %s846 = scalar_lea.vmem %s4, 16
      %v847 = vld [vmem:[%s846] sm:$0xf]
      %v852 = vcombine.low %v842, %v843
      %v853 = vcombine.low %v844, %v845
      %v855 = vunpack.c.l.s4 1983009808
      %v856 = vunpack.c.0.s8 %v855
      %v857 = vlaneseq
      %v858 = vshrl.u32 %v857, 7
      %v859 = vsub.s32 %v856, %v858
      %v860 = vrot.slane %v852, %v859
      %v862 = vunpack.c.l.s4 1983009808
      %v863 = vunpack.c.0.s8 %v862
      %v864 = vlaneseq
      %v865 = vshrl.u32 %v864, 7
      %v866 = vsub.s32 %v863, %v865
      %v867 = vrot.slane %v853, %v866
      %v868 = vcombine.low %v860, %v867
      %v870 = vsel %vm390, %v868, 0
      %v873 = vsel %vm394, %v847, 0
      %875 = vmatprep.subr.bf16.mxu0 0
      %876 = vmatpush1.bf16.msra.mxu0 %v873
      %877 = vmatprep.subr.bf16.mxu0 0
      %878 = vmatpush1.bf16.msra.mxu0 0
      %879 = vmatprep.subr.bf16.mxu0 0
      %880 = vmatpush1.bf16.msra.mxu0 0
      %881 = vmatprep.subr.bf16.mxu0 0
      %882 = vmatpush1.bf16.msra.mxu0 0
      %883 = vmatprep.subr.bf16.mxu0 0
      %884 = vmatpush1.bf16.msra.mxu0 0
      %885 = vmatprep.subr.bf16.mxu0 0
      %886 = vmatpush1.bf16.msra.mxu0 0
      %887 = vmatprep.subr.bf16.mxu0 0
      %888 = vmatpush1.bf16.msra.mxu0 0
      %889 = vmatprep.subr.bf16.mxu0 0
      %890 = vmatpush1.bf16.msra.mxu0 0
      %891 = vmatprep.subr.bf16.mxu0 0
      %892 = vmatpush1.bf16.msra.mxu0 0
      %893 = vmatprep.subr.bf16.mxu0 0
      %894 = vmatpush1.bf16.msra.mxu0 0
      %895 = vmatprep.subr.bf16.mxu0 0
      %896 = vmatpush1.bf16.msra.mxu0 0
      %897 = vmatprep.subr.bf16.mxu0 0
      %898 = vmatpush1.bf16.msra.mxu0 0
      %899 = vmatprep.subr.bf16.mxu0 0
      %900 = vmatpush1.bf16.msra.mxu0 0
      %901 = vmatprep.subr.bf16.mxu0 0
      %902 = vmatpush1.bf16.msra.mxu0 0
      %903 = vmatprep.subr.bf16.mxu0 0
      %904 = vmatpush1.bf16.msra.mxu0 0
      %905 = vmatprep.subr.bf16.mxu0 0
      %906 = vmatpush1.bf16.msra.mxu0 0
      %907 = vmatprep.mubr.bf16.mxu0 0
      %908 = vmatmul.mubr.bf16.gmra.mrb[0].mxu0 %v870
      %v909 = vpop.f32.mrb[0].mxu0
      %v910 = vadd.f32 0.0, %v909
      %v911 = vpop.f32.mrb[0].mxu0
      %v912 = vpop.f32.mrb[0].mxu0
      %v913 = vadd.f32 0.0, %v912
      %v914 = vpop.f32.mrb[0].mxu0
      %915 = vdwg.mxu0
      %v916 = vadd.f32 %v840, %v910
      %v917 = vadd.f32 %v841, %v913
      %v918 = vld [vmem:[%s344] sm:$0x3]
      %v919 = vld [vmem:[%s344 + $0x4] sm:$0x3]
      %v920 = vld [vmem:[%s344 + $0x8] sm:$0x3]
      %v921 = vld [vmem:[%s344 + $0xc] sm:$0x3]
      %s922 = scalar_lea.vmem %s4, 20
      %v923 = vld [vmem:[%s922] sm:$0xf]
      %v928 = vcombine.low %v918, %v919
      %v929 = vcombine.low %v920, %v921
      %v931 = vunpack.c.l.s4 1983009808
      %v932 = vunpack.c.0.s8 %v931
      %v933 = vlaneseq
      %v934 = vshrl.u32 %v933, 7
      %v935 = vsub.s32 %v932, %v934
      %v936 = vrot.slane %v928, %v935
      %v938 = vunpack.c.l.s4 1983009808
      %v939 = vunpack.c.0.s8 %v938
      %v940 = vlaneseq
      %v941 = vshrl.u32 %v940, 7
      %v942 = vsub.s32 %v939, %v941
      %v943 = vrot.slane %v929, %v942
      %v944 = vcombine.low %v936, %v943
      %v946 = vsel %vm390, %v944, 0
      %v949 = vsel %vm394, %v923, 0
      %951 = vmatprep.subr.bf16.mxu0 0
      %952 = vmatpush1.bf16.msra.mxu0 %v949
      %953 = vmatprep.subr.bf16.mxu0 0
      %954 = vmatpush1.bf16.msra.mxu0 0
      %955 = vmatprep.subr.bf16.mxu0 0
      %956 = vmatpush1.bf16.msra.mxu0 0
      %957 = vmatprep.subr.bf16.mxu0 0
      %958 = vmatpush1.bf16.msra.mxu0 0
      %959 = vmatprep.subr.bf16.mxu0 0
      %960 = vmatpush1.bf16.msra.mxu0 0
      %961 = vmatprep.subr.bf16.mxu0 0
      %962 = vmatpush1.bf16.msra.mxu0 0
      %963 = vmatprep.subr.bf16.mxu0 0
      %964 = vmatpush1.bf16.msra.mxu0 0
      %965 = vmatprep.subr.bf16.mxu0 0
      %966 = vmatpush1.bf16.msra.mxu0 0
      %967 = vmatprep.subr.bf16.mxu0 0
      %968 = vmatpush1.bf16.msra.mxu0 0
      %969 = vmatprep.subr.bf16.mxu0 0
      %970 = vmatpush1.bf16.msra.mxu0 0
      %971 = vmatprep.subr.bf16.mxu0 0
      %972 = vmatpush1.bf16.msra.mxu0 0
      %973 = vmatprep.subr.bf16.mxu0 0
      %974 = vmatpush1.bf16.msra.mxu0 0
      %975 = vmatprep.subr.bf16.mxu0 0
      %976 = vmatpush1.bf16.msra.mxu0 0
      %977 = vmatprep.subr.bf16.mxu0 0
      %978 = vmatpush1.bf16.msra.mxu0 0
      %979 = vmatprep.subr.bf16.mxu0 0
      %980 = vmatpush1.bf16.msra.mxu0 0
      %981 = vmatprep.subr.bf16.mxu0 0
      %982 = vmatpush1.bf16.msra.mxu0 0
      %983 = vmatprep.mubr.bf16.mxu0 0
      %984 = vmatmul.mubr.bf16.gmra.mrb[0].mxu0 %v946
      %v985 = vpop.f32.mrb[0].mxu0
      %v986 = vadd.f32 0.0, %v985
      %v987 = vpop.f32.mrb[0].mxu0
      %v988 = vpop.f32.mrb[0].mxu0
      %v989 = vadd.f32 0.0, %v988
      %v990 = vpop.f32.mrb[0].mxu0
      %991 = vdwg.mxu0
      %v992 = vadd.f32 %v916, %v986
      %v993 = vadd.f32 %v917, %v989
      %v994 = vld [vmem:[%s339] sm:$0x7]
      %v995 = vld [vmem:[%s339 + $0x4] sm:$0x7]
      %v996 = vld [vmem:[%s339 + $0x8] sm:$0x7]
      %v997 = vld [vmem:[%s339 + $0xc] sm:$0x7]
      %v1003 = vunpack.c.l.s4 1983009808
      %v1004 = vunpack.c.0.s8 %v1003
      %v1005 = vlaneseq
      %v1006 = vshrl.u32 %v1005, 7
      %v1007 = vsub.s32 %v1004, %v1006
      %v1008 = vrot.slane %v994, %v1007
      %v1009 = vcombine.high %v1008, %v1008
      %v1011 = vunpack.c.l.s4 1983009808
      %v1012 = vunpack.c.0.s8 %v1011
      %v1013 = vlaneseq
      %v1014 = vshrl.u32 %v1013, 7
      %v1015 = vsub.s32 %v1012, %v1014
      %v1016 = vrot.slane %v995, %v1015
      %v1017 = vcombine.high %v1016, %v1016
      %v1019 = vunpack.c.l.s4 1983009808
      %v1020 = vunpack.c.0.s8 %v1019
      %v1021 = vlaneseq
      %v1022 = vshrl.u32 %v1021, 7
      %v1023 = vsub.s32 %v1020, %v1022
      %v1024 = vrot.slane %v996, %v1023
      %v1025 = vcombine.high %v1024, %v1024
      %v1027 = vunpack.c.l.s4 1983009808
      %v1028 = vunpack.c.0.s8 %v1027
      %v1029 = vlaneseq
      %v1030 = vshrl.u32 %v1029, 7
      %v1031 = vsub.s32 %v1028, %v1030
      %v1032 = vrot.slane %v997, %v1031
      %v1033 = vcombine.high %v1032, %v1032
      %v1035 = vshrl.u32 %v1008, 16
      %v1037 = vrot.slane %v1035, 6
      %v1038 = vshll.u32 %v1008, 16
      %v1040 = vrot.slane %v1038, 7
      %v1041 = vor.u32 %v1037, %v1040
      %v1042 = vrot.slane %v1041, 2
      %v1044 = vshll.u32 %v1009, 16
      %v1046 = vrot.slane %v1044, 7
      %v1047 = vsel %vm553, %v1042, %v1046
      %v1049 = vshrl.u32 %v1016, 16
      %v1051 = vrot.slane %v1049, 6
      %v1052 = vshll.u32 %v1016, 16
      %v1054 = vrot.slane %v1052, 7
      %v1055 = vor.u32 %v1051, %v1054
      %v1056 = vrot.slane %v1055, 2
      %v1058 = vshll.u32 %v1017, 16
      %v1060 = vrot.slane %v1058, 7
      %v1061 = vsel %vm553, %v1056, %v1060
      %v1063 = vshrl.u32 %v1024, 16
      %v1065 = vrot.slane %v1063, 6
      %v1066 = vshll.u32 %v1024, 16
      %v1068 = vrot.slane %v1066, 7
      %v1069 = vor.u32 %v1065, %v1068
      %v1070 = vrot.slane %v1069, 2
      %v1072 = vshll.u32 %v1025, 16
      %v1074 = vrot.slane %v1072, 7
      %v1075 = vsel %vm553, %v1070, %v1074
      %v1077 = vshrl.u32 %v1032, 16
      %v1079 = vrot.slane %v1077, 6
      %v1080 = vshll.u32 %v1032, 16
      %v1082 = vrot.slane %v1080, 7
      %v1083 = vor.u32 %v1079, %v1082
      %v1084 = vrot.slane %v1083, 2
      %v1086 = vshll.u32 %v1033, 16
      %v1088 = vrot.slane %v1086, 7
      %v1089 = vsel %vm553, %v1084, %v1088
      %s1090 = scalar_lea.vmem %s4, 24
      %v1091 = vld [vmem:[%s1090] sm:$0xf]
      %v1092 = vcombine.low %v1047, %v1061
      %v1093 = vcombine.low %v1075, %v1089
      %v1095 = vunpack.c.l.s4 1983009808
      %v1096 = vunpack.c.0.s8 %v1095
      %v1097 = vlaneseq
      %v1098 = vshrl.u32 %v1097, 7
      %v1099 = vsub.s32 %v1096, %v1098
      %v1100 = vrot.slane %v1092, %v1099
      %v1102 = vunpack.c.l.s4 1983009808
      %v1103 = vunpack.c.0.s8 %v1102
      %v1104 = vlaneseq
      %v1105 = vshrl.u32 %v1104, 7
      %v1106 = vsub.s32 %v1103, %v1105
      %v1107 = vrot.slane %v1093, %v1106
      %v1108 = vcombine.low %v1100, %v1107
      %v1110 = vsel %vm390, %v1108, 0
      %v1113 = vsel %vm394, %v1091, 0
      %1115 = vmatprep.subr.bf16.mxu0 0
      %1116 = vmatpush1.bf16.msra.mxu0 %v1113
      %1117 = vmatprep.subr.bf16.mxu0 0
      %1118 = vmatpush1.bf16.msra.mxu0 0
      %1119 = vmatprep.subr.bf16.mxu0 0
      %1120 = vmatpush1.bf16.msra.mxu0 0
      %1121 = vmatprep.subr.bf16.mxu0 0
      %1122 = vmatpush1.bf16.msra.mxu0 0
      %1123 = vmatprep.subr.bf16.mxu0 0
      %1124 = vmatpush1.bf16.msra.mxu0 0
      %1125 = vmatprep.subr.bf16.mxu0 0
      %1126 = vmatpush1.bf16.msra.mxu0 0
      %1127 = vmatprep.subr.bf16.mxu0 0
      %1128 = vmatpush1.bf16.msra.mxu0 0
      %1129 = vmatprep.subr.bf16.mxu0 0
      %1130 = vmatpush1.bf16.msra.mxu0 0
      %1131 = vmatprep.subr.bf16.mxu0 0
      %1132 = vmatpush1.bf16.msra.mxu0 0
      %1133 = vmatprep.subr.bf16.mxu0 0
      %1134 = vmatpush1.bf16.msra.mxu0 0
      %1135 = vmatprep.subr.bf16.mxu0 0
      %1136 = vmatpush1.bf16.msra.mxu0 0
      %1137 = vmatprep.subr.bf16.mxu0 0
      %1138 = vmatpush1.bf16.msra.mxu0 0
      %1139 = vmatprep.subr.bf16.mxu0 0
      %1140 = vmatpush1.bf16.msra.mxu0 0
      %1141 = vmatprep.subr.bf16.mxu0 0
      %1142 = vmatpush1.bf16.msra.mxu0 0
      %1143 = vmatprep.subr.bf16.mxu0 0
      %1144 = vmatpush1.bf16.msra.mxu0 0
      %1145 = vmatprep.subr.bf16.mxu0 0
      %1146 = vmatpush1.bf16.msra.mxu0 0
      %1147 = vmatprep.mubr.bf16.mxu0 0
      %1148 = vmatmul.mubr.bf16.gmra.mrb[0].mxu0 %v1110
      %v1149 = vpop.f32.mrb[0].mxu0
      %v1150 = vadd.f32 0.0, %v1149
      %v1151 = vpop.f32.mrb[0].mxu0
      %v1152 = vpop.f32.mrb[0].mxu0
      %v1153 = vadd.f32 0.0, %v1152
      %v1154 = vpop.f32.mrb[0].mxu0
      %1155 = vdwg.mxu0
      %v1156 = vadd.f32 %v992, %v1150
      %v1157 = vadd.f32 %v993, %v1153
      %v1158 = vld [vmem:[%s344] sm:$0x7]
      %v1159 = vld [vmem:[%s344 + $0x4] sm:$0x7]
      %v1160 = vld [vmem:[%s344 + $0x8] sm:$0x7]
      %v1161 = vld [vmem:[%s344 + $0xc] sm:$0x7]
      %v1167 = vunpack.c.l.s4 1983009808
      %v1168 = vunpack.c.0.s8 %v1167
      %v1169 = vlaneseq
      %v1170 = vshrl.u32 %v1169, 7
      %v1171 = vsub.s32 %v1168, %v1170
      %v1172 = vrot.slane %v1158, %v1171
      %v1173 = vcombine.high %v1172, %v1172
      %v1175 = vunpack.c.l.s4 1983009808
      %v1176 = vunpack.c.0.s8 %v1175
      %v1177 = vlaneseq
      %v1178 = vshrl.u32 %v1177, 7
      %v1179 = vsub.s32 %v1176, %v1178
      %v1180 = vrot.slane %v1159, %v1179
      %v1181 = vcombine.high %v1180, %v1180
      %v1183 = vunpack.c.l.s4 1983009808
      %v1184 = vunpack.c.0.s8 %v1183
      %v1185 = vlaneseq
      %v1186 = vshrl.u32 %v1185, 7
      %v1187 = vsub.s32 %v1184, %v1186
      %v1188 = vrot.slane %v1160, %v1187
      %v1189 = vcombine.high %v1188, %v1188
      %v1191 = vunpack.c.l.s4 1983009808
      %v1192 = vunpack.c.0.s8 %v1191
      %v1193 = vlaneseq
      %v1194 = vshrl.u32 %v1193, 7
      %v1195 = vsub.s32 %v1192, %v1194
      %v1196 = vrot.slane %v1161, %v1195
      %v1197 = vcombine.high %v1196, %v1196
      %v1199 = vshrl.u32 %v1172, 16
      %v1201 = vrot.slane %v1199, 6
      %v1202 = vshll.u32 %v1172, 16
      %v1204 = vrot.slane %v1202, 7
      %v1205 = vor.u32 %v1201, %v1204
      %v1206 = vrot.slane %v1205, 2
      %v1208 = vshll.u32 %v1173, 16
      %v1210 = vrot.slane %v1208, 7
      %v1211 = vsel %vm553, %v1206, %v1210
      %v1213 = vshrl.u32 %v1180, 16
      %v1215 = vrot.slane %v1213, 6
      %v1216 = vshll.u32 %v1180, 16
      %v1218 = vrot.slane %v1216, 7
      %v1219 = vor.u32 %v1215, %v1218
      %v1220 = vrot.slane %v1219, 2
      %v1222 = vshll.u32 %v1181, 16
      %v1224 = vrot.slane %v1222, 7
      %v1225 = vsel %vm553, %v1220, %v1224
      %v1227 = vshrl.u32 %v1188, 16
      %v1229 = vrot.slane %v1227, 6
      %v1230 = vshll.u32 %v1188, 16
      %v1232 = vrot.slane %v1230, 7
      %v1233 = vor.u32 %v1229, %v1232
      %v1234 = vrot.slane %v1233, 2
      %v1236 = vshll.u32 %v1189, 16
      %v1238 = vrot.slane %v1236, 7
      %v1239 = vsel %vm553, %v1234, %v1238
      %v1241 = vshrl.u32 %v1196, 16
      %v1243 = vrot.slane %v1241, 6
      %v1244 = vshll.u32 %v1196, 16
      %v1246 = vrot.slane %v1244, 7
      %v1247 = vor.u32 %v1243, %v1246
      %v1248 = vrot.slane %v1247, 2
      %v1250 = vshll.u32 %v1197, 16
      %v1252 = vrot.slane %v1250, 7
      %v1253 = vsel %vm553, %v1248, %v1252
      %s1254 = scalar_lea.vmem %s4, 28
      %v1255 = vld [vmem:[%s1254] sm:$0xf]
      %v1256 = vcombine.low %v1211, %v1225
      %v1257 = vcombine.low %v1239, %v1253
      %v1259 = vunpack.c.l.s4 1983009808
      %v1260 = vunpack.c.0.s8 %v1259
      %v1261 = vlaneseq
      %v1262 = vshrl.u32 %v1261, 7
      %v1263 = vsub.s32 %v1260, %v1262
      %v1264 = vrot.slane %v1256, %v1263
      %v1266 = vunpack.c.l.s4 1983009808
      %v1267 = vunpack.c.0.s8 %v1266
      %v1268 = vlaneseq
      %v1269 = vshrl.u32 %v1268, 7
      %v1270 = vsub.s32 %v1267, %v1269
      %v1271 = vrot.slane %v1257, %v1270
      %v1272 = vcombine.low %v1264, %v1271
      %v1274 = vsel %vm390, %v1272, 0
      %v1277 = vsel %vm394, %v1255, 0
      %1279 = vmatprep.subr.bf16.mxu0 0
      %1280 = vmatpush1.bf16.msra.mxu0 %v1277
      %1281 = vmatprep.subr.bf16.mxu0 0
      %1282 = vmatpush1.bf16.msra.mxu0 0
      %1283 = vmatprep.subr.bf16.mxu0 0
      %1284 = vmatpush1.bf16.msra.mxu0 0
      %1285 = vmatprep.subr.bf16.mxu0 0
      %1286 = vmatpush1.bf16.msra.mxu0 0
      %1287 = vmatprep.subr.bf16.mxu0 0
      %1288 = vmatpush1.bf16.msra.mxu0 0
      %1289 = vmatprep.subr.bf16.mxu0 0
      %1290 = vmatpush1.bf16.msra.mxu0 0
      %1291 = vmatprep.subr.bf16.mxu0 0
      %1292 = vmatpush1.bf16.msra.mxu0 0
      %1293 = vmatprep.subr.bf16.mxu0 0
      %1294 = vmatpush1.bf16.msra.mxu0 0
      %1295 = vmatprep.subr.bf16.mxu0 0
      %1296 = vmatpush1.bf16.msra.mxu0 0
      %1297 = vmatprep.subr.bf16.mxu0 0
      %1298 = vmatpush1.bf16.msra.mxu0 0
      %1299 = vmatprep.subr.bf16.mxu0 0
      %1300 = vmatpush1.bf16.msra.mxu0 0
      %1301 = vmatprep.subr.bf16.mxu0 0
      %1302 = vmatpush1.bf16.msra.mxu0 0
      %1303 = vmatprep.subr.bf16.mxu0 0
      %1304 = vmatpush1.bf16.msra.mxu0 0
      %1305 = vmatprep.subr.bf16.mxu0 0
      %1306 = vmatpush1.bf16.msra.mxu0 0
      %1307 = vmatprep.subr.bf16.mxu0 0
      %1308 = vmatpush1.bf16.msra.mxu0 0
      %1309 = vmatprep.subr.bf16.mxu0 0
      %1310 = vmatpush1.bf16.msra.mxu0 0
      %1311 = vmatprep.mubr.bf16.mxu0 0
      %1312 = vmatmul.mubr.bf16.gmra.mrb[0].mxu0 %v1274
      %v1313 = vpop.f32.mrb[0].mxu0
      %v1314 = vadd.f32 0.0, %v1313
      %v1315 = vpop.f32.mrb[0].mxu0
      %v1316 = vpop.f32.mrb[0].mxu0
      %v1317 = vadd.f32 0.0, %v1316
      %v1318 = vpop.f32.mrb[0].mxu0
      %1319 = vdwg.mxu0
      %v1320 = vadd.f32 %v1156, %v1314
      %v1321 = vadd.f32 %v1157, %v1317
      %s1322 = scalar_lea.vmem %s329, 4
      %v1323 = vld [vmem:[%s1322] sm:$0x3]
      %v1324 = vld [vmem:[%s1322 + $0x4] sm:$0x3]
      %v1325 = vld [vmem:[%s1322 + $0x8] sm:$0x3]
      %v1326 = vld [vmem:[%s1322 + $0xc] sm:$0x3]
      %s1327 = scalar_lea.vmem %s4, 32
      %v1328 = vld [vmem:[%s1327] sm:$0xf]
      %v1333 = vcombine.low %v1323, %v1324
      %v1334 = vcombine.low %v1325, %v1326
      %v1336 = vunpack.c.l.s4 1983009808
      %v1337 = vunpack.c.0.s8 %v1336
      %v1338 = vlaneseq
      %v1339 = vshrl.u32 %v1338, 7
      %v1340 = vsub.s32 %v1337, %v1339
      %v1341 = vrot.slane %v1333, %v1340
      %v1343 = vunpack.c.l.s4 1983009808
      %v1344 = vunpack.c.0.s8 %v1343
      %v1345 = vlaneseq
      %v1346 = vshrl.u32 %v1345, 7
      %v1347 = vsub.s32 %v1344, %v1346
      %v1348 = vrot.slane %v1334, %v1347
      %v1349 = vcombine.low %v1341, %v1348
      %v1351 = vsel %vm390, %v1349, 0
      %v1354 = vsel %vm394, %v1328, 0
      %1356 = vmatprep.subr.bf16.mxu0 0
      %1357 = vmatpush1.bf16.msra.mxu0 %v1354
      %1358 = vmatprep.subr.bf16.mxu0 0
      %1359 = vmatpush1.bf16.msra.mxu0 0
      %1360 = vmatprep.subr.bf16.mxu0 0
      %1361 = vmatpush1.bf16.msra.mxu0 0
      %1362 = vmatprep.subr.bf16.mxu0 0
      %1363 = vmatpush1.bf16.msra.mxu0 0
      %1364 = vmatprep.subr.bf16.mxu0 0
      %1365 = vmatpush1.bf16.msra.mxu0 0
      %1366 = vmatprep.subr.bf16.mxu0 0
      %1367 = vmatpush1.bf16.msra.mxu0 0
      %1368 = vmatprep.subr.bf16.mxu0 0
      %1369 = vmatpush1.bf16.msra.mxu0 0
      %1370 = vmatprep.subr.bf16.mxu0 0
      %1371 = vmatpush1.bf16.msra.mxu0 0
      %1372 = vmatprep.subr.bf16.mxu0 0
      %1373 = vmatpush1.bf16.msra.mxu0 0
      %1374 = vmatprep.subr.bf16.mxu0 0
      %1375 = vmatpush1.bf16.msra.mxu0 0
      %1376 = vmatprep.subr.bf16.mxu0 0
      %1377 = vmatpush1.bf16.msra.mxu0 0
      %1378 = vmatprep.subr.bf16.mxu0 0
      %1379 = vmatpush1.bf16.msra.mxu0 0
      %1380 = vmatprep.subr.bf16.mxu0 0
      %1381 = vmatpush1.bf16.msra.mxu0 0
      %1382 = vmatprep.subr.bf16.mxu0 0
      %1383 = vmatpush1.bf16.msra.mxu0 0
      %1384 = vmatprep.subr.bf16.mxu0 0
      %1385 = vmatpush1.bf16.msra.mxu0 0
      %1386 = vmatprep.subr.bf16.mxu0 0
      %1387 = vmatpush1.bf16.msra.mxu0 0
      %1388 = vmatprep.mubr.bf16.mxu0 0
      %1389 = vmatmul.mubr.bf16.gmra.mrb[0].mxu0 %v1351
      %v1390 = vpop.f32.mrb[0].mxu0
      %v1391 = vadd.f32 0.0, %v1390
      %v1392 = vpop.f32.mrb[0].mxu0
      %v1393 = vpop.f32.mrb[0].mxu0
      %v1394 = vadd.f32 0.0, %v1393
      %v1395 = vpop.f32.mrb[0].mxu0
      %1396 = vdwg.mxu0
      %v1397 = vadd.f32 %v1320, %v1391
      %v1398 = vadd.f32 %v1321, %v1394
      %s1399 = scalar_lea.vmem %s334, 4
      %v1400 = vld [vmem:[%s1399] sm:$0x3]
      %v1401 = vld [vmem:[%s1399 + $0x4] sm:$0x3]
      %v1402 = vld [vmem:[%s1399 + $0x8] sm:$0x3]
      %v1403 = vld [vmem:[%s1399 + $0xc] sm:$0x3]
      %s1404 = scalar_lea.vmem %s4, 36
      %v1405 = vld [vmem:[%s1404] sm:$0xf]
      %v1410 = vcombine.low %v1400, %v1401
      %v1411 = vcombine.low %v1402, %v1403
      %v1413 = vunpack.c.l.s4 1983009808
      %v1414 = vunpack.c.0.s8 %v1413
      %v1415 = vlaneseq
      %v1416 = vshrl.u32 %v1415, 7
      %v1417 = vsub.s32 %v1414, %v1416
      %v1418 = vrot.slane %v1410, %v1417
      %v1420 = vunpack.c.l.s4 1983009808
      %v1421 = vunpack.c.0.s8 %v1420
      %v1422 = vlaneseq
      %v1423 = vshrl.u32 %v1422, 7
      %v1424 = vsub.s32 %v1421, %v1423
      %v1425 = vrot.slane %v1411, %v1424
      %v1426 = vcombine.low %v1418, %v1425
      %v1428 = vsel %vm390, %v1426, 0
      %v1431 = vsel %vm394, %v1405, 0
      %1433 = vmatprep.subr.bf16.mxu0 0
      %1434 = vmatpush1.bf16.msra.mxu0 %v1431
      %1435 = vmatprep.subr.bf16.mxu0 0
      %1436 = vmatpush1.bf16.msra.mxu0 0
      %1437 = vmatprep.subr.bf16.mxu0 0
      %1438 = vmatpush1.bf16.msra.mxu0 0
      %1439 = vmatprep.subr.bf16.mxu0 0
      %1440 = vmatpush1.bf16.msra.mxu0 0
      %1441 = vmatprep.subr.bf16.mxu0 0
      %1442 = vmatpush1.bf16.msra.mxu0 0
      %1443 = vmatprep.subr.bf16.mxu0 0
      %1444 = vmatpush1.bf16.msra.mxu0 0
      %1445 = vmatprep.subr.bf16.mxu0 0
      %1446 = vmatpush1.bf16.msra.mxu0 0
      %1447 = vmatprep.subr.bf16.mxu0 0
      %1448 = vmatpush1.bf16.msra.mxu0 0
      %1449 = vmatprep.subr.bf16.mxu0 0
      %1450 = vmatpush1.bf16.msra.mxu0 0
      %1451 = vmatprep.subr.bf16.mxu0 0
      %1452 = vmatpush1.bf16.msra.mxu0 0
      %1453 = vmatprep.subr.bf16.mxu0 0
      %1454 = vmatpush1.bf16.msra.mxu0 0
      %1455 = vmatprep.subr.bf16.mxu0 0
      %1456 = vmatpush1.bf16.msra.mxu0 0
      %1457 = vmatprep.subr.bf16.mxu0 0
      %1458 = vmatpush1.bf16.msra.mxu0 0
      %1459 = vmatprep.subr.bf16.mxu0 0
      %1460 = vmatpush1.bf16.msra.mxu0 0
      %1461 = vmatprep.subr.bf16.mxu0 0
      %1462 = vmatpush1.bf16.msra.mxu0 0
      %1463 = vmatprep.subr.bf16.mxu0 0
      %1464 = vmatpush1.bf16.msra.mxu0 0
      %1465 = vmatprep.mubr.bf16.mxu0 0
      %1466 = vmatmul.mubr.bf16.gmra.mrb[0].mxu0 %v1428
      %v1467 = vpop.f32.mrb[0].mxu0
      %v1468 = vadd.f32 0.0, %v1467
      %v1469 = vpop.f32.mrb[0].mxu0
      %v1470 = vpop.f32.mrb[0].mxu0
      %v1471 = vadd.f32 0.0, %v1470
      %v1472 = vpop.f32.mrb[0].mxu0
      %1473 = vdwg.mxu0
      %v1474 = vadd.f32 %v1397, %v1468
      %v1475 = vadd.f32 %v1398, %v1471
      %v1476 = vld [vmem:[%s1322] sm:$0x7]
      %v1477 = vld [vmem:[%s1322 + $0x4] sm:$0x7]
      %v1478 = vld [vmem:[%s1322 + $0x8] sm:$0x7]
      %v1479 = vld [vmem:[%s1322 + $0xc] sm:$0x7]
      %v1485 = vunpack.c.l.s4 1983009808
      %v1486 = vunpack.c.0.s8 %v1485
      %v1487 = vlaneseq
      %v1488 = vshrl.u32 %v1487, 7
      %v1489 = vsub.s32 %v1486, %v1488
      %v1490 = vrot.slane %v1476, %v1489
      %v1491 = vcombine.high %v1490, %v1490
      %v1493 = vunpack.c.l.s4 1983009808
      %v1494 = vunpack.c.0.s8 %v1493
      %v1495 = vlaneseq
      %v1496 = vshrl.u32 %v1495, 7
      %v1497 = vsub.s32 %v1494, %v1496
      %v1498 = vrot.slane %v1477, %v1497
      %v1499 = vcombine.high %v1498, %v1498
      %v1501 = vunpack.c.l.s4 1983009808
      %v1502 = vunpack.c.0.s8 %v1501
      %v1503 = vlaneseq
      %v1504 = vshrl.u32 %v1503, 7
      %v1505 = vsub.s32 %v1502, %v1504
      %v1506 = vrot.slane %v1478, %v1505
      %v1507 = vcombine.high %v1506, %v1506
      %v1509 = vunpack.c.l.s4 1983009808
      %v1510 = vunpack.c.0.s8 %v1509
      %v1511 = vlaneseq
      %v1512 = vshrl.u32 %v1511, 7
      %v1513 = vsub.s32 %v1510, %v1512
      %v1514 = vrot.slane %v1479, %v1513
      %v1515 = vcombine.high %v1514, %v1514
      %v1517 = vshrl.u32 %v1490, 16
      %v1519 = vrot.slane %v1517, 6
      %v1520 = vshll.u32 %v1490, 16
      %v1522 = vrot.slane %v1520, 7
      %v1523 = vor.u32 %v1519, %v1522
      %v1524 = vrot.slane %v1523, 2
      %v1526 = vshll.u32 %v1491, 16
      %v1528 = vrot.slane %v1526, 7
      %v1529 = vsel %vm553, %v1524, %v1528
      %v1531 = vshrl.u32 %v1498, 16
      %v1533 = vrot.slane %v1531, 6
      %v1534 = vshll.u32 %v1498, 16
      %v1536 = vrot.slane %v1534, 7
      %v1537 = vor.u32 %v1533, %v1536
      %v1538 = vrot.slane %v1537, 2
      %v1540 = vshll.u32 %v1499, 16
      %v1542 = vrot.slane %v1540, 7
      %v1543 = vsel %vm553, %v1538, %v1542
      %v1545 = vshrl.u32 %v1506, 16
      %v1547 = vrot.slane %v1545, 6
      %v1548 = vshll.u32 %v1506, 16
      %v1550 = vrot.slane %v1548, 7
      %v1551 = vor.u32 %v1547, %v1550
      %v1552 = vrot.slane %v1551, 2
      %v1554 = vshll.u32 %v1507, 16
      %v1556 = vrot.slane %v1554, 7
      %v1557 = vsel %vm553, %v1552, %v1556
      %v1559 = vshrl.u32 %v1514, 16
      %v1561 = vrot.slane %v1559, 6
      %v1562 = vshll.u32 %v1514, 16
      %v1564 = vrot.slane %v1562, 7
      %v1565 = vor.u32 %v1561, %v1564
      %v1566 = vrot.slane %v1565, 2
      %v1568 = vshll.u32 %v1515, 16
      %v1570 = vrot.slane %v1568, 7
      %v1571 = vsel %vm553, %v1566, %v1570
      %s1572 = scalar_lea.vmem %s4, 40
      %v1573 = vld [vmem:[%s1572] sm:$0xf]
      %v1574 = vcombine.low %v1529, %v1543
      %v1575 = vcombine.low %v1557, %v1571
      %v1577 = vunpack.c.l.s4 1983009808
      %v1578 = vunpack.c.0.s8 %v1577
      %v1579 = vlaneseq
      %v1580 = vshrl.u32 %v1579, 7
      %v1581 = vsub.s32 %v1578, %v1580
      %v1582 = vrot.slane %v1574, %v1581
      %v1584 = vunpack.c.l.s4 1983009808
      %v1585 = vunpack.c.0.s8 %v1584
      %v1586 = vlaneseq
      %v1587 = vshrl.u32 %v1586, 7
      %v1588 = vsub.s32 %v1585, %v1587
      %v1589 = vrot.slane %v1575, %v1588
      %v1590 = vcombine.low %v1582, %v1589
      %v1592 = vsel %vm390, %v1590, 0
      %v1595 = vsel %vm394, %v1573, 0
      %1597 = vmatprep.subr.bf16.mxu0 0
      %1598 = vmatpush1.bf16.msra.mxu0 %v1595
      %1599 = vmatprep.subr.bf16.mxu0 0
      %1600 = vmatpush1.bf16.msra.mxu0 0
      %1601 = vmatprep.subr.bf16.mxu0 0
      %1602 = vmatpush1.bf16.msra.mxu0 0
      %1603 = vmatprep.subr.bf16.mxu0 0
      %1604 = vmatpush1.bf16.msra.mxu0 0
      %1605 = vmatprep.subr.bf16.mxu0 0
      %1606 = vmatpush1.bf16.msra.mxu0 0
      %1607 = vmatprep.subr.bf16.mxu0 0
      %1608 = vmatpush1.bf16.msra.mxu0 0
      %1609 = vmatprep.subr.bf16.mxu0 0
      %1610 = vmatpush1.bf16.msra.mxu0 0
      %1611 = vmatprep.subr.bf16.mxu0 0
      %1612 = vmatpush1.bf16.msra.mxu0 0
      %1613 = vmatprep.subr.bf16.mxu0 0
      %1614 = vmatpush1.bf16.msra.mxu0 0
      %1615 = vmatprep.subr.bf16.mxu0 0
      %1616 = vmatpush1.bf16.msra.mxu0 0
      %1617 = vmatprep.subr.bf16.mxu0 0
      %1618 = vmatpush1.bf16.msra.mxu0 0
      %1619 = vmatprep.subr.bf16.mxu0 0
      %1620 = vmatpush1.bf16.msra.mxu0 0
      %1621 = vmatprep.subr.bf16.mxu0 0
      %1622 = vmatpush1.bf16.msra.mxu0 0
      %1623 = vmatprep.subr.bf16.mxu0 0
      %1624 = vmatpush1.bf16.msra.mxu0 0
      %1625 = vmatprep.subr.bf16.mxu0 0
      %1626 = vmatpush1.bf16.msra.mxu0 0
      %1627 = vmatprep.subr.bf16.mxu0 0
      %1628 = vmatpush1.bf16.msra.mxu0 0
      %1629 = vmatprep.mubr.bf16.mxu0 0
      %1630 = vmatmul.mubr.bf16.gmra.mrb[0].mxu0 %v1592
      %v1631 = vpop.f32.mrb[0].mxu0
      %v1632 = vadd.f32 0.0, %v1631
      %v1633 = vpop.f32.mrb[0].mxu0
      %v1634 = vpop.f32.mrb[0].mxu0
      %v1635 = vadd.f32 0.0, %v1634
      %v1636 = vpop.f32.mrb[0].mxu0
      %1637 = vdwg.mxu0
      %v1638 = vadd.f32 %v1474, %v1632
      %v1639 = vadd.f32 %v1475, %v1635
      %v1640 = vld [vmem:[%s1399] sm:$0x7]
      %v1641 = vld [vmem:[%s1399 + $0x4] sm:$0x7]
      %v1642 = vld [vmem:[%s1399 + $0x8] sm:$0x7]
      %v1643 = vld [vmem:[%s1399 + $0xc] sm:$0x7]
      %v1649 = vunpack.c.l.s4 1983009808
      %v1650 = vunpack.c.0.s8 %v1649
      %v1651 = vlaneseq
      %v1652 = vshrl.u32 %v1651, 7
      %v1653 = vsub.s32 %v1650, %v1652
      %v1654 = vrot.slane %v1640, %v1653
      %v1655 = vcombine.high %v1654, %v1654
      %v1657 = vunpack.c.l.s4 1983009808
      %v1658 = vunpack.c.0.s8 %v1657
      %v1659 = vlaneseq
      %v1660 = vshrl.u32 %v1659, 7
      %v1661 = vsub.s32 %v1658, %v1660
      %v1662 = vrot.slane %v1641, %v1661
      %v1663 = vcombine.high %v1662, %v1662
      %v1665 = vunpack.c.l.s4 1983009808
      %v1666 = vunpack.c.0.s8 %v1665
      %v1667 = vlaneseq
      %v1668 = vshrl.u32 %v1667, 7
      %v1669 = vsub.s32 %v1666, %v1668
      %v1670 = vrot.slane %v1642, %v1669
      %v1671 = vcombine.high %v1670, %v1670
      %v1673 = vunpack.c.l.s4 1983009808
      %v1674 = vunpack.c.0.s8 %v1673
      %v1675 = vlaneseq
      %v1676 = vshrl.u32 %v1675, 7
      %v1677 = vsub.s32 %v1674, %v1676
      %v1678 = vrot.slane %v1643, %v1677
      %v1679 = vcombine.high %v1678, %v1678
      %v1681 = vshrl.u32 %v1654, 16
      %v1683 = vrot.slane %v1681, 6
      %v1684 = vshll.u32 %v1654, 16
      %v1686 = vrot.slane %v1684, 7
      %v1687 = vor.u32 %v1683, %v1686
      %v1688 = vrot.slane %v1687, 2
      %v1690 = vshll.u32 %v1655, 16
      %v1692 = vrot.slane %v1690, 7
      %v1693 = vsel %vm553, %v1688, %v1692
      %v1695 = vshrl.u32 %v1662, 16
      %v1697 = vrot.slane %v1695, 6
      %v1698 = vshll.u32 %v1662, 16
      %v1700 = vrot.slane %v1698, 7
      %v1701 = vor.u32 %v1697, %v1700
      %v1702 = vrot.slane %v1701, 2
      %v1704 = vshll.u32 %v1663, 16
      %v1706 = vrot.slane %v1704, 7
      %v1707 = vsel %vm553, %v1702, %v1706
      %v1709 = vshrl.u32 %v1670, 16
      %v1711 = vrot.slane %v1709, 6
      %v1712 = vshll.u32 %v1670, 16
      %v1714 = vrot.slane %v1712, 7
      %v1715 = vor.u32 %v1711, %v1714
      %v1716 = vrot.slane %v1715, 2
      %v1718 = vshll.u32 %v1671, 16
      %v1720 = vrot.slane %v1718, 7
      %v1721 = vsel %vm553, %v1716, %v1720
      %v1723 = vshrl.u32 %v1678, 16
      %v1725 = vrot.slane %v1723, 6
      %v1726 = vshll.u32 %v1678, 16
      %v1728 = vrot.slane %v1726, 7
      %v1729 = vor.u32 %v1725, %v1728
      %v1730 = vrot.slane %v1729, 2
      %v1732 = vshll.u32 %v1679, 16
      %v1734 = vrot.slane %v1732, 7
      %v1735 = vsel %vm553, %v1730, %v1734
      %s1736 = scalar_lea.vmem %s4, 44
      %v1737 = vld [vmem:[%s1736] sm:$0xf]
      %v1738 = vcombine.low %v1693, %v1707
      %v1739 = vcombine.low %v1721, %v1735
      %v1741 = vunpack.c.l.s4 1983009808
      %v1742 = vunpack.c.0.s8 %v1741
      %v1743 = vlaneseq
      %v1744 = vshrl.u32 %v1743, 7
      %v1745 = vsub.s32 %v1742, %v1744
      %v1746 = vrot.slane %v1738, %v1745
      %v1748 = vunpack.c.l.s4 1983009808
      %v1749 = vunpack.c.0.s8 %v1748
      %v1750 = vlaneseq
      %v1751 = vshrl.u32 %v1750, 7
      %v1752 = vsub.s32 %v1749, %v1751
      %v1753 = vrot.slane %v1739, %v1752
      %v1754 = vcombine.low %v1746, %v1753
      %v1756 = vsel %vm390, %v1754, 0
      %v1759 = vsel %vm394, %v1737, 0
      %1761 = vmatprep.subr.bf16.mxu0 0
      %1762 = vmatpush1.bf16.msra.mxu0 %v1759
      %1763 = vmatprep.subr.bf16.mxu0 0
      %1764 = vmatpush1.bf16.msra.mxu0 0
      %1765 = vmatprep.subr.bf16.mxu0 0
      %1766 = vmatpush1.bf16.msra.mxu0 0
      %1767 = vmatprep.subr.bf16.mxu0 0
      %1768 = vmatpush1.bf16.msra.mxu0 0
      %1769 = vmatprep.subr.bf16.mxu0 0
      %1770 = vmatpush1.bf16.msra.mxu0 0
      %1771 = vmatprep.subr.bf16.mxu0 0
      %1772 = vmatpush1.bf16.msra.mxu0 0
      %1773 = vmatprep.subr.bf16.mxu0 0
      %1774 = vmatpush1.bf16.msra.mxu0 0
      %1775 = vmatprep.subr.bf16.mxu0 0
      %1776 = vmatpush1.bf16.msra.mxu0 0
      %1777 = vmatprep.subr.bf16.mxu0 0
      %1778 = vmatpush1.bf16.msra.mxu0 0
      %1779 = vmatprep.subr.bf16.mxu0 0
      %1780 = vmatpush1.bf16.msra.mxu0 0
      %1781 = vmatprep.subr.bf16.mxu0 0
      %1782 = vmatpush1.bf16.msra.mxu0 0
      %1783 = vmatprep.subr.bf16.mxu0 0
      %1784 = vmatpush1.bf16.msra.mxu0 0
      %1785 = vmatprep.subr.bf16.mxu0 0
      %1786 = vmatpush1.bf16.msra.mxu0 0
      %1787 = vmatprep.subr.bf16.mxu0 0
      %1788 = vmatpush1.bf16.msra.mxu0 0
      %1789 = vmatprep.subr.bf16.mxu0 0
      %1790 = vmatpush1.bf16.msra.mxu0 0
      %1791 = vmatprep.subr.bf16.mxu0 0
      %1792 = vmatpush1.bf16.msra.mxu0 0
      %1793 = vmatprep.mubr.bf16.mxu0 0
      %1794 = vmatmul.mubr.bf16.gmra.mrb[0].mxu0 %v1756
      %v1795 = vpop.f32.mrb[0].mxu0
      %v1796 = vadd.f32 0.0, %v1795
      %v1797 = vpop.f32.mrb[0].mxu0
      %v1798 = vpop.f32.mrb[0].mxu0
      %v1799 = vadd.f32 0.0, %v1798
      %v1800 = vpop.f32.mrb[0].mxu0
      %1801 = vdwg.mxu0
      %v1802 = vadd.f32 %v1638, %v1796
      %v1803 = vadd.f32 %v1639, %v1799
      %s1804 = scalar_lea.vmem %s339, 4
      %v1805 = vld [vmem:[%s1804] sm:$0x3]
      %v1806 = vld [vmem:[%s1804 + $0x4] sm:$0x3]
      %v1807 = vld [vmem:[%s1804 + $0x8] sm:$0x3]
      %v1808 = vld [vmem:[%s1804 + $0xc] sm:$0x3]
      %s1809 = scalar_lea.vmem %s4, 48
      %v1810 = vld [vmem:[%s1809] sm:$0xf]
      %v1815 = vcombine.low %v1805, %v1806
      %v1816 = vcombine.low %v1807, %v1808
      %v1818 = vunpack.c.l.s4 1983009808
      %v1819 = vunpack.c.0.s8 %v1818
      %v1820 = vlaneseq
      %v1821 = vshrl.u32 %v1820, 7
      %v1822 = vsub.s32 %v1819, %v1821
      %v1823 = vrot.slane %v1815, %v1822
      %v1825 = vunpack.c.l.s4 1983009808
      %v1826 = vunpack.c.0.s8 %v1825
      %v1827 = vlaneseq
      %v1828 = vshrl.u32 %v1827, 7
      %v1829 = vsub.s32 %v1826, %v1828
      %v1830 = vrot.slane %v1816, %v1829
      %v1831 = vcombine.low %v1823, %v1830
      %v1833 = vsel %vm390, %v1831, 0
      %v1836 = vsel %vm394, %v1810, 0
      %1838 = vmatprep.subr.bf16.mxu0 0
      %1839 = vmatpush1.bf16.msra.mxu0 %v1836
      %1840 = vmatprep.subr.bf16.mxu0 0
      %1841 = vmatpush1.bf16.msra.mxu0 0
      %1842 = vmatprep.subr.bf16.mxu0 0
      %1843 = vmatpush1.bf16.msra.mxu0 0
      %1844 = vmatprep.subr.bf16.mxu0 0
      %1845 = vmatpush1.bf16.msra.mxu0 0
      %1846 = vmatprep.subr.bf16.mxu0 0
      %1847 = vmatpush1.bf16.msra.mxu0 0
      %1848 = vmatprep.subr.bf16.mxu0 0
      %1849 = vmatpush1.bf16.msra.mxu0 0
      %1850 = vmatprep.subr.bf16.mxu0 0
      %1851 = vmatpush1.bf16.msra.mxu0 0
      %1852 = vmatprep.subr.bf16.mxu0 0
      %1853 = vmatpush1.bf16.msra.mxu0 0
      %1854 = vmatprep.subr.bf16.mxu0 0
      %1855 = vmatpush1.bf16.msra.mxu0 0
      %1856 = vmatprep.subr.bf16.mxu0 0
      %1857 = vmatpush1.bf16.msra.mxu0 0
      %1858 = vmatprep.subr.bf16.mxu0 0
      %1859 = vmatpush1.bf16.msra.mxu0 0
      %1860 = vmatprep.subr.bf16.mxu0 0
      %1861 = vmatpush1.bf16.msra.mxu0 0
      %1862 = vmatprep.subr.bf16.mxu0 0
      %1863 = vmatpush1.bf16.msra.mxu0 0
      %1864 = vmatprep.subr.bf16.mxu0 0
      %1865 = vmatpush1.bf16.msra.mxu0 0
      %1866 = vmatprep.subr.bf16.mxu0 0
      %1867 = vmatpush1.bf16.msra.mxu0 0
      %1868 = vmatprep.subr.bf16.mxu0 0
      %1869 = vmatpush1.bf16.msra.mxu0 0
      %1870 = vmatprep.mubr.bf16.mxu0 0
      %1871 = vmatmul.mubr.bf16.gmra.mrb[0].mxu0 %v1833
      %v1872 = vpop.f32.mrb[0].mxu0
      %v1873 = vadd.f32 0.0, %v1872
      %v1874 = vpop.f32.mrb[0].mxu0
      %v1875 = vpop.f32.mrb[0].mxu0
      %v1876 = vadd.f32 0.0, %v1875
      %v1877 = vpop.f32.mrb[0].mxu0
      %1878 = vdwg.mxu0
      %v1879 = vadd.f32 %v1802, %v1873
      %v1880 = vadd.f32 %v1803, %v1876
      %s1881 = scalar_lea.vmem %s344, 4
      %v1882 = vld [vmem:[%s1881] sm:$0x3]
      %v1883 = vld [vmem:[%s1881 + $0x4] sm:$0x3]
      %v1884 = vld [vmem:[%s1881 + $0x8] sm:$0x3]
      %v1885 = vld [vmem:[%s1881 + $0xc] sm:$0x3]
      %s1886 = scalar_lea.vmem %s4, 52
      %v1887 = vld [vmem:[%s1886] sm:$0xf]
      %v1892 = vcombine.low %v1882, %v1883
      %v1893 = vcombine.low %v1884, %v1885
      %v1895 = vunpack.c.l.s4 1983009808
      %v1896 = vunpack.c.0.s8 %v1895
      %v1897 = vlaneseq
      %v1898 = vshrl.u32 %v1897, 7
      %v1899 = vsub.s32 %v1896, %v1898
      %v1900 = vrot.slane %v1892, %v1899
      %v1902 = vunpack.c.l.s4 1983009808
      %v1903 = vunpack.c.0.s8 %v1902
      %v1904 = vlaneseq
      %v1905 = vshrl.u32 %v1904, 7
      %v1906 = vsub.s32 %v1903, %v1905
      %v1907 = vrot.slane %v1893, %v1906
      %v1908 = vcombine.low %v1900, %v1907
      %v1910 = vsel %vm390, %v1908, 0
      %v1913 = vsel %vm394, %v1887, 0
      %1915 = vmatprep.subr.bf16.mxu0 0
      %1916 = vmatpush1.bf16.msra.mxu0 %v1913
      %1917 = vmatprep.subr.bf16.mxu0 0
      %1918 = vmatpush1.bf16.msra.mxu0 0
      %1919 = vmatprep.subr.bf16.mxu0 0
      %1920 = vmatpush1.bf16.msra.mxu0 0
      %1921 = vmatprep.subr.bf16.mxu0 0
      %1922 = vmatpush1.bf16.msra.mxu0 0
      %1923 = vmatprep.subr.bf16.mxu0 0
      %1924 = vmatpush1.bf16.msra.mxu0 0
      %1925 = vmatprep.subr.bf16.mxu0 0
      %1926 = vmatpush1.bf16.msra.mxu0 0
      %1927 = vmatprep.subr.bf16.mxu0 0
      %1928 = vmatpush1.bf16.msra.mxu0 0
      %1929 = vmatprep.subr.bf16.mxu0 0
      %1930 = vmatpush1.bf16.msra.mxu0 0
      %1931 = vmatprep.subr.bf16.mxu0 0
      %1932 = vmatpush1.bf16.msra.mxu0 0
      %1933 = vmatprep.subr.bf16.mxu0 0
      %1934 = vmatpush1.bf16.msra.mxu0 0
      %1935 = vmatprep.subr.bf16.mxu0 0
      %1936 = vmatpush1.bf16.msra.mxu0 0
      %1937 = vmatprep.subr.bf16.mxu0 0
      %1938 = vmatpush1.bf16.msra.mxu0 0
      %1939 = vmatprep.subr.bf16.mxu0 0
      %1940 = vmatpush1.bf16.msra.mxu0 0
      %1941 = vmatprep.subr.bf16.mxu0 0
      %1942 = vmatpush1.bf16.msra.mxu0 0
      %1943 = vmatprep.subr.bf16.mxu0 0
      %1944 = vmatpush1.bf16.msra.mxu0 0
      %1945 = vmatprep.subr.bf16.mxu0 0
      %1946 = vmatpush1.bf16.msra.mxu0 0
      %1947 = vmatprep.mubr.bf16.mxu0 0
      %1948 = vmatmul.mubr.bf16.gmra.mrb[0].mxu0 %v1910
      %v1949 = vpop.f32.mrb[0].mxu0
      %v1950 = vadd.f32 0.0, %v1949
      %v1951 = vpop.f32.mrb[0].mxu0
      %v1952 = vpop.f32.mrb[0].mxu0
      %v1953 = vadd.f32 0.0, %v1952
      %v1954 = vpop.f32.mrb[0].mxu0
      %1955 = vdwg.mxu0
      %v1956 = vadd.f32 %v1879, %v1950
      %v1957 = vadd.f32 %v1880, %v1953
      %v1958 = vld [vmem:[%s1804] sm:$0x7]
      %v1959 = vld [vmem:[%s1804 + $0x4] sm:$0x7]
      %v1960 = vld [vmem:[%s1804 + $0x8] sm:$0x7]
      %v1961 = vld [vmem:[%s1804 + $0xc] sm:$0x7]
      %v1967 = vunpack.c.l.s4 1983009808
      %v1968 = vunpack.c.0.s8 %v1967
      %v1969 = vlaneseq
      %v1970 = vshrl.u32 %v1969, 7
      %v1971 = vsub.s32 %v1968, %v1970
      %v1972 = vrot.slane %v1958, %v1971
      %v1973 = vcombine.high %v1972, %v1972
      %v1975 = vunpack.c.l.s4 1983009808
      %v1976 = vunpack.c.0.s8 %v1975
      %v1977 = vlaneseq
      %v1978 = vshrl.u32 %v1977, 7
      %v1979 = vsub.s32 %v1976, %v1978
      %v1980 = vrot.slane %v1959, %v1979
      %v1981 = vcombine.high %v1980, %v1980
      %v1983 = vunpack.c.l.s4 1983009808
      %v1984 = vunpack.c.0.s8 %v1983
      %v1985 = vlaneseq
      %v1986 = vshrl.u32 %v1985, 7
      %v1987 = vsub.s32 %v1984, %v1986
      %v1988 = vrot.slane %v1960, %v1987
      %v1989 = vcombine.high %v1988, %v1988
      %v1991 = vunpack.c.l.s4 1983009808
      %v1992 = vunpack.c.0.s8 %v1991
      %v1993 = vlaneseq
      %v1994 = vshrl.u32 %v1993, 7
      %v1995 = vsub.s32 %v1992, %v1994
      %v1996 = vrot.slane %v1961, %v1995
      %v1997 = vcombine.high %v1996, %v1996
      %v1999 = vshrl.u32 %v1972, 16
      %v2001 = vrot.slane %v1999, 6
      %v2002 = vshll.u32 %v1972, 16
      %v2004 = vrot.slane %v2002, 7
      %v2005 = vor.u32 %v2001, %v2004
      %v2006 = vrot.slane %v2005, 2
      %v2008 = vshll.u32 %v1973, 16
      %v2010 = vrot.slane %v2008, 7
      %v2011 = vsel %vm553, %v2006, %v2010
      %v2013 = vshrl.u32 %v1980, 16
      %v2015 = vrot.slane %v2013, 6
      %v2016 = vshll.u32 %v1980, 16
      %v2018 = vrot.slane %v2016, 7
      %v2019 = vor.u32 %v2015, %v2018
      %v2020 = vrot.slane %v2019, 2
      %v2022 = vshll.u32 %v1981, 16
      %v2024 = vrot.slane %v2022, 7
      %v2025 = vsel %vm553, %v2020, %v2024
      %v2027 = vshrl.u32 %v1988, 16
      %v2029 = vrot.slane %v2027, 6
      %v2030 = vshll.u32 %v1988, 16
      %v2032 = vrot.slane %v2030, 7
      %v2033 = vor.u32 %v2029, %v2032
      %v2034 = vrot.slane %v2033, 2
      %v2036 = vshll.u32 %v1989, 16
      %v2038 = vrot.slane %v2036, 7
      %v2039 = vsel %vm553, %v2034, %v2038
      %v2041 = vshrl.u32 %v1996, 16
      %v2043 = vrot.slane %v2041, 6
      %v2044 = vshll.u32 %v1996, 16
      %v2046 = vrot.slane %v2044, 7
      %v2047 = vor.u32 %v2043, %v2046
      %v2048 = vrot.slane %v2047, 2
      %v2050 = vshll.u32 %v1997, 16
      %v2052 = vrot.slane %v2050, 7
      %v2053 = vsel %vm553, %v2048, %v2052
      %s2054 = scalar_lea.vmem %s4, 56
      %v2055 = vld [vmem:[%s2054] sm:$0xf]
      %v2056 = vcombine.low %v2011, %v2025
      %v2057 = vcombine.low %v2039, %v2053
      %v2059 = vunpack.c.l.s4 1983009808
      %v2060 = vunpack.c.0.s8 %v2059
      %v2061 = vlaneseq
      %v2062 = vshrl.u32 %v2061, 7
      %v2063 = vsub.s32 %v2060, %v2062
      %v2064 = vrot.slane %v2056, %v2063
      %v2066 = vunpack.c.l.s4 1983009808
      %v2067 = vunpack.c.0.s8 %v2066
      %v2068 = vlaneseq
      %v2069 = vshrl.u32 %v2068, 7
      %v2070 = vsub.s32 %v2067, %v2069
      %v2071 = vrot.slane %v2057, %v2070
      %v2072 = vcombine.low %v2064, %v2071
      %v2074 = vsel %vm390, %v2072, 0
      %v2077 = vsel %vm394, %v2055, 0
      %2079 = vmatprep.subr.bf16.mxu0 0
      %2080 = vmatpush1.bf16.msra.mxu0 %v2077
      %2081 = vmatprep.subr.bf16.mxu0 0
      %2082 = vmatpush1.bf16.msra.mxu0 0
      %2083 = vmatprep.subr.bf16.mxu0 0
      %2084 = vmatpush1.bf16.msra.mxu0 0
      %2085 = vmatprep.subr.bf16.mxu0 0
      %2086 = vmatpush1.bf16.msra.mxu0 0
      %2087 = vmatprep.subr.bf16.mxu0 0
      %2088 = vmatpush1.bf16.msra.mxu0 0
      %2089 = vmatprep.subr.bf16.mxu0 0
      %2090 = vmatpush1.bf16.msra.mxu0 0
      %2091 = vmatprep.subr.bf16.mxu0 0
      %2092 = vmatpush1.bf16.msra.mxu0 0
      %2093 = vmatprep.subr.bf16.mxu0 0
      %2094 = vmatpush1.bf16.msra.mxu0 0
      %2095 = vmatprep.subr.bf16.mxu0 0
      %2096 = vmatpush1.bf16.msra.mxu0 0
      %2097 = vmatprep.subr.bf16.mxu0 0
      %2098 = vmatpush1.bf16.msra.mxu0 0
      %2099 = vmatprep.subr.bf16.mxu0 0
      %2100 = vmatpush1.bf16.msra.mxu0 0
      %2101 = vmatprep.subr.bf16.mxu0 0
      %2102 = vmatpush1.bf16.msra.mxu0 0
      %2103 = vmatprep.subr.bf16.mxu0 0
      %2104 = vmatpush1.bf16.msra.mxu0 0
      %2105 = vmatprep.subr.bf16.mxu0 0
      %2106 = vmatpush1.bf16.msra.mxu0 0
      %2107 = vmatprep.subr.bf16.mxu0 0
      %2108 = vmatpush1.bf16.msra.mxu0 0
      %2109 = vmatprep.subr.bf16.mxu0 0
      %2110 = vmatpush1.bf16.msra.mxu0 0
      %2111 = vmatprep.mubr.bf16.mxu0 0
      %2112 = vmatmul.mubr.bf16.gmra.mrb[0].mxu0 %v2074
      %v2113 = vpop.f32.mrb[0].mxu0
      %v2114 = vadd.f32 0.0, %v2113
      %v2115 = vpop.f32.mrb[0].mxu0
      %v2116 = vpop.f32.mrb[0].mxu0
      %v2117 = vadd.f32 0.0, %v2116
      %v2118 = vpop.f32.mrb[0].mxu0
      %2119 = vdwg.mxu0
      %v2120 = vadd.f32 %v1956, %v2114
      %v2121 = vadd.f32 %v1957, %v2117
      %v2122 = vld [vmem:[%s1881] sm:$0x7]
      %v2123 = vld [vmem:[%s1881 + $0x4] sm:$0x7]
      %v2124 = vld [vmem:[%s1881 + $0x8] sm:$0x7]
      %v2125 = vld [vmem:[%s1881 + $0xc] sm:$0x7]
      %v2131 = vunpack.c.l.s4 1983009808
      %v2132 = vunpack.c.0.s8 %v2131
      %v2133 = vlaneseq
      %v2134 = vshrl.u32 %v2133, 7
      %v2135 = vsub.s32 %v2132, %v2134
      %v2136 = vrot.slane %v2122, %v2135
      %v2137 = vcombine.high %v2136, %v2136
      %v2139 = vunpack.c.l.s4 1983009808
      %v2140 = vunpack.c.0.s8 %v2139
      %v2141 = vlaneseq
      %v2142 = vshrl.u32 %v2141, 7
      %v2143 = vsub.s32 %v2140, %v2142
      %v2144 = vrot.slane %v2123, %v2143
      %v2145 = vcombine.high %v2144, %v2144
      %v2147 = vunpack.c.l.s4 1983009808
      %v2148 = vunpack.c.0.s8 %v2147
      %v2149 = vlaneseq
      %v2150 = vshrl.u32 %v2149, 7
      %v2151 = vsub.s32 %v2148, %v2150
      %v2152 = vrot.slane %v2124, %v2151
      %v2153 = vcombine.high %v2152, %v2152
      %v2155 = vunpack.c.l.s4 1983009808
      %v2156 = vunpack.c.0.s8 %v2155
      %v2157 = vlaneseq
      %v2158 = vshrl.u32 %v2157, 7
      %v2159 = vsub.s32 %v2156, %v2158
      %v2160 = vrot.slane %v2125, %v2159
      %v2161 = vcombine.high %v2160, %v2160
      %v2163 = vshrl.u32 %v2136, 16
      %v2165 = vrot.slane %v2163, 6
      %v2166 = vshll.u32 %v2136, 16
      %v2168 = vrot.slane %v2166, 7
      %v2169 = vor.u32 %v2165, %v2168
      %v2170 = vrot.slane %v2169, 2
      %v2172 = vshll.u32 %v2137, 16
      %v2174 = vrot.slane %v2172, 7
      %v2175 = vsel %vm553, %v2170, %v2174
      %v2177 = vshrl.u32 %v2144, 16
      %v2179 = vrot.slane %v2177, 6
      %v2180 = vshll.u32 %v2144, 16
      %v2182 = vrot.slane %v2180, 7
      %v2183 = vor.u32 %v2179, %v2182
      %v2184 = vrot.slane %v2183, 2
      %v2186 = vshll.u32 %v2145, 16
      %v2188 = vrot.slane %v2186, 7
      %v2189 = vsel %vm553, %v2184, %v2188
      %v2191 = vshrl.u32 %v2152, 16
      %v2193 = vrot.slane %v2191, 6
      %v2194 = vshll.u32 %v2152, 16
      %v2196 = vrot.slane %v2194, 7
      %v2197 = vor.u32 %v2193, %v2196
      %v2198 = vrot.slane %v2197, 2
      %v2200 = vshll.u32 %v2153, 16
      %v2202 = vrot.slane %v2200, 7
      %v2203 = vsel %vm553, %v2198, %v2202
      %v2205 = vshrl.u32 %v2160, 16
      %v2207 = vrot.slane %v2205, 6
      %v2208 = vshll.u32 %v2160, 16
      %v2210 = vrot.slane %v2208, 7
      %v2211 = vor.u32 %v2207, %v2210
      %v2212 = vrot.slane %v2211, 2
      %v2214 = vshll.u32 %v2161, 16
      %v2216 = vrot.slane %v2214, 7
      %v2217 = vsel %vm553, %v2212, %v2216
      %s2218 = scalar_lea.vmem %s4, 60
      %v2219 = vld [vmem:[%s2218] sm:$0xf]
      %v2220 = vcombine.low %v2175, %v2189
      %v2221 = vcombine.low %v2203, %v2217
      %v2223 = vunpack.c.l.s4 1983009808
      %v2224 = vunpack.c.0.s8 %v2223
      %v2225 = vlaneseq
      %v2226 = vshrl.u32 %v2225, 7
      %v2227 = vsub.s32 %v2224, %v2226
      %v2228 = vrot.slane %v2220, %v2227
      %v2230 = vunpack.c.l.s4 1983009808
      %v2231 = vunpack.c.0.s8 %v2230
      %v2232 = vlaneseq
      %v2233 = vshrl.u32 %v2232, 7
      %v2234 = vsub.s32 %v2231, %v2233
      %v2235 = vrot.slane %v2221, %v2234
      %v2236 = vcombine.low %v2228, %v2235
      %v2238 = vsel %vm390, %v2236, 0
      %v2241 = vsel %vm394, %v2219, 0
      %2243 = vmatprep.subr.bf16.mxu0 0
      %2244 = vmatpush1.bf16.msra.mxu0 %v2241
      %2245 = vmatprep.subr.bf16.mxu0 0
      %2246 = vmatpush1.bf16.msra.mxu0 0
      %2247 = vmatprep.subr.bf16.mxu0 0
      %2248 = vmatpush1.bf16.msra.mxu0 0
      %2249 = vmatprep.subr.bf16.mxu0 0
      %2250 = vmatpush1.bf16.msra.mxu0 0
      %2251 = vmatprep.subr.bf16.mxu0 0
      %2252 = vmatpush1.bf16.msra.mxu0 0
      %2253 = vmatprep.subr.bf16.mxu0 0
      %2254 = vmatpush1.bf16.msra.mxu0 0
      %2255 = vmatprep.subr.bf16.mxu0 0
      %2256 = vmatpush1.bf16.msra.mxu0 0
      %2257 = vmatprep.subr.bf16.mxu0 0
      %2258 = vmatpush1.bf16.msra.mxu0 0
      %2259 = vmatprep.subr.bf16.mxu0 0
      %2260 = vmatpush1.bf16.msra.mxu0 0
      %2261 = vmatprep.subr.bf16.mxu0 0
      %2262 = vmatpush1.bf16.msra.mxu0 0
      %2263 = vmatprep.subr.bf16.mxu0 0
      %2264 = vmatpush1.bf16.msra.mxu0 0
      %2265 = vmatprep.subr.bf16.mxu0 0
      %2266 = vmatpush1.bf16.msra.mxu0 0
      %2267 = vmatprep.subr.bf16.mxu0 0
      %2268 = vmatpush1.bf16.msra.mxu0 0
      %2269 = vmatprep.subr.bf16.mxu0 0
      %2270 = vmatpush1.bf16.msra.mxu0 0
      %2271 = vmatprep.subr.bf16.mxu0 0
      %2272 = vmatpush1.bf16.msra.mxu0 0
      %2273 = vmatprep.subr.bf16.mxu0 0
      %2274 = vmatpush1.bf16.msra.mxu0 0
      %2275 = vmatprep.mubr.bf16.mxu0 0
      %2276 = vmatmul.mubr.bf16.gmra.mrb[0].mxu0 %v2238
      %v2277 = vpop.f32.mrb[0].mxu0
      %v2278 = vadd.f32 0.0, %v2277
      %v2279 = vpop.f32.mrb[0].mxu0
      %v2280 = vpop.f32.mrb[0].mxu0
      %v2281 = vadd.f32 0.0, %v2280
      %v2282 = vpop.f32.mrb[0].mxu0
      %2283 = vdwg.mxu0
      %v2284 = vadd.f32 %v2120, %v2278
      %v2285 = vadd.f32 %v2121, %v2281
      %v2286 = vpack.c.bf16 %v2285, %v2284
      %v2288 = vunpack.c.l.b16 %v2286
      %v2289 = vunpack.c.h.b16 %v2286
      %v2290 = vpack.c.b16 %v2288, %v2288
      %v2291 = vpack.c.b16 %v2289, %v2289
      %2294 = vst [vmem:[%s349] sm:$0xf] %v2290
      %2295 = vst [vmem:[%s349 + $0x4] sm:$0xf] %v2291
      %v2296 = vunpack.c.l.bf16 %v2286
      %v2297 = vunpack.c.h.bf16 %v2286
      %v2298 = vadd.f32 %v2296, %v2297
      %v2299 = vrot.slane %v2298, 4
      %v2300 = vadd.f32 %v2298, %v2299
      %v2301 = vrot.slane %v2300, 2
      %v2302 = vadd.f32 %v2300, %v2301
      %v2303 = vrot.slane %v2302, 1
      %v2304 = vadd.f32 %v2302, %v2303
      %2305 = vst [vmem:[%s353] sm:$0x1] %v2304
      %v2306 = vmul.f32 %v2296, %v2296
      %v2307 = vmul.f32 %v2297, %v2297
      %v2308 = vadd.f32 %v2306, %v2307
      %v2309 = vrot.slane %v2308, 4
      %v2310 = vadd.f32 %v2308, %v2309
      %v2311 = vrot.slane %v2310, 2
      %v2312 = vadd.f32 %v2310, %v2311
      %v2313 = vrot.slane %v2312, 1
      %v2314 = vadd.f32 %v2312, %v2313
      %2315 = vst [vmem:[%s356] sm:$0x1] %v2314
      %s2316 = smul.u32 2, %s19
      %p2317 = scmp.lt.s32.totalorder %s2316, 3
      %s2318 = scalar_select %p2317, %s2316, 3
      %s2319 = smul.addr %s2318, 4
      %s2320 = scalar_lea.vmem %s5, %s2319
      %p2321 = scmp.lt.s32.totalorder %s19, 1
      %s2322 = scalar_select %p2321, %s19, 1
      %s2323 = scalar_lea.vmem %s6, %s2322
      %p2324 = scmp.lt.s32.totalorder %s19, 1
      %s2325 = scalar_select %p2324, %s19, 1
      %s2326 = scalar_lea.vmem %s7, %s2325
      // Predicated region
      $region41: #{discriminator_forward.4} parent=39 // pred_check
        %p2327 = pneg %p162
      $region42: #{discriminator_forward.4} parent=39 // pred_check_branch
        %2329 = sbr.rel (%p2327) target = $region44
      $region43: #{discriminator_forward.4} parent=39 // pred_region
        %s2330 = smul.u32 2, %s19
      $region44: #{discriminator_forward.4} parent=39 // pred_fallthru
        _
      // Predicated region
      $region45: #{discriminator_forward.4} parent=39 // pred_check
        %p2331 = pneg %p188
      $region46: #{discriminator_forward.4} parent=39 // pred_check_branch
        %2333 = sbr.rel (%p2331) target = $region48
      $region47: #{discriminator_forward.4} parent=39 // pred_region
        _
      $region48: #{discriminator_forward.4} parent=39 // pred_fallthru
        _
      // Predicated region
      $region49: #{discriminator_forward.4} parent=39 // pred_check
        %p2334 = pneg %p214
      $region50: #{discriminator_forward.4} parent=39 // pred_check_branch
        %2336 = sbr.rel (%p2334) target = $region52
      $region51: #{discriminator_forward.4} parent=39 // pred_region
        _
      $region52: #{discriminator_forward.4} parent=39 // pred_fallthru
        _
    $region40: #{discriminator_forward.4} parent=5 // pred_fallthru
      _
    %p2337 = scmp.le.s32.totalorder 2, %s14
    // Predicated region
    $region53: #{discriminator_forward.4} parent=5 // pred_check
      %p2338 = pneg %p2337
    $region54: #{discriminator_forward.4} parent=5 // pred_check_branch
      %2340 = sbr.rel (%p2338) target = $region56
    $region55: #{discriminator_forward.4} parent=5 // pred_region
      %s2341 = ssub.s32 %s14, 2
      // Predicated region
      $region57: #{discriminator_forward.4} parent=55 // pred_check
        %p2342 = pneg %p168
      $region58: #{discriminator_forward.4} parent=55 // pred_check_branch
        %2344 = sbr.rel (%p2342) target = $region60
      $region59: #{discriminator_forward.4} parent=55 // pred_region
        %s2345 = smul.u32 2, %s20
        %p2346 = scmp.lt.s32.totalorder %s2345, 3
        %s2347 = scalar_select %p2346, %s2345, 3
        %s2348 = smul.addr %s2347, 4
        %s2349 = scalar_lea.vmem %s5, %s2348
      $region60: #{discriminator_forward.4} parent=55 // pred_fallthru
        _
      // Predicated region
      $region61: #{discriminator_forward.4} parent=55 // pred_check
        %p2350 = pneg %p194
      $region62: #{discriminator_forward.4} parent=55 // pred_check_branch
        %2352 = sbr.rel (%p2350) target = $region64
      $region63: #{discriminator_forward.4} parent=55 // pred_region
        %p2353 = scmp.lt.s32.totalorder %s20, 1
        %s2354 = scalar_select %p2353, %s20, 1
        %s2355 = scalar_lea.vmem %s6, %s2354
      $region64: #{discriminator_forward.4} parent=55 // pred_fallthru
        _
      // Predicated region
      $region65: #{discriminator_forward.4} parent=55 // pred_check
        %p2356 = pneg %p220
      $region66: #{discriminator_forward.4} parent=55 // pred_check_branch
        %2358 = sbr.rel (%p2356) target = $region68
      $region67: #{discriminator_forward.4} parent=55 // pred_region
        %p2359 = scmp.lt.s32.totalorder %s20, 1
        %s2360 = scalar_select %p2359, %s20, 1
        %s2361 = scalar_lea.vmem %s7, %s2360
      $region68: #{discriminator_forward.4} parent=55 // pred_fallthru
        _
    $region56: #{discriminator_forward.4} parent=5 // pred_fallthru
      _
  $region6: #{discriminator_forward.4} parent=0 // loop_footer
    %s18 = sadd.s32 1, %s14
  $region7: #{discriminator_forward.4} parent=0 // loop_footer_branch
    %13 = sbr.rel target = $region3
  $region8: #{discriminator_forward.4} parent=0 // loop_exit
    _

// kernel: discriminator_forward.3
$region0: #{discriminator_forward.3}
  #allocation0 [shape = 'u32[]', space=smem, size = 0x4, offset = 0x4, fixed_abs, tag = 'smem constant byte address 0x4 - core index']
  #allocation1 [shape = 'u32[144,128]{1,0:T(1,128)}', space=vmem, size = 0x12000, scoped, tag = 'internal scratch']
  %s0 = inlined_call_operand.vmem [shape: bf16[2,9,9,3], index: 0, kind: input, shape index: {}]
  %s1 = inlined_call_operand.vmem [shape: bf16[2,9,9,3], index: 1, kind: input, shape index: {}]
  %s2 = inlined_call_operand.vmem [shape: bf16[2,9,9,3], index: 2, kind: input, shape index: {}]
  %s3 = inlined_call_operand.vmem [shape: bf16[2,9,9,3], index: 3, kind: input, shape index: {}]
  %s4 = inlined_call_operand.vmem [shape: bf16[16,3,128], index: 4, kind: input, shape index: {}]
  %s5 = inlined_call_operand.vmem [shape: bf16[128,128], index: 5, kind: output, shape index: {}]
  %s6 = sld [smem:[#allocation0]]
  $region53: #{discriminator_forward.3} parent=0
    _
  %s8 = ssub.s32 1, %s6
  %s9 = scalar_select 0, %s8, %s6
  loop: start=0, step=1, limit=4
  $region2: #{discriminator_forward.3} parent=0 // loop_pre_header
    _
  $region3: #{discriminator_forward.3} parent=0 // loop_header
    %s11 = sphi 0, %s15
    %p12 = scmp.ge.s32.totalorder %s11, 4
    %s21 = sphi 0, %s23
    %s24 = sphi 0, %s21
    %s25 = sphi 0, %s24
    %s41 = sphi 0, %s25
    %s47 = sphi 0, %s49
    %s50 = sphi 0, %s47
    %s51 = sphi 0, %s50
    %s67 = sphi 0, %s51
    %s73 = sphi 0, %s75
    %s76 = sphi 0, %s73
    %s77 = sphi 0, %s76
    %s93 = sphi 0, %s77
    %s99 = sphi 0, %s101
    %s102 = sphi 0, %s99
    %s103 = sphi 0, %s102
    %s119 = sphi 0, %s103
    %s123 = sphi 0, %s123
    %s125 = sphi 0, %s123
    %s126 = sphi 0, %s125
    %s140 = sphi 0, %s126
    %s146 = sphi 0, %s148
    %s149 = sphi 0, %s146
    %s150 = sphi 0, %s149
    %s166 = sphi 0, %s150
  $region4: #{discriminator_forward.3} parent=0 // loop_header_branch
    %14 = sbr.rel (%p12) target = $region8
  $region5: #{discriminator_forward.3} parent=0 // loop_body
    %s16 = ssub.s32 %s11, 1
    %s17 = ssub.s32 %s11, 2
    %s18 = sadd.s32 %s11, 1
    %s19 = ssub.s32 %s11, %s18
    %p20 = scmp.eq.s32.totalorder %s19, 0
    %s22 = sadd.s32 %s21, 1
    %s23 = scalar_select %p20, %s21, %s22
    %p26 = pneg %p20
    %p27 = scmp.eq.s32.totalorder %s11, 1
    %p28 = por %p26, %p27
    %p29 = scmp.ne.s32.totalorder %s21, %s24
    %p30 = scmp.eq.s32.totalorder %s11, 0
    %p31 = por %p29, %p30
    %p32 = scmp.ne.s32.totalorder %s21, %s24
    %p33 = scmp.eq.s32.totalorder %s16, 1
    %p34 = por %p32, %p33
    %p35 = scmp.ne.s32.totalorder %s24, %s25
    %p36 = scmp.eq.s32.totalorder %s16, 0
    %p37 = por %p35, %p36
    %p38 = scmp.ne.s32.totalorder %s24, %s25
    %p39 = scmp.eq.s32.totalorder %s17, 1
    %p40 = por %p38, %p39
    %p42 = scmp.ne.s32.totalorder %s25, %s41
    %p43 = scmp.eq.s32.totalorder %s17, 0
    %p44 = por %p42, %p43
    %s45 = ssub.s32 %s11, %s18
    %p46 = scmp.eq.s32.totalorder %s45, 0
    %s48 = sadd.s32 %s47, 1
    %s49 = scalar_select %p46, %s47, %s48
    %p52 = pneg %p46
    %p53 = scmp.eq.s32.totalorder %s11, 1
    %p54 = por %p52, %p53
    %p55 = scmp.ne.s32.totalorder %s47, %s50
    %p56 = scmp.eq.s32.totalorder %s11, 0
    %p57 = por %p55, %p56
    %p58 = scmp.ne.s32.totalorder %s47, %s50
    %p59 = scmp.eq.s32.totalorder %s16, 1
    %p60 = por %p58, %p59
    %p61 = scmp.ne.s32.totalorder %s50, %s51
    %p62 = scmp.eq.s32.totalorder %s16, 0
    %p63 = por %p61, %p62
    %p64 = scmp.ne.s32.totalorder %s50, %s51
    %p65 = scmp.eq.s32.totalorder %s17, 1
    %p66 = por %p64, %p65
    %p68 = scmp.ne.s32.totalorder %s51, %s67
    %p69 = scmp.eq.s32.totalorder %s17, 0
    %p70 = por %p68, %p69
    %s71 = ssub.s32 %s11, %s18
    %p72 = scmp.eq.s32.totalorder %s71, 0
    %s74 = sadd.s32 %s73, 1
    %s75 = scalar_select %p72, %s73, %s74
    %p78 = pneg %p72
    %p79 = scmp.eq.s32.totalorder %s11, 1
    %p80 = por %p78, %p79
    %p81 = scmp.ne.s32.totalorder %s73, %s76
    %p82 = scmp.eq.s32.totalorder %s11, 0
    %p83 = por %p81, %p82
    %p84 = scmp.ne.s32.totalorder %s73, %s76
    %p85 = scmp.eq.s32.totalorder %s16, 1
    %p86 = por %p84, %p85
    %p87 = scmp.ne.s32.totalorder %s76, %s77
    %p88 = scmp.eq.s32.totalorder %s16, 0
    %p89 = por %p87, %p88
    %p90 = scmp.ne.s32.totalorder %s76, %s77
    %p91 = scmp.eq.s32.totalorder %s17, 1
    %p92 = por %p90, %p91
    %p94 = scmp.ne.s32.totalorder %s77, %s93
    %p95 = scmp.eq.s32.totalorder %s17, 0
    %p96 = por %p94, %p95
    %s97 = ssub.s32 %s11, %s18
    %p98 = scmp.eq.s32.totalorder %s97, 0
    %s100 = sadd.s32 %s99, 1
    %s101 = scalar_select %p98, %s99, %s100
    %p104 = pneg %p98
    %p105 = scmp.eq.s32.totalorder %s11, 1
    %p106 = por %p104, %p105
    %p107 = scmp.ne.s32.totalorder %s99, %s102
    %p108 = scmp.eq.s32.totalorder %s11, 0
    %p109 = por %p107, %p108
    %p110 = scmp.ne.s32.totalorder %s99, %s102
    %p111 = scmp.eq.s32.totalorder %s16, 1
    %p112 = por %p110, %p111
    %p113 = scmp.ne.s32.totalorder %s102, %s103
    %p114 = scmp.eq.s32.totalorder %s16, 0
    %p115 = por %p113, %p114
    %p116 = scmp.ne.s32.totalorder %s102, %s103
    %p117 = scmp.eq.s32.totalorder %s17, 1
    %p118 = por %p116, %p117
    %p120 = scmp.ne.s32.totalorder %s103, %s119
    %p121 = scmp.eq.s32.totalorder %s17, 0
    %p122 = por %p120, %p121
    %s124 = sadd.s32 %s123, 1
    %p127 = scmp.eq.s32.totalorder %s11, 1
    %p128 = scmp.ne.s32.totalorder %s123, %s125
    %p129 = scmp.eq.s32.totalorder %s11, 0
    %p130 = por %p128, %p129
    %p131 = scmp.ne.s32.totalorder %s123, %s125
    %p132 = scmp.eq.s32.totalorder %s16, 1
    %p133 = por %p131, %p132
    %p134 = scmp.ne.s32.totalorder %s125, %s126
    %p135 = scmp.eq.s32.totalorder %s16, 0
    %p136 = por %p134, %p135
    %p137 = scmp.ne.s32.totalorder %s125, %s126
    %p138 = scmp.eq.s32.totalorder %s17, 1
    %p139 = por %p137, %p138
    %p141 = scmp.ne.s32.totalorder %s126, %s140
    %p142 = scmp.eq.s32.totalorder %s17, 0
    %p143 = por %p141, %p142
    %s144 = ssub.s32 %s11, %s18
    %p145 = scmp.eq.s32.totalorder %s144, 0
    %s147 = sadd.s32 %s146, 1
    %s148 = scalar_select %p145, %s146, %s147
    %p151 = pneg %p145
    %p152 = scmp.eq.s32.totalorder %s11, 1
    %p153 = por %p151, %p152
    %p154 = scmp.ne.s32.totalorder %s146, %s149
    %p155 = scmp.eq.s32.totalorder %s11, 0
    %p156 = por %p154, %p155
    %p157 = scmp.ne.s32.totalorder %s146, %s149
    %p158 = scmp.eq.s32.totalorder %s16, 1
    %p159 = por %p157, %p158
    %p160 = scmp.ne.s32.totalorder %s149, %s150
    %p161 = scmp.eq.s32.totalorder %s16, 0
    %p162 = por %p160, %p161
    %p163 = scmp.ne.s32.totalorder %s149, %s150
    %p164 = scmp.eq.s32.totalorder %s17, 1
    %p165 = por %p163, %p164
    %p167 = scmp.ne.s32.totalorder %s150, %s166
    %p168 = scmp.eq.s32.totalorder %s17, 0
    %p169 = por %p167, %p168
    %p170 = scmp.le.s32.totalorder 1, %s11
    %p171 = scmp.lt.s32.totalorder %s11, 3
    %p172 = pnand %p170, %p171
    %p173 = pneg %p172
    // Predicated region
    $region9: #{discriminator_forward.3} parent=5 // pred_check
      _
    $region10: #{discriminator_forward.3} parent=5 // pred_check_branch
      %175 = sbr.rel (%p172) target = $region12
    $region11: #{discriminator_forward.3} parent=5 // pred_region
      %s176 = ssub.s32 %s11, 1
      // Predicated region
      $region13: #{discriminator_forward.3} parent=11 // pred_check
        %p177 = pneg %p136
      $region14: #{discriminator_forward.3} parent=11 // pred_check_branch
        %179 = sbr.rel (%p177) target = $region16
      $region15: #{discriminator_forward.3} parent=11 // pred_region
        _
      $region16: #{discriminator_forward.3} parent=11 // pred_fallthru
        _
    $region12: #{discriminator_forward.3} parent=5 // pred_fallthru
      _
    %p180 = scmp.lt.s32.totalorder %s11, 2
    // Predicated region
    $region17: #{discriminator_forward.3} parent=5 // pred_check
      %p181 = pneg %p180
    $region18: #{discriminator_forward.3} parent=5 // pred_check_branch
      %183 = sbr.rel (%p181) target = $region20
    $region19: #{discriminator_forward.3} parent=5 // pred_region
      // Predicated region
      $region21: #{discriminator_forward.3} parent=19 // pred_check
        %p184 = pneg %p31
      $region22: #{discriminator_forward.3} parent=19 // pred_check_branch
        %186 = sbr.rel (%p184) target = $region24
      $region23: #{discriminator_forward.3} parent=19 // pred_region
        %p187 = scmp.lt.s32.totalorder %s11, 1
        %s188 = scalar_select %p187, %s11, 1
        %s189 = smul.addr %s188, 18
        %s190 = smul.addr %s189, 4
        %s191 = scalar_lea.vmem %s0, %s190
      $region24: #{discriminator_forward.3} parent=19 // pred_fallthru
        _
      // Predicated region
      $region25: #{discriminator_forward.3} parent=19 // pred_check
        %p192 = pneg %p57
      $region26: #{discriminator_forward.3} parent=19 // pred_check_branch
        %194 = sbr.rel (%p192) target = $region28
      $region27: #{discriminator_forward.3} parent=19 // pred_region
        %p195 = scmp.lt.s32.totalorder %s11, 1
        %s196 = scalar_select %p195, %s11, 1
        %s197 = smul.addr %s196, 18
        %s198 = smul.addr %s197, 4
        %s199 = scalar_lea.vmem %s1, %s198
      $region28: #{discriminator_forward.3} parent=19 // pred_fallthru
        _
      // Predicated region
      $region29: #{discriminator_forward.3} parent=19 // pred_check
        %p200 = pneg %p83
      $region30: #{discriminator_forward.3} parent=19 // pred_check_branch
        %202 = sbr.rel (%p200) target = $region32
      $region31: #{discriminator_forward.3} parent=19 // pred_region
        %p203 = scmp.lt.s32.totalorder %s11, 1
        %s204 = scalar_select %p203, %s11, 1
        %s205 = smul.addr %s204, 18
        %s206 = smul.addr %s205, 4
        %s207 = scalar_lea.vmem %s2, %s206
      $region32: #{discriminator_forward.3} parent=19 // pred_fallthru
        _
      // Predicated region
      $region33: #{discriminator_forward.3} parent=19 // pred_check
        %p208 = pneg %p109
      $region34: #{discriminator_forward.3} parent=19 // pred_check_branch
        %210 = sbr.rel (%p208) target = $region36
      $region35: #{discriminator_forward.3} parent=19 // pred_region
        %p211 = scmp.lt.s32.totalorder %s11, 1
        %s212 = scalar_select %p211, %s11, 1
        %s213 = smul.addr %s212, 18
        %s214 = smul.addr %s213, 4
        %s215 = scalar_lea.vmem %s3, %s214
      $region36: #{discriminator_forward.3} parent=19 // pred_fallthru
        _
    $region20: #{discriminator_forward.3} parent=5 // pred_fallthru
      _
    %p216 = scmp.le.s32.totalorder 1, %s11
    %p217 = scmp.lt.s32.totalorder %s11, 3
    %p218 = pnand %p216, %p217
    %p219 = pneg %p218
    // Predicated region
    $region37: #{discriminator_forward.3} parent=5 // pred_check
      _
    $region38: #{discriminator_forward.3} parent=5 // pred_check_branch
      %221 = sbr.rel (%p218) target = $region40
    $region39: #{discriminator_forward.3} parent=5 // pred_region
      %s222 = ssub.s32 %s11, 1
      %p223 = scmp.lt.s32.totalorder %s16, 1
      %s224 = scalar_select %p223, %s16, 1
      %s225 = smul.addr %s224, 18
      %s226 = smul.addr %s225, 4
      %s227 = scalar_lea.vmem %s0, %s226
      %p228 = pneg %p37
      %p229 = pneg %p34
      %p230 = scmp.lt.s32.totalorder %s16, 1
      %s231 = scalar_select %p230, %s16, 1
      %s232 = smul.addr %s231, 18
      %s233 = smul.addr %s232, 4
      %s234 = scalar_lea.vmem %s1, %s233
      %p235 = pneg %p63
      %p236 = pneg %p60
      %p237 = scmp.lt.s32.totalorder %s16, 1
      %s238 = scalar_select %p237, %s16, 1
      %s239 = smul.addr %s238, 18
      %s240 = smul.addr %s239, 4
      %s241 = scalar_lea.vmem %s2, %s240
      %p242 = pneg %p89
      %p243 = pneg %p86
      %p244 = scmp.lt.s32.totalorder %s16, 1
      %s245 = scalar_select %p244, %s16, 1
      %s246 = smul.addr %s245, 18
      %s247 = smul.addr %s246, 4
      %s248 = scalar_lea.vmem %s3, %s247
      %p249 = pneg %p115
      %p250 = pneg %p112
      %p251 = pneg %p136
      %p252 = pneg %p133
      %p253 = pneg %p162
      %p254 = pneg %p159
      %s255 = smul.u32 8, %s16
      %p256 = scmp.lt.s32.totalorder %s255, 15
      %s257 = scalar_select %p256, %s255, 15
      %s258 = smul.addr %s257, 4
      %s259 = scalar_lea.vmem %s5, %s258
      %p260 = scmp.lt.s32.totalorder %s16, 1
      %s261 = scalar_select %p260, %s16, 1
      %s262 = smul.addr %s261, 18
      %s263 = smul.addr %s262, 4
      %s264 = scalar_lea.vmem %s0, %s263
      %p265 = scmp.lt.s32.totalorder %s16, 1
      %s266 = scalar_select %p265, %s16, 1
      %s267 = smul.addr %s266, 18
      %s268 = smul.addr %s267, 4
      %s269 = scalar_lea.vmem %s1, %s268
      %p270 = scmp.lt.s32.totalorder %s16, 1
      %s271 = scalar_select %p270, %s16, 1
      %s272 = smul.addr %s271, 18
      %s273 = smul.addr %s272, 4
      %s274 = scalar_lea.vmem %s2, %s273
      %p275 = scmp.lt.s32.totalorder %s16, 1
      %s276 = scalar_select %p275, %s16, 1
      %s277 = smul.addr %s276, 18
      %s278 = smul.addr %s277, 4
      %s279 = scalar_lea.vmem %s3, %s278
      %s280 = smul.u32 8, %s16
      %p281 = scmp.lt.s32.totalorder %s280, 15
      %s282 = scalar_select %p281, %s280, 15
      %s283 = smul.addr %s282, 4
      %s284 = scalar_lea.vmem %s5, %s283
      %s285 = smul.u32 8, %s16
      %v287 = vld [vmem:[%s264] sm:$0xf]
      %v288 = vld [vmem:[%s264 + $0x8] sm:$0xf]
      %v289 = vld [vmem:[%s264 + $0x10] sm:$0xf]
      %v290 = vld [vmem:[%s264 + $0x18] sm:$0xf]
      %v291 = vld [vmem:[%s264 + $0x20] sm:$0xf]
      %v292 = vld [vmem:[%s264 + $0x28] sm:$0xf]
      %v293 = vld [vmem:[%s264 + $0x30] sm:$0xf]
      %v294 = vld [vmem:[%s264 + $0x38] sm:$0xf]
      %v295 = vld [vmem:[%s4] sm:$0x3]
      %v296 = vld [vmem:[%s269] sm:$0xf]
      %v297 = vld [vmem:[%s269 + $0x8] sm:$0xf]
      %v298 = vld [vmem:[%s269 + $0x10] sm:$0xf]
      %v299 = vld [vmem:[%s269 + $0x18] sm:$0xf]
      %v300 = vld [vmem:[%s269 + $0x20] sm:$0xf]
      %v301 = vld [vmem:[%s269 + $0x28] sm:$0xf]
      %v302 = vld [vmem:[%s269 + $0x30] sm:$0xf]
      %v303 = vld [vmem:[%s269 + $0x38] sm:$0xf]
      %s304 = scalar_lea.vmem %s4, 2
      %v305 = vld [vmem:[%s304] sm:$0x3]
      %v314 = vunpack.c.l.b16 %v296
      %v315 = vunpack.c.l.b16 %v297
      %v316 = vunpack.c.l.b16 %v298
      %v317 = vunpack.c.l.b16 %v299
      %v318 = vunpack.c.l.b16 %v300
      %v319 = vunpack.c.l.b16 %v301
      %v320 = vunpack.c.l.b16 %v302
      %v321 = vunpack.c.l.b16 %v303
      %v322 = vpack.c.b16 %v315, %v314
      %v323 = vpack.c.b16 %v317, %v316
      %v324 = vpack.c.b16 %v319, %v318
      %v325 = vpack.c.b16 %v321, %v320
      %vm326 = vcmask 23552
      %v328 = vsel %vm326, %v322, 0
      %v331 = vsel %vm326, %v323, 0
      %v334 = vsel %vm326, %v324, 0
      %v337 = vsel %vm326, %v325, 0
      %vm339 = vcmask 1040384
      %vm340 = vcmask 1041408
      %v341 = vsel %vm339, 4294967295, 65535
      %v342 = vsel %vm340, %v341, 0
      %v344 = vand.u32 %v305, %v342
      %346 = vmatprep.subr.bf16.mxu0 0
      %347 = vmatpush1.bf16.msra.mxu0 %v344
      %348 = vmatprep.subr.bf16.mxu0 0
      %349 = vmatpush1.bf16.msra.mxu0 0
      %350 = vmatprep.subr.bf16.mxu0 0
      %351 = vmatpush1.bf16.msra.mxu0 0
      %352 = vmatprep.subr.bf16.mxu0 0
      %353 = vmatpush1.bf16.msra.mxu0 0
      %354 = vmatprep.subr.bf16.mxu0 0
      %355 = vmatpush1.bf16.msra.mxu0 0
      %356 = vmatprep.subr.bf16.mxu0 0
      %357 = vmatpush1.bf16.msra.mxu0 0
      %358 = vmatprep.subr.bf16.mxu0 0
      %359 = vmatpush1.bf16.msra.mxu0 0
      %360 = vmatprep.subr.bf16.mxu0 0
      %361 = vmatpush1.bf16.msra.mxu0 0
      %362 = vmatprep.subr.bf16.mxu0 0
      %363 = vmatpush1.bf16.msra.mxu0 0
      %364 = vmatprep.subr.bf16.mxu0 0
      %365 = vmatpush1.bf16.msra.mxu0 0
      %366 = vmatprep.subr.bf16.mxu0 0
      %367 = vmatpush1.bf16.msra.mxu0 0
      %368 = vmatprep.subr.bf16.mxu0 0
      %369 = vmatpush1.bf16.msra.mxu0 0
      %370 = vmatprep.subr.bf16.mxu0 0
      %371 = vmatpush1.bf16.msra.mxu0 0
      %372 = vmatprep.subr.bf16.mxu0 0
      %373 = vmatpush1.bf16.msra.mxu0 0
      %374 = vmatprep.subr.bf16.mxu0 0
      %375 = vmatpush1.bf16.msra.mxu0 0
      %376 = vmatprep.subr.bf16.mxu0 0
      %377 = vmatpush1.bf16.msra.mxu0 0
      %378 = vmatprep.mubr.bf16.mxu0 0
      %379 = vmatmul.mubr.bf16.gmra.mrb[0].mxu0 %v328
      %v380 = vpop.f32.mrb[0].mxu0
      %v381 = vadd.f32 0.0, %v380
      %v382 = vpop.f32.mrb[0].mxu0
      %v383 = vpop.f32.mrb[0].mxu0
      %v384 = vadd.f32 0.0, %v383
      %v385 = vpop.f32.mrb[0].mxu0
      %386 = vmatprep.mubr.bf16.mxu0 0
      %387 = vmatmul.mubr.bf16.gmra.mrb[0].mxu0 %v331
      %v388 = vpop.f32.mrb[0].mxu0
      %v389 = vadd.f32 0.0, %v388
      %v390 = vpop.f32.mrb[0].mxu0
      %v391 = vpop.f32.mrb[0].mxu0
      %v392 = vadd.f32 0.0, %v391
      %v393 = vpop.f32.mrb[0].mxu0
      %394 = vmatprep.mubr.bf16.mxu0 0
      %395 = vmatmul.mubr.bf16.gmra.mrb[0].mxu0 %v334
      %v396 = vpop.f32.mrb[0].mxu0
      %v397 = vadd.f32 0.0, %v396
      %v398 = vpop.f32.mrb[0].mxu0
      %v399 = vpop.f32.mrb[0].mxu0
      %v400 = vadd.f32 0.0, %v399
      %v401 = vpop.f32.mrb[0].mxu0
      %402 = vmatprep.mubr.bf16.mxu0 0
      %403 = vmatmul.mubr.bf16.gmra.mrb[0].mxu0 %v337
      %v404 = vpop.f32.mrb[0].mxu0
      %v405 = vadd.f32 0.0, %v404
      %v406 = vpop.f32.mrb[0].mxu0
      %v407 = vpop.f32.mrb[0].mxu0
      %v408 = vadd.f32 0.0, %v407
      %v409 = vpop.f32.mrb[0].mxu0
      %410 = vdwg.mxu0
      %v419 = vunpack.c.l.b16 %v287
      %v420 = vunpack.c.l.b16 %v288
      %v421 = vunpack.c.l.b16 %v289
      %v422 = vunpack.c.l.b16 %v290
      %v423 = vunpack.c.l.b16 %v291
      %v424 = vunpack.c.l.b16 %v292
      %v425 = vunpack.c.l.b16 %v293
      %v426 = vunpack.c.l.b16 %v294
      %v427 = vpack.c.b16 %v420, %v419
      %v428 = vpack.c.b16 %v422, %v421
      %v429 = vpack.c.b16 %v424, %v423
      %v430 = vpack.c.b16 %v426, %v425
      %v432 = vsel %vm326, %v427, 0
      %v435 = vsel %vm326, %v428, 0
      %v438 = vsel %vm326, %v429, 0
      %v441 = vsel %vm326, %v430, 0
      %v444 = vand.u32 %v295, %v342
      %446 = vmatprep.subr.bf16.mxu0 0
      %447 = vmatpush1.bf16.msra.mxu0 %v444
      %448 = vmatprep.subr.bf16.mxu0 0
      %449 = vmatpush1.bf16.msra.mxu0 0
      %450 = vmatprep.subr.bf16.mxu0 0
      %451 = vmatpush1.bf16.msra.mxu0 0
      %452 = vmatprep.subr.bf16.mxu0 0
      %453 = vmatpush1.bf16.msra.mxu0 0
      %454 = vmatprep.subr.bf16.mxu0 0
      %455 = vmatpush1.bf16.msra.mxu0 0
      %456 = vmatprep.subr.bf16.mxu0 0
      %457 = vmatpush1.bf16.msra.mxu0 0
      %458 = vmatprep.subr.bf16.mxu0 0
      %459 = vmatpush1.bf16.msra.mxu0 0
      %460 = vmatprep.subr.bf16.mxu0 0
      %461 = vmatpush1.bf16.msra.mxu0 0
      %462 = vmatprep.subr.bf16.mxu0 0
      %463 = vmatpush1.bf16.msra.mxu0 0
      %464 = vmatprep.subr.bf16.mxu0 0
      %465 = vmatpush1.bf16.msra.mxu0 0
      %466 = vmatprep.subr.bf16.mxu0 0
      %467 = vmatpush1.bf16.msra.mxu0 0
      %468 = vmatprep.subr.bf16.mxu0 0
      %469 = vmatpush1.bf16.msra.mxu0 0
      %470 = vmatprep.subr.bf16.mxu0 0
      %471 = vmatpush1.bf16.msra.mxu0 0
      %472 = vmatprep.subr.bf16.mxu0 0
      %473 = vmatpush1.bf16.msra.mxu0 0
      %474 = vmatprep.subr.bf16.mxu0 0
      %475 = vmatpush1.bf16.msra.mxu0 0
      %476 = vmatprep.subr.bf16.mxu0 0
      %477 = vmatpush1.bf16.msra.mxu0 0
      %478 = vmatprep.mubr.bf16.mxu0 0
      %479 = vmatmul.mubr.bf16.gmra.mrb[0].mxu0 %v432
      %v480 = vpop.f32.mrb[0].mxu0
      %v481 = vadd.f32 %v381, %v480
      %v482 = vpop.f32.mrb[0].mxu0
      %v483 = vpop.f32.mrb[0].mxu0
      %v484 = vadd.f32 %v384, %v483
      %v485 = vpop.f32.mrb[0].mxu0
      %486 = vmatprep.mubr.bf16.mxu0 0
      %487 = vmatmul.mubr.bf16.gmra.mrb[0].mxu0 %v435
      %v488 = vpop.f32.mrb[0].mxu0
      %v489 = vadd.f32 %v389, %v488
      %v490 = vpop.f32.mrb[0].mxu0
      %v491 = vpop.f32.mrb[0].mxu0
      %v492 = vadd.f32 %v392, %v491
      %v493 = vpop.f32.mrb[0].mxu0
      %494 = vmatprep.mubr.bf16.mxu0 0
      %495 = vmatmul.mubr.bf16.gmra.mrb[0].mxu0 %v438
      %v496 = vpop.f32.mrb[0].mxu0
      %v497 = vadd.f32 %v397, %v496
      %v498 = vpop.f32.mrb[0].mxu0
      %v499 = vpop.f32.mrb[0].mxu0
      %v500 = vadd.f32 %v400, %v499
      %v501 = vpop.f32.mrb[0].mxu0
      %502 = vmatprep.mubr.bf16.mxu0 0
      %503 = vmatmul.mubr.bf16.gmra.mrb[0].mxu0 %v441
      %v504 = vpop.f32.mrb[0].mxu0
      %v505 = vadd.f32 %v405, %v504
      %v506 = vpop.f32.mrb[0].mxu0
      %v507 = vpop.f32.mrb[0].mxu0
      %v508 = vadd.f32 %v408, %v507
      %v509 = vpop.f32.mrb[0].mxu0
      %510 = vdwg.mxu0
      %v511 = vld [vmem:[%s264] sm:$0xf]
      %v512 = vld [vmem:[%s264 + $0x4] sm:$0x1]
      %v513 = vld [vmem:[%s264 + $0x8] sm:$0xf]
      %v514 = vld [vmem:[%s264 + $0xc] sm:$0x1]
      %v515 = vld [vmem:[%s264 + $0x10] sm:$0xf]
      %v516 = vld [vmem:[%s264 + $0x14] sm:$0x1]
      %v517 = vld [vmem:[%s264 + $0x18] sm:$0xf]
      %v518 = vld [vmem:[%s264 + $0x1c] sm:$0x1]
      %v519 = vld [vmem:[%s264 + $0x20] sm:$0xf]
      %v520 = vld [vmem:[%s264 + $0x24] sm:$0x1]
      %v521 = vld [vmem:[%s264 + $0x28] sm:$0xf]
      %v522 = vld [vmem:[%s264 + $0x2c] sm:$0x1]
      %v523 = vld [vmem:[%s264 + $0x30] sm:$0xf]
      %v524 = vld [vmem:[%s264 + $0x34] sm:$0x1]
      %v525 = vld [vmem:[%s264 + $0x38] sm:$0xf]
      %v526 = vld [vmem:[%s264 + $0x3c] sm:$0x1]
      %vm527 = vsmask.f32 3328
      %vm528 = vsmask.f32 7440
      %vm529 = vmor %vm527, %vm528
      %v531 = vshrl.u32 %v511, 16
      %v533 = vrot.slane %v531, 4
      %v534 = vshll.u32 %v511, 16
      %v536 = vrot.slane %v534, 5
      %v537 = vor.u32 %v533, %v536
      %v538 = vrot.slane %v537, 4
      %v540 = vshll.u32 %v512, 16
      %v542 = vrot.slane %v540, 5
      %v543 = vsel %vm529, %v538, %v542
      %v545 = vshrl.u32 %v513, 16
      %v547 = vrot.slane %v545, 4
      %v548 = vshll.u32 %v513, 16
      %v550 = vrot.slane %v548, 5
      %v551 = vor.u32 %v547, %v550
      %v552 = vrot.slane %v551, 4
      %v554 = vshll.u32 %v514, 16
      %v556 = vrot.slane %v554, 5
      %v557 = vsel %vm529, %v552, %v556
      %v559 = vshrl.u32 %v515, 16
      %v561 = vrot.slane %v559, 4
      %v562 = vshll.u32 %v515, 16
      %v564 = vrot.slane %v562, 5
      %v565 = vor.u32 %v561, %v564
      %v566 = vrot.slane %v565, 4
      %v568 = vshll.u32 %v516, 16
      %v570 = vrot.slane %v568, 5
      %v571 = vsel %vm529, %v566, %v570
      %v573 = vshrl.u32 %v517, 16
      %v575 = vrot.slane %v573, 4
      %v576 = vshll.u32 %v517, 16
      %v578 = vrot.slane %v576, 5
      %v579 = vor.u32 %v575, %v578
      %v580 = vrot.slane %v579, 4
      %v582 = vshll.u32 %v518, 16
      %v584 = vrot.slane %v582, 5
      %v585 = vsel %vm529, %v580, %v584
      %v587 = vshrl.u32 %v519, 16
      %v589 = vrot.slane %v587, 4
      %v590 = vshll.u32 %v519, 16
      %v592 = vrot.slane %v590, 5
      %v593 = vor.u32 %v589, %v592
      %v594 = vrot.slane %v593, 4
      %v596 = vshll.u32 %v520, 16
      %v598 = vrot.slane %v596, 5
      %v599 = vsel %vm529, %v594, %v598
      %v601 = vshrl.u32 %v521, 16
      %v603 = vrot.slane %v601, 4
      %v604 = vshll.u32 %v521, 16
      %v606 = vrot.slane %v604, 5
      %v607 = vor.u32 %v603, %v606
      %v608 = vrot.slane %v607, 4
      %v610 = vshll.u32 %v522, 16
      %v612 = vrot.slane %v610, 5
      %v613 = vsel %vm529, %v608, %v612
      %v615 = vshrl.u32 %v523, 16
      %v617 = vrot.slane %v615, 4
      %v618 = vshll.u32 %v523, 16
      %v620 = vrot.slane %v618, 5
      %v621 = vor.u32 %v617, %v620
      %v622 = vrot.slane %v621, 4
      %v624 = vshll.u32 %v524, 16
      %v626 = vrot.slane %v624, 5
      %v627 = vsel %vm529, %v622, %v626
      %v629 = vshrl.u32 %v525, 16
      %v631 = vrot.slane %v629, 4
      %v632 = vshll.u32 %v525, 16
      %v634 = vrot.slane %v632, 5
      %v635 = vor.u32 %v631, %v634
      %v636 = vrot.slane %v635, 4
      %v638 = vshll.u32 %v526, 16
      %v640 = vrot.slane %v638, 5
      %v641 = vsel %vm529, %v636, %v640
      %s642 = scalar_lea.vmem %s4, 4
      %v643 = vld [vmem:[%s642] sm:$0x3]
      %v644 = vunpack.c.l.b16 %v543
      %v645 = vunpack.c.l.b16 %v557
      %v646 = vunpack.c.l.b16 %v571
      %v647 = vunpack.c.l.b16 %v585
      %v648 = vunpack.c.l.b16 %v599
      %v649 = vunpack.c.l.b16 %v613
      %v650 = vunpack.c.l.b16 %v627
      %v651 = vunpack.c.l.b16 %v641
      %v652 = vpack.c.b16 %v645, %v644
      %v653 = vpack.c.b16 %v647, %v646
      %v654 = vpack.c.b16 %v649, %v648
      %v655 = vpack.c.b16 %v651, %v650
      %v657 = vsel %vm326, %v652, 0
      %v660 = vsel %vm326, %v653, 0
      %v663 = vsel %vm326, %v654, 0
      %v666 = vsel %vm326, %v655, 0
      %v669 = vand.u32 %v643, %v342
      %671 = vmatprep.subr.bf16.mxu0 0
      %672 = vmatpush1.bf16.msra.mxu0 %v669
      %673 = vmatprep.subr.bf16.mxu0 0
      %674 = vmatpush1.bf16.msra.mxu0 0
      %675 = vmatprep.subr.bf16.mxu0 0
      %676 = vmatpush1.bf16.msra.mxu0 0
      %677 = vmatprep.subr.bf16.mxu0 0
      %678 = vmatpush1.bf16.msra.mxu0 0
      %679 = vmatprep.subr.bf16.mxu0 0
      %680 = vmatpush1.bf16.msra.mxu0 0
      %681 = vmatprep.subr.bf16.mxu0 0
      %682 = vmatpush1.bf16.msra.mxu0 0
      %683 = vmatprep.subr.bf16.mxu0 0
      %684 = vmatpush1.bf16.msra.mxu0 0
      %685 = vmatprep.subr.bf16.mxu0 0
      %686 = vmatpush1.bf16.msra.mxu0 0
      %687 = vmatprep.subr.bf16.mxu0 0
      %688 = vmatpush1.bf16.msra.mxu0 0
      %689 = vmatprep.subr.bf16.mxu0 0
      %690 = vmatpush1.bf16.msra.mxu0 0
      %691 = vmatprep.subr.bf16.mxu0 0
      %692 = vmatpush1.bf16.msra.mxu0 0
      %693 = vmatprep.subr.bf16.mxu0 0
      %694 = vmatpush1.bf16.msra.mxu0 0
      %695 = vmatprep.subr.bf16.mxu0 0
      %696 = vmatpush1.bf16.msra.mxu0 0
      %697 = vmatprep.subr.bf16.mxu0 0
      %698 = vmatpush1.bf16.msra.mxu0 0
      %699 = vmatprep.subr.bf16.mxu0 0
      %700 = vmatpush1.bf16.msra.mxu0 0
      %701 = vmatprep.subr.bf16.mxu0 0
      %702 = vmatpush1.bf16.msra.mxu0 0
      %703 = vmatprep.mubr.bf16.mxu0 0
      %704 = vmatmul.mubr.bf16.gmra.mrb[0].mxu0 %v657
      %v705 = vpop.f32.mrb[0].mxu0
      %v706 = vadd.f32 0.0, %v705
      %v707 = vpop.f32.mrb[0].mxu0
      %v708 = vpop.f32.mrb[0].mxu0
      %v709 = vadd.f32 0.0, %v708
      %v710 = vpop.f32.mrb[0].mxu0
      %711 = vmatprep.mubr.bf16.mxu0 0
      %712 = vmatmul.mubr.bf16.gmra.mrb[0].mxu0 %v660
      %v713 = vpop.f32.mrb[0].mxu0
      %v714 = vadd.f32 0.0, %v713
      %v715 = vpop.f32.mrb[0].mxu0
      %v716 = vpop.f32.mrb[0].mxu0
      %v717 = vadd.f32 0.0, %v716
      %v718 = vpop.f32.mrb[0].mxu0
      %719 = vmatprep.mubr.bf16.mxu0 0
      %720 = vmatmul.mubr.bf16.gmra.mrb[0].mxu0 %v663
      %v721 = vpop.f32.mrb[0].mxu0
      %v722 = vadd.f32 0.0, %v721
      %v723 = vpop.f32.mrb[0].mxu0
      %v724 = vpop.f32.mrb[0].mxu0
      %v725 = vadd.f32 0.0, %v724
      %v726 = vpop.f32.mrb[0].mxu0
      %727 = vmatprep.mubr.bf16.mxu0 0
      %728 = vmatmul.mubr.bf16.gmra.mrb[0].mxu0 %v666
      %v729 = vpop.f32.mrb[0].mxu0
      %v730 = vadd.f32 0.0, %v729
      %v731 = vpop.f32.mrb[0].mxu0
      %v732 = vpop.f32.mrb[0].mxu0
      %v733 = vadd.f32 0.0, %v732
      %v734 = vpop.f32.mrb[0].mxu0
      %735 = vdwg.mxu0
      %v736 = vadd.f32 %v481, %v706
      %v737 = vadd.f32 %v484, %v709
      %v738 = vadd.f32 %v489, %v714
      %v739 = vadd.f32 %v492, %v717
      %v740 = vadd.f32 %v497, %v722
      %v741 = vadd.f32 %v500, %v725
      %v742 = vadd.f32 %v505, %v730
      %v743 = vadd.f32 %v508, %v733
      %v744 = vld [vmem:[%s269] sm:$0xf]
      %v745 = vld [vmem:[%s269 + $0x4] sm:$0x1]
      %v746 = vld [vmem:[%s269 + $0x8] sm:$0xf]
      %v747 = vld [vmem:[%s269 + $0xc] sm:$0x1]
      %v748 = vld [vmem:[%s269 + $0x10] sm:$0xf]
      %v749 = vld [vmem:[%s269 + $0x14] sm:$0x1]
      %v750 = vld [vmem:[%s269 + $0x18] sm:$0xf]
      %v751 = vld [vmem:[%s269 + $0x1c] sm:$0x1]
      %v752 = vld [vmem:[%s269 + $0x20] sm:$0xf]
      %v753 = vld [vmem:[%s269 + $0x24] sm:$0x1]
      %v754 = vld [vmem:[%s269 + $0x28] sm:$0xf]
      %v755 = vld [vmem:[%s269 + $0x2c] sm:$0x1]
      %v756 = vld [vmem:[%s269 + $0x30] sm:$0xf]
      %v757 = vld [vmem:[%s269 + $0x34] sm:$0x1]
      %v758 = vld [vmem:[%s269 + $0x38] sm:$0xf]
      %v759 = vld [vmem:[%s269 + $0x3c] sm:$0x1]
      %v761 = vshrl.u32 %v744, 16
      %v763 = vrot.slane %v761, 4
      %v764 = vshll.u32 %v744, 16
      %v766 = vrot.slane %v764, 5
      %v767 = vor.u32 %v763, %v766
      %v768 = vrot.slane %v767, 4
      %v770 = vshll.u32 %v745, 16
      %v772 = vrot.slane %v770, 5
      %v773 = vsel %vm529, %v768, %v772
      %v775 = vshrl.u32 %v746, 16
      %v777 = vrot.slane %v775, 4
      %v778 = vshll.u32 %v746, 16
      %v780 = vrot.slane %v778, 5
      %v781 = vor.u32 %v777, %v780
      %v782 = vrot.slane %v781, 4
      %v784 = vshll.u32 %v747, 16
      %v786 = vrot.slane %v784, 5
      %v787 = vsel %vm529, %v782, %v786
      %v789 = vshrl.u32 %v748, 16
      %v791 = vrot.slane %v789, 4
      %v792 = vshll.u32 %v748, 16
      %v794 = vrot.slane %v792, 5
      %v795 = vor.u32 %v791, %v794
      %v796 = vrot.slane %v795, 4
      %v798 = vshll.u32 %v749, 16
      %v800 = vrot.slane %v798, 5
      %v801 = vsel %vm529, %v796, %v800
      %v803 = vshrl.u32 %v750, 16
      %v805 = vrot.slane %v803, 4
      %v806 = vshll.u32 %v750, 16
      %v808 = vrot.slane %v806, 5
      %v809 = vor.u32 %v805, %v808
      %v810 = vrot.slane %v809, 4
      %v812 = vshll.u32 %v751, 16
      %v814 = vrot.slane %v812, 5
      %v815 = vsel %vm529, %v810, %v814
      %v817 = vshrl.u32 %v752, 16
      %v819 = vrot.slane %v817, 4
      %v820 = vshll.u32 %v752, 16
      %v822 = vrot.slane %v820, 5
      %v823 = vor.u32 %v819, %v822
      %v824 = vrot.slane %v823, 4
      %v826 = vshll.u32 %v753, 16
      %v828 = vrot.slane %v826, 5
      %v829 = vsel %vm529, %v824, %v828
      %v831 = vshrl.u32 %v754, 16
      %v833 = vrot.slane %v831, 4
      %v834 = vshll.u32 %v754, 16
      %v836 = vrot.slane %v834, 5
      %v837 = vor.u32 %v833, %v836
      %v838 = vrot.slane %v837, 4
      %v840 = vshll.u32 %v755, 16
      %v842 = vrot.slane %v840, 5
      %v843 = vsel %vm529, %v838, %v842
      %v845 = vshrl.u32 %v756, 16
      %v847 = vrot.slane %v845, 4
      %v848 = vshll.u32 %v756, 16
      %v850 = vrot.slane %v848, 5
      %v851 = vor.u32 %v847, %v850
      %v852 = vrot.slane %v851, 4
      %v854 = vshll.u32 %v757, 16
      %v856 = vrot.slane %v854, 5
      %v857 = vsel %vm529, %v852, %v856
      %v859 = vshrl.u32 %v758, 16
      %v861 = vrot.slane %v859, 4
      %v862 = vshll.u32 %v758, 16
      %v864 = vrot.slane %v862, 5
      %v865 = vor.u32 %v861, %v864
      %v866 = vrot.slane %v865, 4
      %v868 = vshll.u32 %v759, 16
      %v870 = vrot.slane %v868, 5
      %v871 = vsel %vm529, %v866, %v870
      %s872 = scalar_lea.vmem %s4, 6
      %v873 = vld [vmem:[%s872] sm:$0x3]
      %v874 = vunpack.c.l.b16 %v773
      %v875 = vunpack.c.l.b16 %v787
      %v876 = vunpack.c.l.b16 %v801
      %v877 = vunpack.c.l.b16 %v815
      %v878 = vunpack.c.l.b16 %v829
      %v879 = vunpack.c.l.b16 %v843
      %v880 = vunpack.c.l.b16 %v857
      %v881 = vunpack.c.l.b16 %v871
      %v882 = vpack.c.b16 %v875, %v874
      %v883 = vpack.c.b16 %v877, %v876
      %v884 = vpack.c.b16 %v879, %v878
      %v885 = vpack.c.b16 %v881, %v880
      %v887 = vsel %vm326, %v882, 0
      %v890 = vsel %vm326, %v883, 0
      %v893 = vsel %vm326, %v884, 0
      %v896 = vsel %vm326, %v885, 0
      %v899 = vand.u32 %v873, %v342
      %901 = vmatprep.subr.bf16.mxu0 0
      %902 = vmatpush1.bf16.msra.mxu0 %v899
      %903 = vmatprep.subr.bf16.mxu0 0
      %904 = vmatpush1.bf16.msra.mxu0 0
      %905 = vmatprep.subr.bf16.mxu0 0
      %906 = vmatpush1.bf16.msra.mxu0 0
      %907 = vmatprep.subr.bf16.mxu0 0
      %908 = vmatpush1.bf16.msra.mxu0 0
      %909 = vmatprep.subr.bf16.mxu0 0
      %910 = vmatpush1.bf16.msra.mxu0 0
      %911 = vmatprep.subr.bf16.mxu0 0
      %912 = vmatpush1.bf16.msra.mxu0 0
      %913 = vmatprep.subr.bf16.mxu0 0
      %914 = vmatpush1.bf16.msra.mxu0 0
      %915 = vmatprep.subr.bf16.mxu0 0
      %916 = vmatpush1.bf16.msra.mxu0 0
      %917 = vmatprep.subr.bf16.mxu0 0
      %918 = vmatpush1.bf16.msra.mxu0 0
      %919 = vmatprep.subr.bf16.mxu0 0
      %920 = vmatpush1.bf16.msra.mxu0 0
      %921 = vmatprep.subr.bf16.mxu0 0
      %922 = vmatpush1.bf16.msra.mxu0 0
      %923 = vmatprep.subr.bf16.mxu0 0
      %924 = vmatpush1.bf16.msra.mxu0 0
      %925 = vmatprep.subr.bf16.mxu0 0
      %926 = vmatpush1.bf16.msra.mxu0 0
      %927 = vmatprep.subr.bf16.mxu0 0
      %928 = vmatpush1.bf16.msra.mxu0 0
      %929 = vmatprep.subr.bf16.mxu0 0
      %930 = vmatpush1.bf16.msra.mxu0 0
      %931 = vmatprep.subr.bf16.mxu0 0
      %932 = vmatpush1.bf16.msra.mxu0 0
      %933 = vmatprep.mubr.bf16.mxu0 0
      %934 = vmatmul.mubr.bf16.gmra.mrb[0].mxu0 %v887
      %v935 = vpop.f32.mrb[0].mxu0
      %v936 = vadd.f32 0.0, %v935
      %v937 = vpop.f32.mrb[0].mxu0
      %v938 = vpop.f32.mrb[0].mxu0
      %v939 = vadd.f32 0.0, %v938
      %v940 = vpop.f32.mrb[0].mxu0
      %941 = vmatprep.mubr.bf16.mxu0 0
      %942 = vmatmul.mubr.bf16.gmra.mrb[0].mxu0 %v890
      %v943 = vpop.f32.mrb[0].mxu0
      %v944 = vadd.f32 0.0, %v943
      %v945 = vpop.f32.mrb[0].mxu0
      %v946 = vpop.f32.mrb[0].mxu0
      %v947 = vadd.f32 0.0, %v946
      %v948 = vpop.f32.mrb[0].mxu0
      %949 = vmatprep.mubr.bf16.mxu0 0
      %950 = vmatmul.mubr.bf16.gmra.mrb[0].mxu0 %v893
      %v951 = vpop.f32.mrb[0].mxu0
      %v952 = vadd.f32 0.0, %v951
      %v953 = vpop.f32.mrb[0].mxu0
      %v954 = vpop.f32.mrb[0].mxu0
      %v955 = vadd.f32 0.0, %v954
      %v956 = vpop.f32.mrb[0].mxu0
      %957 = vmatprep.mubr.bf16.mxu0 0
      %958 = vmatmul.mubr.bf16.gmra.mrb[0].mxu0 %v896
      %v959 = vpop.f32.mrb[0].mxu0
      %v960 = vadd.f32 0.0, %v959
      %v961 = vpop.f32.mrb[0].mxu0
      %v962 = vpop.f32.mrb[0].mxu0
      %v963 = vadd.f32 0.0, %v962
      %v964 = vpop.f32.mrb[0].mxu0
      %965 = vdwg.mxu0
      %v966 = vadd.f32 %v736, %v936
      %v967 = vadd.f32 %v737, %v939
      %v968 = vadd.f32 %v738, %v944
      %v969 = vadd.f32 %v739, %v947
      %v970 = vadd.f32 %v740, %v952
      %v971 = vadd.f32 %v741, %v955
      %v972 = vadd.f32 %v742, %v960
      %v973 = vadd.f32 %v743, %v963
      %v974 = vld [vmem:[%s274] sm:$0xf]
      %v975 = vld [vmem:[%s274 + $0x8] sm:$0xf]
      %v976 = vld [vmem:[%s274 + $0x10] sm:$0xf]
      %v977 = vld [vmem:[%s274 + $0x18] sm:$0xf]
      %v978 = vld [vmem:[%s274 + $0x20] sm:$0xf]
      %v979 = vld [vmem:[%s274 + $0x28] sm:$0xf]
      %v980 = vld [vmem:[%s274 + $0x30] sm:$0xf]
      %v981 = vld [vmem:[%s274 + $0x38] sm:$0xf]
      %s982 = scalar_lea.vmem %s4, 8
      %v983 = vld [vmem:[%s982] sm:$0x3]
      %v992 = vunpack.c.l.b16 %v974
      %v993 = vunpack.c.l.b16 %v975
      %v994 = vunpack.c.l.b16 %v976
      %v995 = vunpack.c.l.b16 %v977
      %v996 = vunpack.c.l.b16 %v978
      %v997 = vunpack.c.l.b16 %v979
      %v998 = vunpack.c.l.b16 %v980
      %v999 = vunpack.c.l.b16 %v981
      %v1000 = vpack.c.b16 %v993, %v992
      %v1001 = vpack.c.b16 %v995, %v994
      %v1002 = vpack.c.b16 %v997, %v996
      %v1003 = vpack.c.b16 %v999, %v998
      %v1005 = vsel %vm326, %v1000, 0
      %v1008 = vsel %vm326, %v1001, 0
      %v1011 = vsel %vm326, %v1002, 0
      %v1014 = vsel %vm326, %v1003, 0
      %v1017 = vand.u32 %v983, %v342
      %1019 = vmatprep.subr.bf16.mxu0 0
      %1020 = vmatpush1.bf16.msra.mxu0 %v1017
      %1021 = vmatprep.subr.bf16.mxu0 0
      %1022 = vmatpush1.bf16.msra.mxu0 0
      %1023 = vmatprep.subr.bf16.mxu0 0
      %1024 = vmatpush1.bf16.msra.mxu0 0
      %1025 = vmatprep.subr.bf16.mxu0 0
      %1026 = vmatpush1.bf16.msra.mxu0 0
      %1027 = vmatprep.subr.bf16.mxu0 0
      %1028 = vmatpush1.bf16.msra.mxu0 0
      %1029 = vmatprep.subr.bf16.mxu0 0
      %1030 = vmatpush1.bf16.msra.mxu0 0
      %1031 = vmatprep.subr.bf16.mxu0 0
      %1032 = vmatpush1.bf16.msra.mxu0 0
      %1033 = vmatprep.subr.bf16.mxu0 0
      %1034 = vmatpush1.bf16.msra.mxu0 0
      %1035 = vmatprep.subr.bf16.mxu0 0
      %1036 = vmatpush1.bf16.msra.mxu0 0
      %1037 = vmatprep.subr.bf16.mxu0 0
      %1038 = vmatpush1.bf16.msra.mxu0 0
      %1039 = vmatprep.subr.bf16.mxu0 0
      %1040 = vmatpush1.bf16.msra.mxu0 0
      %1041 = vmatprep.subr.bf16.mxu0 0
      %1042 = vmatpush1.bf16.msra.mxu0 0
      %1043 = vmatprep.subr.bf16.mxu0 0
      %1044 = vmatpush1.bf16.msra.mxu0 0
      %1045 = vmatprep.subr.bf16.mxu0 0
      %1046 = vmatpush1.bf16.msra.mxu0 0
      %1047 = vmatprep.subr.bf16.mxu0 0
      %1048 = vmatpush1.bf16.msra.mxu0 0
      %1049 = vmatprep.subr.bf16.mxu0 0
      %1050 = vmatpush1.bf16.msra.mxu0 0
      %1051 = vmatprep.mubr.bf16.mxu0 0
      %1052 = vmatmul.mubr.bf16.gmra.mrb[0].mxu0 %v1005
      %v1053 = vpop.f32.mrb[0].mxu0
      %v1054 = vadd.f32 0.0, %v1053
      %v1055 = vpop.f32.mrb[0].mxu0
      %v1056 = vpop.f32.mrb[0].mxu0
      %v1057 = vadd.f32 0.0, %v1056
      %v1058 = vpop.f32.mrb[0].mxu0
      %1059 = vmatprep.mubr.bf16.mxu0 0
      %1060 = vmatmul.mubr.bf16.gmra.mrb[0].mxu0 %v1008
      %v1061 = vpop.f32.mrb[0].mxu0
      %v1062 = vadd.f32 0.0, %v1061
      %v1063 = vpop.f32.mrb[0].mxu0
      %v1064 = vpop.f32.mrb[0].mxu0
      %v1065 = vadd.f32 0.0, %v1064
      %v1066 = vpop.f32.mrb[0].mxu0
      %1067 = vmatprep.mubr.bf16.mxu0 0
      %1068 = vmatmul.mubr.bf16.gmra.mrb[0].mxu0 %v1011
      %v1069 = vpop.f32.mrb[0].mxu0
      %v1070 = vadd.f32 0.0, %v1069
      %v1071 = vpop.f32.mrb[0].mxu0
      %v1072 = vpop.f32.mrb[0].mxu0
      %v1073 = vadd.f32 0.0, %v1072
      %v1074 = vpop.f32.mrb[0].mxu0
      %1075 = vmatprep.mubr.bf16.mxu0 0
      %1076 = vmatmul.mubr.bf16.gmra.mrb[0].mxu0 %v1014
      %v1077 = vpop.f32.mrb[0].mxu0
      %v1078 = vadd.f32 0.0, %v1077
      %v1079 = vpop.f32.mrb[0].mxu0
      %v1080 = vpop.f32.mrb[0].mxu0
      %v1081 = vadd.f32 0.0, %v1080
      %v1082 = vpop.f32.mrb[0].mxu0
      %1083 = vdwg.mxu0
      %v1084 = vadd.f32 %v966, %v1054
      %v1085 = vadd.f32 %v967, %v1057
      %v1086 = vadd.f32 %v968, %v1062
      %v1087 = vadd.f32 %v969, %v1065
      %v1088 = vadd.f32 %v970, %v1070
      %v1089 = vadd.f32 %v971, %v1073
      %v1090 = vadd.f32 %v972, %v1078
      %v1091 = vadd.f32 %v973, %v1081
      %v1092 = vld [vmem:[%s279] sm:$0xf]
      %v1093 = vld [vmem:[%s279 + $0x8] sm:$0xf]
      %v1094 = vld [vmem:[%s279 + $0x10] sm:$0xf]
      %v1095 = vld [vmem:[%s279 + $0x18] sm:$0xf]
      %v1096 = vld [vmem:[%s279 + $0x20] sm:$0xf]
      %v1097 = vld [vmem:[%s279 + $0x28] sm:$0xf]
      %v1098 = vld [vmem:[%s279 + $0x30] sm:$0xf]
      %v1099 = vld [vmem:[%s279 + $0x38] sm:$0xf]
      %s1100 = scalar_lea.vmem %s4, 10
      %v1101 = vld [vmem:[%s1100] sm:$0x3]
      %v1110 = vunpack.c.l.b16 %v1092
      %v1111 = vunpack.c.l.b16 %v1093
      %v1112 = vunpack.c.l.b16 %v1094
      %v1113 = vunpack.c.l.b16 %v1095
      %v1114 = vunpack.c.l.b16 %v1096
      %v1115 = vunpack.c.l.b16 %v1097
      %v1116 = vunpack.c.l.b16 %v1098
      %v1117 = vunpack.c.l.b16 %v1099
      %v1118 = vpack.c.b16 %v1111, %v1110
      %v1119 = vpack.c.b16 %v1113, %v1112
      %v1120 = vpack.c.b16 %v1115, %v1114
      %v1121 = vpack.c.b16 %v1117, %v1116
      %v1123 = vsel %vm326, %v1118, 0
      %v1126 = vsel %vm326, %v1119, 0
      %v1129 = vsel %vm326, %v1120, 0
      %v1132 = vsel %vm326, %v1121, 0
      %v1135 = vand.u32 %v1101, %v342
      %1137 = vmatprep.subr.bf16.mxu0 0
      %1138 = vmatpush1.bf16.msra.mxu0 %v1135
      %1139 = vmatprep.subr.bf16.mxu0 0
      %1140 = vmatpush1.bf16.msra.mxu0 0
      %1141 = vmatprep.subr.bf16.mxu0 0
      %1142 = vmatpush1.bf16.msra.mxu0 0
      %1143 = vmatprep.subr.bf16.mxu0 0
      %1144 = vmatpush1.bf16.msra.mxu0 0
      %1145 = vmatprep.subr.bf16.mxu0 0
      %1146 = vmatpush1.bf16.msra.mxu0 0
      %1147 = vmatprep.subr.bf16.mxu0 0
      %1148 = vmatpush1.bf16.msra.mxu0 0
      %1149 = vmatprep.subr.bf16.mxu0 0
      %1150 = vmatpush1.bf16.msra.mxu0 0
      %1151 = vmatprep.subr.bf16.mxu0 0
      %1152 = vmatpush1.bf16.msra.mxu0 0
      %1153 = vmatprep.subr.bf16.mxu0 0
      %1154 = vmatpush1.bf16.msra.mxu0 0
      %1155 = vmatprep.subr.bf16.mxu0 0
      %1156 = vmatpush1.bf16.msra.mxu0 0
      %1157 = vmatprep.subr.bf16.mxu0 0
      %1158 = vmatpush1.bf16.msra.mxu0 0
      %1159 = vmatprep.subr.bf16.mxu0 0
      %1160 = vmatpush1.bf16.msra.mxu0 0
      %1161 = vmatprep.subr.bf16.mxu0 0
      %1162 = vmatpush1.bf16.msra.mxu0 0
      %1163 = vmatprep.subr.bf16.mxu0 0
      %1164 = vmatpush1.bf16.msra.mxu0 0
      %1165 = vmatprep.subr.bf16.mxu0 0
      %1166 = vmatpush1.bf16.msra.mxu0 0
      %1167 = vmatprep.subr.bf16.mxu0 0
      %1168 = vmatpush1.bf16.msra.mxu0 0
      %1169 = vmatprep.mubr.bf16.mxu0 0
      %1170 = vmatmul.mubr.bf16.gmra.mrb[0].mxu0 %v1123
      %v1171 = vpop.f32.mrb[0].mxu0
      %v1172 = vadd.f32 0.0, %v1171
      %v1173 = vpop.f32.mrb[0].mxu0
      %v1174 = vpop.f32.mrb[0].mxu0
      %v1175 = vadd.f32 0.0, %v1174
      %v1176 = vpop.f32.mrb[0].mxu0
      %1177 = vmatprep.mubr.bf16.mxu0 0
      %1178 = vmatmul.mubr.bf16.gmra.mrb[0].mxu0 %v1126
      %v1179 = vpop.f32.mrb[0].mxu0
      %v1180 = vadd.f32 0.0, %v1179
      %v1181 = vpop.f32.mrb[0].mxu0
      %v1182 = vpop.f32.mrb[0].mxu0
      %v1183 = vadd.f32 0.0, %v1182
      %v1184 = vpop.f32.mrb[0].mxu0
      %1185 = vmatprep.mubr.bf16.mxu0 0
      %1186 = vmatmul.mubr.bf16.gmra.mrb[0].mxu0 %v1129
      %v1187 = vpop.f32.mrb[0].mxu0
      %v1188 = vadd.f32 0.0, %v1187
      %v1189 = vpop.f32.mrb[0].mxu0
      %v1190 = vpop.f32.mrb[0].mxu0
      %v1191 = vadd.f32 0.0, %v1190
      %v1192 = vpop.f32.mrb[0].mxu0
      %1193 = vmatprep.mubr.bf16.mxu0 0
      %1194 = vmatmul.mubr.bf16.gmra.mrb[0].mxu0 %v1132
      %v1195 = vpop.f32.mrb[0].mxu0
      %v1196 = vadd.f32 0.0, %v1195
      %v1197 = vpop.f32.mrb[0].mxu0
      %v1198 = vpop.f32.mrb[0].mxu0
      %v1199 = vadd.f32 0.0, %v1198
      %v1200 = vpop.f32.mrb[0].mxu0
      %1201 = vdwg.mxu0
      %v1202 = vadd.f32 %v1084, %v1172
      %v1203 = vadd.f32 %v1085, %v1175
      %v1204 = vadd.f32 %v1086, %v1180
      %v1205 = vadd.f32 %v1087, %v1183
      %v1206 = vadd.f32 %v1088, %v1188
      %v1207 = vadd.f32 %v1089, %v1191
      %v1208 = vadd.f32 %v1090, %v1196
      %v1209 = vadd.f32 %v1091, %v1199
      %v1210 = vld [vmem:[%s274] sm:$0xf]
      %v1211 = vld [vmem:[%s274 + $0x4] sm:$0x1]
      %v1212 = vld [vmem:[%s274 + $0x8] sm:$0xf]
      %v1213 = vld [vmem:[%s274 + $0xc] sm:$0x1]
      %v1214 = vld [vmem:[%s274 + $0x10] sm:$0xf]
      %v1215 = vld [vmem:[%s274 + $0x14] sm:$0x1]
      %v1216 = vld [vmem:[%s274 + $0x18] sm:$0xf]
      %v1217 = vld [vmem:[%s274 + $0x1c] sm:$0x1]
      %v1218 = vld [vmem:[%s274 + $0x20] sm:$0xf]
      %v1219 = vld [vmem:[%s274 + $0x24] sm:$0x1]
      %v1220 = vld [vmem:[%s274 + $0x28] sm:$0xf]
      %v1221 = vld [vmem:[%s274 + $0x2c] sm:$0x1]
      %v1222 = vld [vmem:[%s274 + $0x30] sm:$0xf]
      %v1223 = vld [vmem:[%s274 + $0x34] sm:$0x1]
      %v1224 = vld [vmem:[%s274 + $0x38] sm:$0xf]
      %v1225 = vld [vmem:[%s274 + $0x3c] sm:$0x1]
      %v1227 = vshrl.u32 %v1210, 16
      %v1229 = vrot.slane %v1227, 4
      %v1230 = vshll.u32 %v1210, 16
      %v1232 = vrot.slane %v1230, 5
      %v1233 = vor.u32 %v1229, %v1232
      %v1234 = vrot.slane %v1233, 4
      %v1236 = vshll.u32 %v1211, 16
      %v1238 = vrot.slane %v1236, 5
      %v1239 = vsel %vm529, %v1234, %v1238
      %v1241 = vshrl.u32 %v1212, 16
      %v1243 = vrot.slane %v1241, 4
      %v1244 = vshll.u32 %v1212, 16
      %v1246 = vrot.slane %v1244, 5
      %v1247 = vor.u32 %v1243, %v1246
      %v1248 = vrot.slane %v1247, 4
      %v1250 = vshll.u32 %v1213, 16
      %v1252 = vrot.slane %v1250, 5
      %v1253 = vsel %vm529, %v1248, %v1252
      %v1255 = vshrl.u32 %v1214, 16
      %v1257 = vrot.slane %v1255, 4
      %v1258 = vshll.u32 %v1214, 16
      %v1260 = vrot.slane %v1258, 5
      %v1261 = vor.u32 %v1257, %v1260
      %v1262 = vrot.slane %v1261, 4
      %v1264 = vshll.u32 %v1215, 16
      %v1266 = vrot.slane %v1264, 5
      %v1267 = vsel %vm529, %v1262, %v1266
      %v1269 = vshrl.u32 %v1216, 16
      %v1271 = vrot.slane %v1269, 4
      %v1272 = vshll.u32 %v1216, 16
      %v1274 = vrot.slane %v1272, 5
      %v1275 = vor.u32 %v1271, %v1274
      %v1276 = vrot.slane %v1275, 4
      %v1278 = vshll.u32 %v1217, 16
      %v1280 = vrot.slane %v1278, 5
      %v1281 = vsel %vm529, %v1276, %v1280
      %v1283 = vshrl.u32 %v1218, 16
      %v1285 = vrot.slane %v1283, 4
      %v1286 = vshll.u32 %v1218, 16
      %v1288 = vrot.slane %v1286, 5
      %v1289 = vor.u32 %v1285, %v1288
      %v1290 = vrot.slane %v1289, 4
      %v1292 = vshll.u32 %v1219, 16
      %v1294 = vrot.slane %v1292, 5
      %v1295 = vsel %vm529, %v1290, %v1294
      %v1297 = vshrl.u32 %v1220, 16
      %v1299 = vrot.slane %v1297, 4
      %v1300 = vshll.u32 %v1220, 16
      %v1302 = vrot.slane %v1300, 5
      %v1303 = vor.u32 %v1299, %v1302
      %v1304 = vrot.slane %v1303, 4
      %v1306 = vshll.u32 %v1221, 16
      %v1308 = vrot.slane %v1306, 5
      %v1309 = vsel %vm529, %v1304, %v1308
      %v1311 = vshrl.u32 %v1222, 16
      %v1313 = vrot.slane %v1311, 4
      %v1314 = vshll.u32 %v1222, 16
      %v1316 = vrot.slane %v1314, 5
      %v1317 = vor.u32 %v1313, %v1316
      %v1318 = vrot.slane %v1317, 4
      %v1320 = vshll.u32 %v1223, 16
      %v1322 = vrot.slane %v1320, 5
      %v1323 = vsel %vm529, %v1318, %v1322
      %v1325 = vshrl.u32 %v1224, 16
      %v1327 = vrot.slane %v1325, 4
      %v1328 = vshll.u32 %v1224, 16
      %v1330 = vrot.slane %v1328, 5
      %v1331 = vor.u32 %v1327, %v1330
      %v1332 = vrot.slane %v1331, 4
      %v1334 = vshll.u32 %v1225, 16
      %v1336 = vrot.slane %v1334, 5
      %v1337 = vsel %vm529, %v1332, %v1336
      %s1338 = scalar_lea.vmem %s4, 12
      %v1339 = vld [vmem:[%s1338] sm:$0x3]
      %v1340 = vunpack.c.l.b16 %v1239
      %v1341 = vunpack.c.l.b16 %v1253
      %v1342 = vunpack.c.l.b16 %v1267
      %v1343 = vunpack.c.l.b16 %v1281
      %v1344 = vunpack.c.l.b16 %v1295
      %v1345 = vunpack.c.l.b16 %v1309
      %v1346 = vunpack.c.l.b16 %v1323
      %v1347 = vunpack.c.l.b16 %v1337
      %v1348 = vpack.c.b16 %v1341, %v1340
      %v1349 = vpack.c.b16 %v1343, %v1342
      %v1350 = vpack.c.b16 %v1345, %v1344
      %v1351 = vpack.c.b16 %v1347, %v1346
      %v1353 = vsel %vm326, %v1348, 0
      %v1356 = vsel %vm326, %v1349, 0
      %v1359 = vsel %vm326, %v1350, 0
      %v1362 = vsel %vm326, %v1351, 0
      %v1365 = vand.u32 %v1339, %v342
      %1367 = vmatprep.subr.bf16.mxu0 0
      %1368 = vmatpush1.bf16.msra.mxu0 %v1365
      %1369 = vmatprep.subr.bf16.mxu0 0
      %1370 = vmatpush1.bf16.msra.mxu0 0
      %1371 = vmatprep.subr.bf16.mxu0 0
      %1372 = vmatpush1.bf16.msra.mxu0 0
      %1373 = vmatprep.subr.bf16.mxu0 0
      %1374 = vmatpush1.bf16.msra.mxu0 0
      %1375 = vmatprep.subr.bf16.mxu0 0
      %1376 = vmatpush1.bf16.msra.mxu0 0
      %1377 = vmatprep.subr.bf16.mxu0 0
      %1378 = vmatpush1.bf16.msra.mxu0 0
      %1379 = vmatprep.subr.bf16.mxu0 0
      %1380 = vmatpush1.bf16.msra.mxu0 0
      %1381 = vmatprep.subr.bf16.mxu0 0
      %1382 = vmatpush1.bf16.msra.mxu0 0
      %1383 = vmatprep.subr.bf16.mxu0 0
      %1384 = vmatpush1.bf16.msra.mxu0 0
      %1385 = vmatprep.subr.bf16.mxu0 0
      %1386 = vmatpush1.bf16.msra.mxu0 0
      %1387 = vmatprep.subr.bf16.mxu0 0
      %1388 = vmatpush1.bf16.msra.mxu0 0
      %1389 = vmatprep.subr.bf16.mxu0 0
      %1390 = vmatpush1.bf16.msra.mxu0 0
      %1391 = vmatprep.subr.bf16.mxu0 0
      %1392 = vmatpush1.bf16.msra.mxu0 0
      %1393 = vmatprep.subr.bf16.mxu0 0
      %1394 = vmatpush1.bf16.msra.mxu0 0
      %1395 = vmatprep.subr.bf16.mxu0 0
      %1396 = vmatpush1.bf16.msra.mxu0 0
      %1397 = vmatprep.subr.bf16.mxu0 0
      %1398 = vmatpush1.bf16.msra.mxu0 0
      %1399 = vmatprep.mubr.bf16.mxu0 0
      %1400 = vmatmul.mubr.bf16.gmra.mrb[0].mxu0 %v1353
      %v1401 = vpop.f32.mrb[0].mxu0
      %v1402 = vadd.f32 0.0, %v1401
      %v1403 = vpop.f32.mrb[0].mxu0
      %v1404 = vpop.f32.mrb[0].mxu0
      %v1405 = vadd.f32 0.0, %v1404
      %v1406 = vpop.f32.mrb[0].mxu0
      %1407 = vmatprep.mubr.bf16.mxu0 0
      %1408 = vmatmul.mubr.bf16.gmra.mrb[0].mxu0 %v1356
      %v1409 = vpop.f32.mrb[0].mxu0
      %v1410 = vadd.f32 0.0, %v1409
      %v1411 = vpop.f32.mrb[0].mxu0
      %v1412 = vpop.f32.mrb[0].mxu0
      %v1413 = vadd.f32 0.0, %v1412
      %v1414 = vpop.f32.mrb[0].mxu0
      %1415 = vmatprep.mubr.bf16.mxu0 0
      %1416 = vmatmul.mubr.bf16.gmra.mrb[0].mxu0 %v1359
      %v1417 = vpop.f32.mrb[0].mxu0
      %v1418 = vadd.f32 0.0, %v1417
      %v1419 = vpop.f32.mrb[0].mxu0
      %v1420 = vpop.f32.mrb[0].mxu0
      %v1421 = vadd.f32 0.0, %v1420
      %v1422 = vpop.f32.mrb[0].mxu0
      %1423 = vmatprep.mubr.bf16.mxu0 0
      %1424 = vmatmul.mubr.bf16.gmra.mrb[0].mxu0 %v1362
      %v1425 = vpop.f32.mrb[0].mxu0
      %v1426 = vadd.f32 0.0, %v1425
      %v1427 = vpop.f32.mrb[0].mxu0
      %v1428 = vpop.f32.mrb[0].mxu0
      %v1429 = vadd.f32 0.0, %v1428
      %v1430 = vpop.f32.mrb[0].mxu0
      %1431 = vdwg.mxu0
      %v1432 = vadd.f32 %v1202, %v1402
      %v1433 = vadd.f32 %v1203, %v1405
      %v1434 = vadd.f32 %v1204, %v1410
      %v1435 = vadd.f32 %v1205, %v1413
      %v1436 = vadd.f32 %v1206, %v1418
      %v1437 = vadd.f32 %v1207, %v1421
      %v1438 = vadd.f32 %v1208, %v1426
      %v1439 = vadd.f32 %v1209, %v1429
      %v1440 = vld [vmem:[%s279] sm:$0xf]
      %v1441 = vld [vmem:[%s279 + $0x4] sm:$0x1]
      %v1442 = vld [vmem:[%s279 + $0x8] sm:$0xf]
      %v1443 = vld [vmem:[%s279 + $0xc] sm:$0x1]
      %v1444 = vld [vmem:[%s279 + $0x10] sm:$0xf]
      %v1445 = vld [vmem:[%s279 + $0x14] sm:$0x1]
      %v1446 = vld [vmem:[%s279 + $0x18] sm:$0xf]
      %v1447 = vld [vmem:[%s279 + $0x1c] sm:$0x1]
      %v1448 = vld [vmem:[%s279 + $0x20] sm:$0xf]
      %v1449 = vld [vmem:[%s279 + $0x24] sm:$0x1]
      %v1450 = vld [vmem:[%s279 + $0x28] sm:$0xf]
      %v1451 = vld [vmem:[%s279 + $0x2c] sm:$0x1]
      %v1452 = vld [vmem:[%s279 + $0x30] sm:$0xf]
      %v1453 = vld [vmem:[%s279 + $0x34] sm:$0x1]
      %v1454 = vld [vmem:[%s279 + $0x38] sm:$0xf]
      %v1455 = vld [vmem:[%s279 + $0x3c] sm:$0x1]
      %v1457 = vshrl.u32 %v1440, 16
      %v1459 = vrot.slane %v1457, 4
      %v1460 = vshll.u32 %v1440, 16
      %v1462 = vrot.slane %v1460, 5
      %v1463 = vor.u32 %v1459, %v1462
      %v1464 = vrot.slane %v1463, 4
      %v1466 = vshll.u32 %v1441, 16
      %v1468 = vrot.slane %v1466, 5
      %v1469 = vsel %vm529, %v1464, %v1468
      %v1471 = vshrl.u32 %v1442, 16
      %v1473 = vrot.slane %v1471, 4
      %v1474 = vshll.u32 %v1442, 16
      %v1476 = vrot.slane %v1474, 5
      %v1477 = vor.u32 %v1473, %v1476
      %v1478 = vrot.slane %v1477, 4
      %v1480 = vshll.u32 %v1443, 16
      %v1482 = vrot.slane %v1480, 5
      %v1483 = vsel %vm529, %v1478, %v1482
      %v1485 = vshrl.u32 %v1444, 16
      %v1487 = vrot.slane %v1485, 4
      %v1488 = vshll.u32 %v1444, 16
      %v1490 = vrot.slane %v1488, 5
      %v1491 = vor.u32 %v1487, %v1490
      %v1492 = vrot.slane %v1491, 4
      %v1494 = vshll.u32 %v1445, 16
      %v1496 = vrot.slane %v1494, 5
      %v1497 = vsel %vm529, %v1492, %v1496
      %v1499 = vshrl.u32 %v1446, 16
      %v1501 = vrot.slane %v1499, 4
      %v1502 = vshll.u32 %v1446, 16
      %v1504 = vrot.slane %v1502, 5
      %v1505 = vor.u32 %v1501, %v1504
      %v1506 = vrot.slane %v1505, 4
      %v1508 = vshll.u32 %v1447, 16
      %v1510 = vrot.slane %v1508, 5
      %v1511 = vsel %vm529, %v1506, %v1510
      %v1513 = vshrl.u32 %v1448, 16
      %v1515 = vrot.slane %v1513, 4
      %v1516 = vshll.u32 %v1448, 16
      %v1518 = vrot.slane %v1516, 5
      %v1519 = vor.u32 %v1515, %v1518
      %v1520 = vrot.slane %v1519, 4
      %v1522 = vshll.u32 %v1449, 16
      %v1524 = vrot.slane %v1522, 5
      %v1525 = vsel %vm529, %v1520, %v1524
      %v1527 = vshrl.u32 %v1450, 16
      %v1529 = vrot.slane %v1527, 4
      %v1530 = vshll.u32 %v1450, 16
      %v1532 = vrot.slane %v1530, 5
      %v1533 = vor.u32 %v1529, %v1532
      %v1534 = vrot.slane %v1533, 4
      %v1536 = vshll.u32 %v1451, 16
      %v1538 = vrot.slane %v1536, 5
      %v1539 = vsel %vm529, %v1534, %v1538
      %v1541 = vshrl.u32 %v1452, 16
      %v1543 = vrot.slane %v1541, 4
      %v1544 = vshll.u32 %v1452, 16
      %v1546 = vrot.slane %v1544, 5
      %v1547 = vor.u32 %v1543, %v1546
      %v1548 = vrot.slane %v1547, 4
      %v1550 = vshll.u32 %v1453, 16
      %v1552 = vrot.slane %v1550, 5
      %v1553 = vsel %vm529, %v1548, %v1552
      %v1555 = vshrl.u32 %v1454, 16
      %v1557 = vrot.slane %v1555, 4
      %v1558 = vshll.u32 %v1454, 16
      %v1560 = vrot.slane %v1558, 5
      %v1561 = vor.u32 %v1557, %v1560
      %v1562 = vrot.slane %v1561, 4
      %v1564 = vshll.u32 %v1455, 16
      %v1566 = vrot.slane %v1564, 5
      %v1567 = vsel %vm529, %v1562, %v1566
      %s1568 = scalar_lea.vmem %s4, 14
      %v1569 = vld [vmem:[%s1568] sm:$0x3]
      %v1570 = vunpack.c.l.b16 %v1469
      %v1571 = vunpack.c.l.b16 %v1483
      %v1572 = vunpack.c.l.b16 %v1497
      %v1573 = vunpack.c.l.b16 %v1511
      %v1574 = vunpack.c.l.b16 %v1525
      %v1575 = vunpack.c.l.b16 %v1539
      %v1576 = vunpack.c.l.b16 %v1553
      %v1577 = vunpack.c.l.b16 %v1567
      %v1578 = vpack.c.b16 %v1571, %v1570
      %v1579 = vpack.c.b16 %v1573, %v1572
      %v1580 = vpack.c.b16 %v1575, %v1574
      %v1581 = vpack.c.b16 %v1577, %v1576
      %v1583 = vsel %vm326, %v1578, 0
      %v1586 = vsel %vm326, %v1579, 0
      %v1589 = vsel %vm326, %v1580, 0
      %v1592 = vsel %vm326, %v1581, 0
      %v1595 = vand.u32 %v1569, %v342
      %1597 = vmatprep.subr.bf16.mxu0 0
      %1598 = vmatpush1.bf16.msra.mxu0 %v1595
      %1599 = vmatprep.subr.bf16.mxu0 0
      %1600 = vmatpush1.bf16.msra.mxu0 0
      %1601 = vmatprep.subr.bf16.mxu0 0
      %1602 = vmatpush1.bf16.msra.mxu0 0
      %1603 = vmatprep.subr.bf16.mxu0 0
      %1604 = vmatpush1.bf16.msra.mxu0 0
      %1605 = vmatprep.subr.bf16.mxu0 0
      %1606 = vmatpush1.bf16.msra.mxu0 0
      %1607 = vmatprep.subr.bf16.mxu0 0
      %1608 = vmatpush1.bf16.msra.mxu0 0
      %1609 = vmatprep.subr.bf16.mxu0 0
      %1610 = vmatpush1.bf16.msra.mxu0 0
      %1611 = vmatprep.subr.bf16.mxu0 0
      %1612 = vmatpush1.bf16.msra.mxu0 0
      %1613 = vmatprep.subr.bf16.mxu0 0
      %1614 = vmatpush1.bf16.msra.mxu0 0
      %1615 = vmatprep.subr.bf16.mxu0 0
      %1616 = vmatpush1.bf16.msra.mxu0 0
      %1617 = vmatprep.subr.bf16.mxu0 0
      %1618 = vmatpush1.bf16.msra.mxu0 0
      %1619 = vmatprep.subr.bf16.mxu0 0
      %1620 = vmatpush1.bf16.msra.mxu0 0
      %1621 = vmatprep.subr.bf16.mxu0 0
      %1622 = vmatpush1.bf16.msra.mxu0 0
      %1623 = vmatprep.subr.bf16.mxu0 0
      %1624 = vmatpush1.bf16.msra.mxu0 0
      %1625 = vmatprep.subr.bf16.mxu0 0
      %1626 = vmatpush1.bf16.msra.mxu0 0
      %1627 = vmatprep.subr.bf16.mxu0 0
      %1628 = vmatpush1.bf16.msra.mxu0 0
      %1629 = vmatprep.mubr.bf16.mxu0 0
      %1630 = vmatmul.mubr.bf16.gmra.mrb[0].mxu0 %v1583
      %v1631 = vpop.f32.mrb[0].mxu0
      %v1632 = vadd.f32 0.0, %v1631
      %v1633 = vpop.f32.mrb[0].mxu0
      %v1634 = vpop.f32.mrb[0].mxu0
      %v1635 = vadd.f32 0.0, %v1634
      %v1636 = vpop.f32.mrb[0].mxu0
      %1637 = vmatprep.mubr.bf16.mxu0 0
      %1638 = vmatmul.mubr.bf16.gmra.mrb[0].mxu0 %v1586
      %v1639 = vpop.f32.mrb[0].mxu0
      %v1640 = vadd.f32 0.0, %v1639
      %v1641 = vpop.f32.mrb[0].mxu0
      %v1642 = vpop.f32.mrb[0].mxu0
      %v1643 = vadd.f32 0.0, %v1642
      %v1644 = vpop.f32.mrb[0].mxu0
      %1645 = vmatprep.mubr.bf16.mxu0 0
      %1646 = vmatmul.mubr.bf16.gmra.mrb[0].mxu0 %v1589
      %v1647 = vpop.f32.mrb[0].mxu0
      %v1648 = vadd.f32 0.0, %v1647
      %v1649 = vpop.f32.mrb[0].mxu0
      %v1650 = vpop.f32.mrb[0].mxu0
      %v1651 = vadd.f32 0.0, %v1650
      %v1652 = vpop.f32.mrb[0].mxu0
      %1653 = vmatprep.mubr.bf16.mxu0 0
      %1654 = vmatmul.mubr.bf16.gmra.mrb[0].mxu0 %v1592
      %v1655 = vpop.f32.mrb[0].mxu0
      %v1656 = vadd.f32 0.0, %v1655
      %v1657 = vpop.f32.mrb[0].mxu0
      %v1658 = vpop.f32.mrb[0].mxu0
      %v1659 = vadd.f32 0.0, %v1658
      %v1660 = vpop.f32.mrb[0].mxu0
      %1661 = vdwg.mxu0
      %v1662 = vadd.f32 %v1432, %v1632
      %v1663 = vadd.f32 %v1433, %v1635
      %v1664 = vadd.f32 %v1434, %v1640
      %v1665 = vadd.f32 %v1435, %v1643
      %v1666 = vadd.f32 %v1436, %v1648
      %v1667 = vadd.f32 %v1437, %v1651
      %v1668 = vadd.f32 %v1438, %v1656
      %v1669 = vadd.f32 %v1439, %v1659
      %s1670 = scalar_lea.vmem %s264, 8
      %v1671 = vld [vmem:[%s1670] sm:$0xf]
      %v1672 = vld [vmem:[%s1670 + $0x8] sm:$0xf]
      %v1673 = vld [vmem:[%s1670 + $0x10] sm:$0xf]
      %v1674 = vld [vmem:[%s1670 + $0x18] sm:$0xf]
      %v1675 = vld [vmem:[%s1670 + $0x20] sm:$0xf]
      %v1676 = vld [vmem:[%s1670 + $0x28] sm:$0xf]
      %v1677 = vld [vmem:[%s1670 + $0x30] sm:$0xf]
      %v1678 = vld [vmem:[%s1670 + $0x38] sm:$0xf]
      %s1679 = scalar_lea.vmem %s4, 16
      %v1680 = vld [vmem:[%s1679] sm:$0x3]
      %v1689 = vunpack.c.l.b16 %v1671
      %v1690 = vunpack.c.l.b16 %v1672
      %v1691 = vunpack.c.l.b16 %v1673
      %v1692 = vunpack.c.l.b16 %v1674
      %v1693 = vunpack.c.l.b16 %v1675
      %v1694 = vunpack.c.l.b16 %v1676
      %v1695 = vunpack.c.l.b16 %v1677
      %v1696 = vunpack.c.l.b16 %v1678
      %v1697 = vpack.c.b16 %v1690, %v1689
      %v1698 = vpack.c.b16 %v1692, %v1691
      %v1699 = vpack.c.b16 %v1694, %v1693
      %v1700 = vpack.c.b16 %v1696, %v1695
      %v1702 = vsel %vm326, %v1697, 0
      %v1705 = vsel %vm326, %v1698, 0
      %v1708 = vsel %vm326, %v1699, 0
      %v1711 = vsel %vm326, %v1700, 0
      %v1714 = vand.u32 %v1680, %v342
      %1716 = vmatprep.subr.bf16.mxu0 0
      %1717 = vmatpush1.bf16.msra.mxu0 %v1714
      %1718 = vmatprep.subr.bf16.mxu0 0
      %1719 = vmatpush1.bf16.msra.mxu0 0
      %1720 = vmatprep.subr.bf16.mxu0 0
      %1721 = vmatpush1.bf16.msra.mxu0 0
      %1722 = vmatprep.subr.bf16.mxu0 0
      %1723 = vmatpush1.bf16.msra.mxu0 0
      %1724 = vmatprep.subr.bf16.mxu0 0
      %1725 = vmatpush1.bf16.msra.mxu0 0
      %1726 = vmatprep.subr.bf16.mxu0 0
      %1727 = vmatpush1.bf16.msra.mxu0 0
      %1728 = vmatprep.subr.bf16.mxu0 0
      %1729 = vmatpush1.bf16.msra.mxu0 0
      %1730 = vmatprep.subr.bf16.mxu0 0
      %1731 = vmatpush1.bf16.msra.mxu0 0
      %1732 = vmatprep.subr.bf16.mxu0 0
      %1733 = vmatpush1.bf16.msra.mxu0 0
      %1734 = vmatprep.subr.bf16.mxu0 0
      %1735 = vmatpush1.bf16.msra.mxu0 0
      %1736 = vmatprep.subr.bf16.mxu0 0
      %1737 = vmatpush1.bf16.msra.mxu0 0
      %1738 = vmatprep.subr.bf16.mxu0 0
      %1739 = vmatpush1.bf16.msra.mxu0 0
      %1740 = vmatprep.subr.bf16.mxu0 0
      %1741 = vmatpush1.bf16.msra.mxu0 0
      %1742 = vmatprep.subr.bf16.mxu0 0
      %1743 = vmatpush1.bf16.msra.mxu0 0
      %1744 = vmatprep.subr.bf16.mxu0 0
      %1745 = vmatpush1.bf16.msra.mxu0 0
      %1746 = vmatprep.subr.bf16.mxu0 0
      %1747 = vmatpush1.bf16.msra.mxu0 0
      %1748 = vmatprep.mubr.bf16.mxu0 0
      %1749 = vmatmul.mubr.bf16.gmra.mrb[0].mxu0 %v1702
      %v1750 = vpop.f32.mrb[0].mxu0
      %v1751 = vadd.f32 0.0, %v1750
      %v1752 = vpop.f32.mrb[0].mxu0
      %v1753 = vpop.f32.mrb[0].mxu0
      %v1754 = vadd.f32 0.0, %v1753
      %v1755 = vpop.f32.mrb[0].mxu0
      %1756 = vmatprep.mubr.bf16.mxu0 0
      %1757 = vmatmul.mubr.bf16.gmra.mrb[0].mxu0 %v1705
      %v1758 = vpop.f32.mrb[0].mxu0
      %v1759 = vadd.f32 0.0, %v1758
      %v1760 = vpop.f32.mrb[0].mxu0
      %v1761 = vpop.f32.mrb[0].mxu0
      %v1762 = vadd.f32 0.0, %v1761
      %v1763 = vpop.f32.mrb[0].mxu0
      %1764 = vmatprep.mubr.bf16.mxu0 0
      %1765 = vmatmul.mubr.bf16.gmra.mrb[0].mxu0 %v1708
      %v1766 = vpop.f32.mrb[0].mxu0
      %v1767 = vadd.f32 0.0, %v1766
      %v1768 = vpop.f32.mrb[0].mxu0
      %v1769 = vpop.f32.mrb[0].mxu0
      %v1770 = vadd.f32 0.0, %v1769
      %v1771 = vpop.f32.mrb[0].mxu0
      %1772 = vmatprep.mubr.bf16.mxu0 0
      %1773 = vmatmul.mubr.bf16.gmra.mrb[0].mxu0 %v1711
      %v1774 = vpop.f32.mrb[0].mxu0
      %v1775 = vadd.f32 0.0, %v1774
      %v1776 = vpop.f32.mrb[0].mxu0
      %v1777 = vpop.f32.mrb[0].mxu0
      %v1778 = vadd.f32 0.0, %v1777
      %v1779 = vpop.f32.mrb[0].mxu0
      %1780 = vdwg.mxu0
      %v1781 = vadd.f32 %v1662, %v1751
      %v1782 = vadd.f32 %v1663, %v1754
      %v1783 = vadd.f32 %v1664, %v1759
      %v1784 = vadd.f32 %v1665, %v1762
      %v1785 = vadd.f32 %v1666, %v1767
      %v1786 = vadd.f32 %v1667, %v1770
      %v1787 = vadd.f32 %v1668, %v1775
      %v1788 = vadd.f32 %v1669, %v1778
      %s1789 = scalar_lea.vmem %s269, 8
      %v1790 = vld [vmem:[%s1789] sm:$0xf]
      %v1791 = vld [vmem:[%s1789 + $0x8] sm:$0xf]
      %v1792 = vld [vmem:[%s1789 + $0x10] sm:$0xf]
      %v1793 = vld [vmem:[%s1789 + $0x18] sm:$0xf]
      %v1794 = vld [vmem:[%s1789 + $0x20] sm:$0xf]
      %v1795 = vld [vmem:[%s1789 + $0x28] sm:$0xf]
      %v1796 = vld [vmem:[%s1789 + $0x30] sm:$0xf]
      %v1797 = vld [vmem:[%s1789 + $0x38] sm:$0xf]
      %s1798 = scalar_lea.vmem %s4, 18
      %v1799 = vld [vmem:[%s1798] sm:$0x3]
      %v1808 = vunpack.c.l.b16 %v1790
      %v1809 = vunpack.c.l.b16 %v1791
      %v1810 = vunpack.c.l.b16 %v1792
      %v1811 = vunpack.c.l.b16 %v1793
      %v1812 = vunpack.c.l.b16 %v1794
      %v1813 = vunpack.c.l.b16 %v1795
      %v1814 = vunpack.c.l.b16 %v1796
      %v1815 = vunpack.c.l.b16 %v1797
      %v1816 = vpack.c.b16 %v1809, %v1808
      %v1817 = vpack.c.b16 %v1811, %v1810
      %v1818 = vpack.c.b16 %v1813, %v1812
      %v1819 = vpack.c.b16 %v1815, %v1814
      %v1821 = vsel %vm326, %v1816, 0
      %v1824 = vsel %vm326, %v1817, 0
      %v1827 = vsel %vm326, %v1818, 0
      %v1830 = vsel %vm326, %v1819, 0
      %v1833 = vand.u32 %v1799, %v342
      %1835 = vmatprep.subr.bf16.mxu0 0
      %1836 = vmatpush1.bf16.msra.mxu0 %v1833
      %1837 = vmatprep.subr.bf16.mxu0 0
      %1838 = vmatpush1.bf16.msra.mxu0 0
      %1839 = vmatprep.subr.bf16.mxu0 0
      %1840 = vmatpush1.bf16.msra.mxu0 0
      %1841 = vmatprep.subr.bf16.mxu0 0
      %1842 = vmatpush1.bf16.msra.mxu0 0
      %1843 = vmatprep.subr.bf16.mxu0 0
      %1844 = vmatpush1.bf16.msra.mxu0 0
      %1845 = vmatprep.subr.bf16.mxu0 0
      %1846 = vmatpush1.bf16.msra.mxu0 0
      %1847 = vmatprep.subr.bf16.mxu0 0
      %1848 = vmatpush1.bf16.msra.mxu0 0
      %1849 = vmatprep.subr.bf16.mxu0 0
      %1850 = vmatpush1.bf16.msra.mxu0 0
      %1851 = vmatprep.subr.bf16.mxu0 0
      %1852 = vmatpush1.bf16.msra.mxu0 0
      %1853 = vmatprep.subr.bf16.mxu0 0
      %1854 = vmatpush1.bf16.msra.mxu0 0
      %1855 = vmatprep.subr.bf16.mxu0 0
      %1856 = vmatpush1.bf16.msra.mxu0 0
      %1857 = vmatprep.subr.bf16.mxu0 0
      %1858 = vmatpush1.bf16.msra.mxu0 0
      %1859 = vmatprep.subr.bf16.mxu0 0
      %1860 = vmatpush1.bf16.msra.mxu0 0
      %1861 = vmatprep.subr.bf16.mxu0 0
      %1862 = vmatpush1.bf16.msra.mxu0 0
      %1863 = vmatprep.subr.bf16.mxu0 0
      %1864 = vmatpush1.bf16.msra.mxu0 0
      %1865 = vmatprep.subr.bf16.mxu0 0
      %1866 = vmatpush1.bf16.msra.mxu0 0
      %1867 = vmatprep.mubr.bf16.mxu0 0
      %1868 = vmatmul.mubr.bf16.gmra.mrb[0].mxu0 %v1821
      %v1869 = vpop.f32.mrb[0].mxu0
      %v1870 = vadd.f32 0.0, %v1869
      %v1871 = vpop.f32.mrb[0].mxu0
      %v1872 = vpop.f32.mrb[0].mxu0
      %v1873 = vadd.f32 0.0, %v1872
      %v1874 = vpop.f32.mrb[0].mxu0
      %1875 = vmatprep.mubr.bf16.mxu0 0
      %1876 = vmatmul.mubr.bf16.gmra.mrb[0].mxu0 %v1824
      %v1877 = vpop.f32.mrb[0].mxu0
      %v1878 = vadd.f32 0.0, %v1877
      %v1879 = vpop.f32.mrb[0].mxu0
      %v1880 = vpop.f32.mrb[0].mxu0
      %v1881 = vadd.f32 0.0, %v1880
      %v1882 = vpop.f32.mrb[0].mxu0
      %1883 = vmatprep.mubr.bf16.mxu0 0
      %1884 = vmatmul.mubr.bf16.gmra.mrb[0].mxu0 %v1827
      %v1885 = vpop.f32.mrb[0].mxu0
      %v1886 = vadd.f32 0.0, %v1885
      %v1887 = vpop.f32.mrb[0].mxu0
      %v1888 = vpop.f32.mrb[0].mxu0
      %v1889 = vadd.f32 0.0, %v1888
      %v1890 = vpop.f32.mrb[0].mxu0
      %1891 = vmatprep.mubr.bf16.mxu0 0
      %1892 = vmatmul.mubr.bf16.gmra.mrb[0].mxu0 %v1830
      %v1893 = vpop.f32.mrb[0].mxu0
      %v1894 = vadd.f32 0.0, %v1893
      %v1895 = vpop.f32.mrb[0].mxu0
      %v1896 = vpop.f32.mrb[0].mxu0
      %v1897 = vadd.f32 0.0, %v1896
      %v1898 = vpop.f32.mrb[0].mxu0
      %1899 = vdwg.mxu0
      %v1900 = vadd.f32 %v1781, %v1870
      %v1901 = vadd.f32 %v1782, %v1873
      %v1902 = vadd.f32 %v1783, %v1878
      %v1903 = vadd.f32 %v1784, %v1881
      %v1904 = vadd.f32 %v1785, %v1886
      %v1905 = vadd.f32 %v1786, %v1889
      %v1906 = vadd.f32 %v1787, %v1894
      %v1907 = vadd.f32 %v1788, %v1897
      %v1908 = vld [vmem:[%s1670] sm:$0xf]
      %v1909 = vld [vmem:[%s1670 + $0x4] sm:$0x1]
      %v1910 = vld [vmem:[%s1670 + $0x8] sm:$0xf]
      %v1911 = vld [vmem:[%s1670 + $0xc] sm:$0x1]
      %v1912 = vld [vmem:[%s1670 + $0x10] sm:$0xf]
      %v1913 = vld [vmem:[%s1670 + $0x14] sm:$0x1]
      %v1914 = vld [vmem:[%s1670 + $0x18] sm:$0xf]
      %v1915 = vld [vmem:[%s1670 + $0x1c] sm:$0x1]
      %v1916 = vld [vmem:[%s1670 + $0x20] sm:$0xf]
      %v1917 = vld [vmem:[%s1670 + $0x24] sm:$0x1]
      %v1918 = vld [vmem:[%s1670 + $0x28] sm:$0xf]
      %v1919 = vld [vmem:[%s1670 + $0x2c] sm:$0x1]
      %v1920 = vld [vmem:[%s1670 + $0x30] sm:$0xf]
      %v1921 = vld [vmem:[%s1670 + $0x34] sm:$0x1]
      %v1922 = vld [vmem:[%s1670 + $0x38] sm:$0xf]
      %v1923 = vld [vmem:[%s1670 + $0x3c] sm:$0x1]
      %v1925 = vshrl.u32 %v1908, 16
      %v1927 = vrot.slane %v1925, 4
      %v1928 = vshll.u32 %v1908, 16
      %v1930 = vrot.slane %v1928, 5
      %v1931 = vor.u32 %v1927, %v1930
      %v1932 = vrot.slane %v1931, 4
      %v1934 = vshll.u32 %v1909, 16
      %v1936 = vrot.slane %v1934, 5
      %v1937 = vsel %vm529, %v1932, %v1936
      %v1939 = vshrl.u32 %v1910, 16
      %v1941 = vrot.slane %v1939, 4
      %v1942 = vshll.u32 %v1910, 16
      %v1944 = vrot.slane %v1942, 5
      %v1945 = vor.u32 %v1941, %v1944
      %v1946 = vrot.slane %v1945, 4
      %v1948 = vshll.u32 %v1911, 16
      %v1950 = vrot.slane %v1948, 5
      %v1951 = vsel %vm529, %v1946, %v1950
      %v1953 = vshrl.u32 %v1912, 16
      %v1955 = vrot.slane %v1953, 4
      %v1956 = vshll.u32 %v1912, 16
      %v1958 = vrot.slane %v1956, 5
      %v1959 = vor.u32 %v1955, %v1958
      %v1960 = vrot.slane %v1959, 4
      %v1962 = vshll.u32 %v1913, 16
      %v1964 = vrot.slane %v1962, 5
      %v1965 = vsel %vm529, %v1960, %v1964
      %v1967 = vshrl.u32 %v1914, 16
      %v1969 = vrot.slane %v1967, 4
      %v1970 = vshll.u32 %v1914, 16
      %v1972 = vrot.slane %v1970, 5
      %v1973 = vor.u32 %v1969, %v1972
      %v1974 = vrot.slane %v1973, 4
      %v1976 = vshll.u32 %v1915, 16
      %v1978 = vrot.slane %v1976, 5
      %v1979 = vsel %vm529, %v1974, %v1978
      %v1981 = vshrl.u32 %v1916, 16
      %v1983 = vrot.slane %v1981, 4
      %v1984 = vshll.u32 %v1916, 16
      %v1986 = vrot.slane %v1984, 5
      %v1987 = vor.u32 %v1983, %v1986
      %v1988 = vrot.slane %v1987, 4
      %v1990 = vshll.u32 %v1917, 16
      %v1992 = vrot.slane %v1990, 5
      %v1993 = vsel %vm529, %v1988, %v1992
      %v1995 = vshrl.u32 %v1918, 16
      %v1997 = vrot.slane %v1995, 4
      %v1998 = vshll.u32 %v1918, 16
      %v2000 = vrot.slane %v1998, 5
      %v2001 = vor.u32 %v1997, %v2000
      %v2002 = vrot.slane %v2001, 4
      %v2004 = vshll.u32 %v1919, 16
      %v2006 = vrot.slane %v2004, 5
      %v2007 = vsel %vm529, %v2002, %v2006
      %v2009 = vshrl.u32 %v1920, 16
      %v2011 = vrot.slane %v2009, 4
      %v2012 = vshll.u32 %v1920, 16
      %v2014 = vrot.slane %v2012, 5
      %v2015 = vor.u32 %v2011, %v2014
      %v2016 = vrot.slane %v2015, 4
      %v2018 = vshll.u32 %v1921, 16
      %v2020 = vrot.slane %v2018, 5
      %v2021 = vsel %vm529, %v2016, %v2020
      %v2023 = vshrl.u32 %v1922, 16
      %v2025 = vrot.slane %v2023, 4
      %v2026 = vshll.u32 %v1922, 16
      %v2028 = vrot.slane %v2026, 5
      %v2029 = vor.u32 %v2025, %v2028
      %v2030 = vrot.slane %v2029, 4
      %v2032 = vshll.u32 %v1923, 16
      %v2034 = vrot.slane %v2032, 5
      %v2035 = vsel %vm529, %v2030, %v2034
      %s2036 = scalar_lea.vmem %s4, 20
      %v2037 = vld [vmem:[%s2036] sm:$0x3]
      %v2038 = vunpack.c.l.b16 %v1937
      %v2039 = vunpack.c.l.b16 %v1951
      %v2040 = vunpack.c.l.b16 %v1965
      %v2041 = vunpack.c.l.b16 %v1979
      %v2042 = vunpack.c.l.b16 %v1993
      %v2043 = vunpack.c.l.b16 %v2007
      %v2044 = vunpack.c.l.b16 %v2021
      %v2045 = vunpack.c.l.b16 %v2035
      %v2046 = vpack.c.b16 %v2039, %v2038
      %v2047 = vpack.c.b16 %v2041, %v2040
      %v2048 = vpack.c.b16 %v2043, %v2042
      %v2049 = vpack.c.b16 %v2045, %v2044
      %v2051 = vsel %vm326, %v2046, 0
      %v2054 = vsel %vm326, %v2047, 0
      %v2057 = vsel %vm326, %v2048, 0
      %v2060 = vsel %vm326, %v2049, 0
      %v2063 = vand.u32 %v2037, %v342
      %2065 = vmatprep.subr.bf16.mxu0 0
      %2066 = vmatpush1.bf16.msra.mxu0 %v2063
      %2067 = vmatprep.subr.bf16.mxu0 0
      %2068 = vmatpush1.bf16.msra.mxu0 0
      %2069 = vmatprep.subr.bf16.mxu0 0
      %2070 = vmatpush1.bf16.msra.mxu0 0
      %2071 = vmatprep.subr.bf16.mxu0 0
      %2072 = vmatpush1.bf16.msra.mxu0 0
      %2073 = vmatprep.subr.bf16.mxu0 0
      %2074 = vmatpush1.bf16.msra.mxu0 0
      %2075 = vmatprep.subr.bf16.mxu0 0
      %2076 = vmatpush1.bf16.msra.mxu0 0
      %2077 = vmatprep.subr.bf16.mxu0 0
      %2078 = vmatpush1.bf16.msra.mxu0 0
      %2079 = vmatprep.subr.bf16.mxu0 0
      %2080 = vmatpush1.bf16.msra.mxu0 0
      %2081 = vmatprep.subr.bf16.mxu0 0
      %2082 = vmatpush1.bf16.msra.mxu0 0
      %2083 = vmatprep.subr.bf16.mxu0 0
      %2084 = vmatpush1.bf16.msra.mxu0 0
      %2085 = vmatprep.subr.bf16.mxu0 0
      %2086 = vmatpush1.bf16.msra.mxu0 0
      %2087 = vmatprep.subr.bf16.mxu0 0
      %2088 = vmatpush1.bf16.msra.mxu0 0
      %2089 = vmatprep.subr.bf16.mxu0 0
      %2090 = vmatpush1.bf16.msra.mxu0 0
      %2091 = vmatprep.subr.bf16.mxu0 0
      %2092 = vmatpush1.bf16.msra.mxu0 0
      %2093 = vmatprep.subr.bf16.mxu0 0
      %2094 = vmatpush1.bf16.msra.mxu0 0
      %2095 = vmatprep.subr.bf16.mxu0 0
      %2096 = vmatpush1.bf16.msra.mxu0 0
      %2097 = vmatprep.mubr.bf16.mxu0 0
      %2098 = vmatmul.mubr.bf16.gmra.mrb[0].mxu0 %v2051
      %v2099 = vpop.f32.mrb[0].mxu0
      %v2100 = vadd.f32 0.0, %v2099
      %v2101 = vpop.f32.mrb[0].mxu0
      %v2102 = vpop.f32.mrb[0].mxu0
      %v2103 = vadd.f32 0.0, %v2102
      %v2104 = vpop.f32.mrb[0].mxu0
      %2105 = vmatprep.mubr.bf16.mxu0 0
      %2106 = vmatmul.mubr.bf16.gmra.mrb[0].mxu0 %v2054
      %v2107 = vpop.f32.mrb[0].mxu0
      %v2108 = vadd.f32 0.0, %v2107
      %v2109 = vpop.f32.mrb[0].mxu0
      %v2110 = vpop.f32.mrb[0].mxu0
      %v2111 = vadd.f32 0.0, %v2110
      %v2112 = vpop.f32.mrb[0].mxu0
      %2113 = vmatprep.mubr.bf16.mxu0 0
      %2114 = vmatmul.mubr.bf16.gmra.mrb[0].mxu0 %v2057
      %v2115 = vpop.f32.mrb[0].mxu0
      %v2116 = vadd.f32 0.0, %v2115
      %v2117 = vpop.f32.mrb[0].mxu0
      %v2118 = vpop.f32.mrb[0].mxu0
      %v2119 = vadd.f32 0.0, %v2118
      %v2120 = vpop.f32.mrb[0].mxu0
      %2121 = vmatprep.mubr.bf16.mxu0 0
      %2122 = vmatmul.mubr.bf16.gmra.mrb[0].mxu0 %v2060
      %v2123 = vpop.f32.mrb[0].mxu0
      %v2124 = vadd.f32 0.0, %v2123
      %v2125 = vpop.f32.mrb[0].mxu0
      %v2126 = vpop.f32.mrb[0].mxu0
      %v2127 = vadd.f32 0.0, %v2126
      %v2128 = vpop.f32.mrb[0].mxu0
      %2129 = vdwg.mxu0
      %v2130 = vadd.f32 %v1900, %v2100
      %v2131 = vadd.f32 %v1901, %v2103
      %v2132 = vadd.f32 %v1902, %v2108
      %v2133 = vadd.f32 %v1903, %v2111
      %v2134 = vadd.f32 %v1904, %v2116
      %v2135 = vadd.f32 %v1905, %v2119
      %v2136 = vadd.f32 %v1906, %v2124
      %v2137 = vadd.f32 %v1907, %v2127
      %v2138 = vld [vmem:[%s1789] sm:$0xf]
      %v2139 = vld [vmem:[%s1789 + $0x4] sm:$0x1]
      %v2140 = vld [vmem:[%s1789 + $0x8] sm:$0xf]
      %v2141 = vld [vmem:[%s1789 + $0xc] sm:$0x1]
      %v2142 = vld [vmem:[%s1789 + $0x10] sm:$0xf]
      %v2143 = vld [vmem:[%s1789 + $0x14] sm:$0x1]
      %v2144 = vld [vmem:[%s1789 + $0x18] sm:$0xf]
      %v2145 = vld [vmem:[%s1789 + $0x1c] sm:$0x1]
      %v2146 = vld [vmem:[%s1789 + $0x20] sm:$0xf]
      %v2147 = vld [vmem:[%s1789 + $0x24] sm:$0x1]
      %v2148 = vld [vmem:[%s1789 + $0x28] sm:$0xf]
      %v2149 = vld [vmem:[%s1789 + $0x2c] sm:$0x1]
      %v2150 = vld [vmem:[%s1789 + $0x30] sm:$0xf]
      %v2151 = vld [vmem:[%s1789 + $0x34] sm:$0x1]
      %v2152 = vld [vmem:[%s1789 + $0x38] sm:$0xf]
      %v2153 = vld [vmem:[%s1789 + $0x3c] sm:$0x1]
      %v2155 = vshrl.u32 %v2138, 16
      %v2157 = vrot.slane %v2155, 4
      %v2158 = vshll.u32 %v2138, 16
      %v2160 = vrot.slane %v2158, 5
      %v2161 = vor.u32 %v2157, %v2160
      %v2162 = vrot.slane %v2161, 4
      %v2164 = vshll.u32 %v2139, 16
      %v2166 = vrot.slane %v2164, 5
      %v2167 = vsel %vm529, %v2162, %v2166
      %v2169 = vshrl.u32 %v2140, 16
      %v2171 = vrot.slane %v2169, 4
      %v2172 = vshll.u32 %v2140, 16
      %v2174 = vrot.slane %v2172, 5
      %v2175 = vor.u32 %v2171, %v2174
      %v2176 = vrot.slane %v2175, 4
      %v2178 = vshll.u32 %v2141, 16
      %v2180 = vrot.slane %v2178, 5
      %v2181 = vsel %vm529, %v2176, %v2180
      %v2183 = vshrl.u32 %v2142, 16
      %v2185 = vrot.slane %v2183, 4
      %v2186 = vshll.u32 %v2142, 16
      %v2188 = vrot.slane %v2186, 5
      %v2189 = vor.u32 %v2185, %v2188
      %v2190 = vrot.slane %v2189, 4
      %v2192 = vshll.u32 %v2143, 16
      %v2194 = vrot.slane %v2192, 5
      %v2195 = vsel %vm529, %v2190, %v2194
      %v2197 = vshrl.u32 %v2144, 16
      %v2199 = vrot.slane %v2197, 4
      %v2200 = vshll.u32 %v2144, 16
      %v2202 = vrot.slane %v2200, 5
      %v2203 = vor.u32 %v2199, %v2202
      %v2204 = vrot.slane %v2203, 4
      %v2206 = vshll.u32 %v2145, 16
      %v2208 = vrot.slane %v2206, 5
      %v2209 = vsel %vm529, %v2204, %v2208
      %v2211 = vshrl.u32 %v2146, 16
      %v2213 = vrot.slane %v2211, 4
      %v2214 = vshll.u32 %v2146, 16
      %v2216 = vrot.slane %v2214, 5
      %v2217 = vor.u32 %v2213, %v2216
      %v2218 = vrot.slane %v2217, 4
      %v2220 = vshll.u32 %v2147, 16
      %v2222 = vrot.slane %v2220, 5
      %v2223 = vsel %vm529, %v2218, %v2222
      %v2225 = vshrl.u32 %v2148, 16
      %v2227 = vrot.slane %v2225, 4
      %v2228 = vshll.u32 %v2148, 16
      %v2230 = vrot.slane %v2228, 5
      %v2231 = vor.u32 %v2227, %v2230
      %v2232 = vrot.slane %v2231, 4
      %v2234 = vshll.u32 %v2149, 16
      %v2236 = vrot.slane %v2234, 5
      %v2237 = vsel %vm529, %v2232, %v2236
      %v2239 = vshrl.u32 %v2150, 16
      %v2241 = vrot.slane %v2239, 4
      %v2242 = vshll.u32 %v2150, 16
      %v2244 = vrot.slane %v2242, 5
      %v2245 = vor.u32 %v2241, %v2244
      %v2246 = vrot.slane %v2245, 4
      %v2248 = vshll.u32 %v2151, 16
      %v2250 = vrot.slane %v2248, 5
      %v2251 = vsel %vm529, %v2246, %v2250
      %v2253 = vshrl.u32 %v2152, 16
      %v2255 = vrot.slane %v2253, 4
      %v2256 = vshll.u32 %v2152, 16
      %v2258 = vrot.slane %v2256, 5
      %v2259 = vor.u32 %v2255, %v2258
      %v2260 = vrot.slane %v2259, 4
      %v2262 = vshll.u32 %v2153, 16
      %v2264 = vrot.slane %v2262, 5
      %v2265 = vsel %vm529, %v2260, %v2264
      %s2266 = scalar_lea.vmem %s4, 22
      %v2267 = vld [vmem:[%s2266] sm:$0x3]
      %v2268 = vunpack.c.l.b16 %v2167
      %v2269 = vunpack.c.l.b16 %v2181
      %v2270 = vunpack.c.l.b16 %v2195
      %v2271 = vunpack.c.l.b16 %v2209
      %v2272 = vunpack.c.l.b16 %v2223
      %v2273 = vunpack.c.l.b16 %v2237
      %v2274 = vunpack.c.l.b16 %v2251
      %v2275 = vunpack.c.l.b16 %v2265
      %v2276 = vpack.c.b16 %v2269, %v2268
      %v2277 = vpack.c.b16 %v2271, %v2270
      %v2278 = vpack.c.b16 %v2273, %v2272
      %v2279 = vpack.c.b16 %v2275, %v2274
      %v2281 = vsel %vm326, %v2276, 0
      %v2284 = vsel %vm326, %v2277, 0
      %v2287 = vsel %vm326, %v2278, 0
      %v2290 = vsel %vm326, %v2279, 0
      %v2293 = vand.u32 %v2267, %v342
      %2295 = vmatprep.subr.bf16.mxu0 0
      %2296 = vmatpush1.bf16.msra.mxu0 %v2293
      %2297 = vmatprep.subr.bf16.mxu0 0
      %2298 = vmatpush1.bf16.msra.mxu0 0
      %2299 = vmatprep.subr.bf16.mxu0 0
      %2300 = vmatpush1.bf16.msra.mxu0 0
      %2301 = vmatprep.subr.bf16.mxu0 0
      %2302 = vmatpush1.bf16.msra.mxu0 0
      %2303 = vmatprep.subr.bf16.mxu0 0
      %2304 = vmatpush1.bf16.msra.mxu0 0
      %2305 = vmatprep.subr.bf16.mxu0 0
      %2306 = vmatpush1.bf16.msra.mxu0 0
      %2307 = vmatprep.subr.bf16.mxu0 0
      %2308 = vmatpush1.bf16.msra.mxu0 0
      %2309 = vmatprep.subr.bf16.mxu0 0
      %2310 = vmatpush1.bf16.msra.mxu0 0
      %2311 = vmatprep.subr.bf16.mxu0 0
      %2312 = vmatpush1.bf16.msra.mxu0 0
      %2313 = vmatprep.subr.bf16.mxu0 0
      %2314 = vmatpush1.bf16.msra.mxu0 0
      %2315 = vmatprep.subr.bf16.mxu0 0
      %2316 = vmatpush1.bf16.msra.mxu0 0
      %2317 = vmatprep.subr.bf16.mxu0 0
      %2318 = vmatpush1.bf16.msra.mxu0 0
      %2319 = vmatprep.subr.bf16.mxu0 0
      %2320 = vmatpush1.bf16.msra.mxu0 0
      %2321 = vmatprep.subr.bf16.mxu0 0
      %2322 = vmatpush1.bf16.msra.mxu0 0
      %2323 = vmatprep.subr.bf16.mxu0 0
      %2324 = vmatpush1.bf16.msra.mxu0 0
      %2325 = vmatprep.subr.bf16.mxu0 0
      %2326 = vmatpush1.bf16.msra.mxu0 0
      %2327 = vmatprep.mubr.bf16.mxu0 0
      %2328 = vmatmul.mubr.bf16.gmra.mrb[0].mxu0 %v2281
      %v2329 = vpop.f32.mrb[0].mxu0
      %v2330 = vadd.f32 0.0, %v2329
      %v2331 = vpop.f32.mrb[0].mxu0
      %v2332 = vpop.f32.mrb[0].mxu0
      %v2333 = vadd.f32 0.0, %v2332
      %v2334 = vpop.f32.mrb[0].mxu0
      %2335 = vmatprep.mubr.bf16.mxu0 0
      %2336 = vmatmul.mubr.bf16.gmra.mrb[0].mxu0 %v2284
      %v2337 = vpop.f32.mrb[0].mxu0
      %v2338 = vadd.f32 0.0, %v2337
      %v2339 = vpop.f32.mrb[0].mxu0
      %v2340 = vpop.f32.mrb[0].mxu0
      %v2341 = vadd.f32 0.0, %v2340
      %v2342 = vpop.f32.mrb[0].mxu0
      %2343 = vmatprep.mubr.bf16.mxu0 0
      %2344 = vmatmul.mubr.bf16.gmra.mrb[0].mxu0 %v2287
      %v2345 = vpop.f32.mrb[0].mxu0
      %v2346 = vadd.f32 0.0, %v2345
      %v2347 = vpop.f32.mrb[0].mxu0
      %v2348 = vpop.f32.mrb[0].mxu0
      %v2349 = vadd.f32 0.0, %v2348
      %v2350 = vpop.f32.mrb[0].mxu0
      %2351 = vmatprep.mubr.bf16.mxu0 0
      %2352 = vmatmul.mubr.bf16.gmra.mrb[0].mxu0 %v2290
      %v2353 = vpop.f32.mrb[0].mxu0
      %v2354 = vadd.f32 0.0, %v2353
      %v2355 = vpop.f32.mrb[0].mxu0
      %v2356 = vpop.f32.mrb[0].mxu0
      %v2357 = vadd.f32 0.0, %v2356
      %v2358 = vpop.f32.mrb[0].mxu0
      %2359 = vdwg.mxu0
      %v2360 = vadd.f32 %v2130, %v2330
      %v2361 = vadd.f32 %v2131, %v2333
      %v2362 = vadd.f32 %v2132, %v2338
      %v2363 = vadd.f32 %v2133, %v2341
      %v2364 = vadd.f32 %v2134, %v2346
      %v2365 = vadd.f32 %v2135, %v2349
      %v2366 = vadd.f32 %v2136, %v2354
      %v2367 = vadd.f32 %v2137, %v2357
      %s2368 = scalar_lea.vmem %s274, 8
      %v2369 = vld [vmem:[%s2368] sm:$0xf]
      %v2370 = vld [vmem:[%s2368 + $0x8] sm:$0xf]
      %v2371 = vld [vmem:[%s2368 + $0x10] sm:$0xf]
      %v2372 = vld [vmem:[%s2368 + $0x18] sm:$0xf]
      %v2373 = vld [vmem:[%s2368 + $0x20] sm:$0xf]
      %v2374 = vld [vmem:[%s2368 + $0x28] sm:$0xf]
      %v2375 = vld [vmem:[%s2368 + $0x30] sm:$0xf]
      %v2376 = vld [vmem:[%s2368 + $0x38] sm:$0xf]
      %s2377 = scalar_lea.vmem %s4, 24
      %v2378 = vld [vmem:[%s2377] sm:$0x3]
      %v2387 = vunpack.c.l.b16 %v2369
      %v2388 = vunpack.c.l.b16 %v2370
      %v2389 = vunpack.c.l.b16 %v2371
      %v2390 = vunpack.c.l.b16 %v2372
      %v2391 = vunpack.c.l.b16 %v2373
      %v2392 = vunpack.c.l.b16 %v2374
      %v2393 = vunpack.c.l.b16 %v2375
      %v2394 = vunpack.c.l.b16 %v2376
      %v2395 = vpack.c.b16 %v2388, %v2387
      %v2396 = vpack.c.b16 %v2390, %v2389
      %v2397 = vpack.c.b16 %v2392, %v2391
      %v2398 = vpack.c.b16 %v2394, %v2393
      %v2400 = vsel %vm326, %v2395, 0
      %v2403 = vsel %vm326, %v2396, 0
      %v2406 = vsel %vm326, %v2397, 0
      %v2409 = vsel %vm326, %v2398, 0
      %v2412 = vand.u32 %v2378, %v342
      %2414 = vmatprep.subr.bf16.mxu0 0
      %2415 = vmatpush1.bf16.msra.mxu0 %v2412
      %2416 = vmatprep.subr.bf16.mxu0 0
      %2417 = vmatpush1.bf16.msra.mxu0 0
      %2418 = vmatprep.subr.bf16.mxu0 0
      %2419 = vmatpush1.bf16.msra.mxu0 0
      %2420 = vmatprep.subr.bf16.mxu0 0
      %2421 = vmatpush1.bf16.msra.mxu0 0
      %2422 = vmatprep.subr.bf16.mxu0 0
      %2423 = vmatpush1.bf16.msra.mxu0 0
      %2424 = vmatprep.subr.bf16.mxu0 0
      %2425 = vmatpush1.bf16.msra.mxu0 0
      %2426 = vmatprep.subr.bf16.mxu0 0
      %2427 = vmatpush1.bf16.msra.mxu0 0
      %2428 = vmatprep.subr.bf16.mxu0 0
      %2429 = vmatpush1.bf16.msra.mxu0 0
      %2430 = vmatprep.subr.bf16.mxu0 0
      %2431 = vmatpush1.bf16.msra.mxu0 0
      %2432 = vmatprep.subr.bf16.mxu0 0
      %2433 = vmatpush1.bf16.msra.mxu0 0
      %2434 = vmatprep.subr.bf16.mxu0 0
      %2435 = vmatpush1.bf16.msra.mxu0 0
      %2436 = vmatprep.subr.bf16.mxu0 0
      %2437 = vmatpush1.bf16.msra.mxu0 0
      %2438 = vmatprep.subr.bf16.mxu0 0
      %2439 = vmatpush1.bf16.msra.mxu0 0
      %2440 = vmatprep.subr.bf16.mxu0 0
      %2441 = vmatpush1.bf16.msra.mxu0 0
      %2442 = vmatprep.subr.bf16.mxu0 0
      %2443 = vmatpush1.bf16.msra.mxu0 0
      %2444 = vmatprep.subr.bf16.mxu0 0
      %2445 = vmatpush1.bf16.msra.mxu0 0
      %2446 = vmatprep.mubr.bf16.mxu0 0
      %2447 = vmatmul.mubr.bf16.gmra.mrb[0].mxu0 %v2400
      %v2448 = vpop.f32.mrb[0].mxu0
      %v2449 = vadd.f32 0.0, %v2448
      %v2450 = vpop.f32.mrb[0].mxu0
      %v2451 = vpop.f32.mrb[0].mxu0
      %v2452 = vadd.f32 0.0, %v2451
      %v2453 = vpop.f32.mrb[0].mxu0
      %2454 = vmatprep.mubr.bf16.mxu0 0
      %2455 = vmatmul.mubr.bf16.gmra.mrb[0].mxu0 %v2403
      %v2456 = vpop.f32.mrb[0].mxu0
      %v2457 = vadd.f32 0.0, %v2456
      %v2458 = vpop.f32.mrb[0].mxu0
      %v2459 = vpop.f32.mrb[0].mxu0
      %v2460 = vadd.f32 0.0, %v2459
      %v2461 = vpop.f32.mrb[0].mxu0
      %2462 = vmatprep.mubr.bf16.mxu0 0
      %2463 = vmatmul.mubr.bf16.gmra.mrb[0].mxu0 %v2406
      %v2464 = vpop.f32.mrb[0].mxu0
      %v2465 = vadd.f32 0.0, %v2464
      %v2466 = vpop.f32.mrb[0].mxu0
      %v2467 = vpop.f32.mrb[0].mxu0
      %v2468 = vadd.f32 0.0, %v2467
      %v2469 = vpop.f32.mrb[0].mxu0
      %2470 = vmatprep.mubr.bf16.mxu0 0
      %2471 = vmatmul.mubr.bf16.gmra.mrb[0].mxu0 %v2409
      %v2472 = vpop.f32.mrb[0].mxu0
      %v2473 = vadd.f32 0.0, %v2472
      %v2474 = vpop.f32.mrb[0].mxu0
      %v2475 = vpop.f32.mrb[0].mxu0
      %v2476 = vadd.f32 0.0, %v2475
      %v2477 = vpop.f32.mrb[0].mxu0
      %2478 = vdwg.mxu0
      %v2479 = vadd.f32 %v2360, %v2449
      %v2480 = vadd.f32 %v2361, %v2452
      %v2481 = vadd.f32 %v2362, %v2457
      %v2482 = vadd.f32 %v2363, %v2460
      %v2483 = vadd.f32 %v2364, %v2465
      %v2484 = vadd.f32 %v2365, %v2468
      %v2485 = vadd.f32 %v2366, %v2473
      %v2486 = vadd.f32 %v2367, %v2476
      %s2487 = scalar_lea.vmem %s279, 8
      %v2488 = vld [vmem:[%s2487] sm:$0xf]
      %v2489 = vld [vmem:[%s2487 + $0x8] sm:$0xf]
      %v2490 = vld [vmem:[%s2487 + $0x10] sm:$0xf]
      %v2491 = vld [vmem:[%s2487 + $0x18] sm:$0xf]
      %v2492 = vld [vmem:[%s2487 + $0x20] sm:$0xf]
      %v2493 = vld [vmem:[%s2487 + $0x28] sm:$0xf]
      %v2494 = vld [vmem:[%s2487 + $0x30] sm:$0xf]
      %v2495 = vld [vmem:[%s2487 + $0x38] sm:$0xf]
      %s2496 = scalar_lea.vmem %s4, 26
      %v2497 = vld [vmem:[%s2496] sm:$0x3]
      %v2506 = vunpack.c.l.b16 %v2488
      %v2507 = vunpack.c.l.b16 %v2489
      %v2508 = vunpack.c.l.b16 %v2490
      %v2509 = vunpack.c.l.b16 %v2491
      %v2510 = vunpack.c.l.b16 %v2492
      %v2511 = vunpack.c.l.b16 %v2493
      %v2512 = vunpack.c.l.b16 %v2494
      %v2513 = vunpack.c.l.b16 %v2495
      %v2514 = vpack.c.b16 %v2507, %v2506
      %v2515 = vpack.c.b16 %v2509, %v2508
      %v2516 = vpack.c.b16 %v2511, %v2510
      %v2517 = vpack.c.b16 %v2513, %v2512
      %v2519 = vsel %vm326, %v2514, 0
      %v2522 = vsel %vm326, %v2515, 0
      %v2525 = vsel %vm326, %v2516, 0
      %v2528 = vsel %vm326, %v2517, 0
      %v2531 = vand.u32 %v2497, %v342
      %2533 = vmatprep.subr.bf16.mxu0 0
      %2534 = vmatpush1.bf16.msra.mxu0 %v2531
      %2535 = vmatprep.subr.bf16.mxu0 0
      %2536 = vmatpush1.bf16.msra.mxu0 0
      %2537 = vmatprep.subr.bf16.mxu0 0
      %2538 = vmatpush1.bf16.msra.mxu0 0
      %2539 = vmatprep.subr.bf16.mxu0 0
      %2540 = vmatpush1.bf16.msra.mxu0 0
      %2541 = vmatprep.subr.bf16.mxu0 0
      %2542 = vmatpush1.bf16.msra.mxu0 0
      %2543 = vmatprep.subr.bf16.mxu0 0
      %2544 = vmatpush1.bf16.msra.mxu0 0
      %2545 = vmatprep.subr.bf16.mxu0 0
      %2546 = vmatpush1.bf16.msra.mxu0 0
      %2547 = vmatprep.subr.bf16.mxu0 0
      %2548 = vmatpush1.bf16.msra.mxu0 0
      %2549 = vmatprep.subr.bf16.mxu0 0
      %2550 = vmatpush1.bf16.msra.mxu0 0
      %2551 = vmatprep.subr.bf16.mxu0 0
      %2552 = vmatpush1.bf16.msra.mxu0 0
      %2553 = vmatprep.subr.bf16.mxu0 0
      %2554 = vmatpush1.bf16.msra.mxu0 0
      %2555 = vmatprep.subr.bf16.mxu0 0
      %2556 = vmatpush1.bf16.msra.mxu0 0
      %2557 = vmatprep.subr.bf16.mxu0 0
      %2558 = vmatpush1.bf16.msra.mxu0 0
      %2559 = vmatprep.subr.bf16.mxu0 0
      %2560 = vmatpush1.bf16.msra.mxu0 0
      %2561 = vmatprep.subr.bf16.mxu0 0
      %2562 = vmatpush1.bf16.msra.mxu0 0
      %2563 = vmatprep.subr.bf16.mxu0 0
      %2564 = vmatpush1.bf16.msra.mxu0 0
      %2565 = vmatprep.mubr.bf16.mxu0 0
      %2566 = vmatmul.mubr.bf16.gmra.mrb[0].mxu0 %v2519
      %v2567 = vpop.f32.mrb[0].mxu0
      %v2568 = vadd.f32 0.0, %v2567
      %v2569 = vpop.f32.mrb[0].mxu0
      %v2570 = vpop.f32.mrb[0].mxu0
      %v2571 = vadd.f32 0.0, %v2570
      %v2572 = vpop.f32.mrb[0].mxu0
      %2573 = vmatprep.mubr.bf16.mxu0 0
      %2574 = vmatmul.mubr.bf16.gmra.mrb[0].mxu0 %v2522
      %v2575 = vpop.f32.mrb[0].mxu0
      %v2576 = vadd.f32 0.0, %v2575
      %v2577 = vpop.f32.mrb[0].mxu0
      %v2578 = vpop.f32.mrb[0].mxu0
      %v2579 = vadd.f32 0.0, %v2578
      %v2580 = vpop.f32.mrb[0].mxu0
      %2581 = vmatprep.mubr.bf16.mxu0 0
      %2582 = vmatmul.mubr.bf16.gmra.mrb[0].mxu0 %v2525
      %v2583 = vpop.f32.mrb[0].mxu0
      %v2584 = vadd.f32 0.0, %v2583
      %v2585 = vpop.f32.mrb[0].mxu0
      %v2586 = vpop.f32.mrb[0].mxu0
      %v2587 = vadd.f32 0.0, %v2586
      %v2588 = vpop.f32.mrb[0].mxu0
      %2589 = vmatprep.mubr.bf16.mxu0 0
      %2590 = vmatmul.mubr.bf16.gmra.mrb[0].mxu0 %v2528
      %v2591 = vpop.f32.mrb[0].mxu0
      %v2592 = vadd.f32 0.0, %v2591
      %v2593 = vpop.f32.mrb[0].mxu0
      %v2594 = vpop.f32.mrb[0].mxu0
      %v2595 = vadd.f32 0.0, %v2594
      %v2596 = vpop.f32.mrb[0].mxu0
      %2597 = vdwg.mxu0
      %v2598 = vadd.f32 %v2479, %v2568
      %v2599 = vadd.f32 %v2480, %v2571
      %v2600 = vadd.f32 %v2481, %v2576
      %v2601 = vadd.f32 %v2482, %v2579
      %v2602 = vadd.f32 %v2483, %v2584
      %v2603 = vadd.f32 %v2484, %v2587
      %v2604 = vadd.f32 %v2485, %v2592
      %v2605 = vadd.f32 %v2486, %v2595
      %v2606 = vld [vmem:[%s2368] sm:$0xf]
      %v2607 = vld [vmem:[%s2368 + $0x4] sm:$0x1]
      %v2608 = vld [vmem:[%s2368 + $0x8] sm:$0xf]
      %v2609 = vld [vmem:[%s2368 + $0xc] sm:$0x1]
      %v2610 = vld [vmem:[%s2368 + $0x10] sm:$0xf]
      %v2611 = vld [vmem:[%s2368 + $0x14] sm:$0x1]
      %v2612 = vld [vmem:[%s2368 + $0x18] sm:$0xf]
      %v2613 = vld [vmem:[%s2368 + $0x1c] sm:$0x1]
      %v2614 = vld [vmem:[%s2368 + $0x20] sm:$0xf]
      %v2615 = vld [vmem:[%s2368 + $0x24] sm:$0x1]
      %v2616 = vld [vmem:[%s2368 + $0x28] sm:$0xf]
      %v2617 = vld [vmem:[%s2368 + $0x2c] sm:$0x1]
      %v2618 = vld [vmem:[%s2368 + $0x30] sm:$0xf]
      %v2619 = vld [vmem:[%s2368 + $0x34] sm:$0x1]
      %v2620 = vld [vmem:[%s2368 + $0x38] sm:$0xf]
      %v2621 = vld [vmem:[%s2368 + $0x3c] sm:$0x1]
      %v2623 = vshrl.u32 %v2606, 16
      %v2625 = vrot.slane %v2623, 4
      %v2626 = vshll.u32 %v2606, 16
      %v2628 = vrot.slane %v2626, 5
      %v2629 = vor.u32 %v2625, %v2628
      %v2630 = vrot.slane %v2629, 4
      %v2632 = vshll.u32 %v2607, 16
      %v2634 = vrot.slane %v2632, 5
      %v2635 = vsel %vm529, %v2630, %v2634
      %v2637 = vshrl.u32 %v2608, 16
      %v2639 = vrot.slane %v2637, 4
      %v2640 = vshll.u32 %v2608, 16
      %v2642 = vrot.slane %v2640, 5
      %v2643 = vor.u32 %v2639, %v2642
      %v2644 = vrot.slane %v2643, 4
      %v2646 = vshll.u32 %v2609, 16
      %v2648 = vrot.slane %v2646, 5
      %v2649 = vsel %vm529, %v2644, %v2648
      %v2651 = vshrl.u32 %v2610, 16
      %v2653 = vrot.slane %v2651, 4
      %v2654 = vshll.u32 %v2610, 16
      %v2656 = vrot.slane %v2654, 5
      %v2657 = vor.u32 %v2653, %v2656
      %v2658 = vrot.slane %v2657, 4
      %v2660 = vshll.u32 %v2611, 16
      %v2662 = vrot.slane %v2660, 5
      %v2663 = vsel %vm529, %v2658, %v2662
      %v2665 = vshrl.u32 %v2612, 16
      %v2667 = vrot.slane %v2665, 4
      %v2668 = vshll.u32 %v2612, 16
      %v2670 = vrot.slane %v2668, 5
      %v2671 = vor.u32 %v2667, %v2670
      %v2672 = vrot.slane %v2671, 4
      %v2674 = vshll.u32 %v2613, 16
      %v2676 = vrot.slane %v2674, 5
      %v2677 = vsel %vm529, %v2672, %v2676
      %v2679 = vshrl.u32 %v2614, 16
      %v2681 = vrot.slane %v2679, 4
      %v2682 = vshll.u32 %v2614, 16
      %v2684 = vrot.slane %v2682, 5
      %v2685 = vor.u32 %v2681, %v2684
      %v2686 = vrot.slane %v2685, 4
      %v2688 = vshll.u32 %v2615, 16
      %v2690 = vrot.slane %v2688, 5
      %v2691 = vsel %vm529, %v2686, %v2690
      %v2693 = vshrl.u32 %v2616, 16
      %v2695 = vrot.slane %v2693, 4
      %v2696 = vshll.u32 %v2616, 16
      %v2698 = vrot.slane %v2696, 5
      %v2699 = vor.u32 %v2695, %v2698
      %v2700 = vrot.slane %v2699, 4
      %v2702 = vshll.u32 %v2617, 16
      %v2704 = vrot.slane %v2702, 5
      %v2705 = vsel %vm529, %v2700, %v2704
      %v2707 = vshrl.u32 %v2618, 16
      %v2709 = vrot.slane %v2707, 4
      %v2710 = vshll.u32 %v2618, 16
      %v2712 = vrot.slane %v2710, 5
      %v2713 = vor.u32 %v2709, %v2712
      %v2714 = vrot.slane %v2713, 4
      %v2716 = vshll.u32 %v2619, 16
      %v2718 = vrot.slane %v2716, 5
      %v2719 = vsel %vm529, %v2714, %v2718
      %v2721 = vshrl.u32 %v2620, 16
      %v2723 = vrot.slane %v2721, 4
      %v2724 = vshll.u32 %v2620, 16
      %v2726 = vrot.slane %v2724, 5
      %v2727 = vor.u32 %v2723, %v2726
      %v2728 = vrot.slane %v2727, 4
      %v2730 = vshll.u32 %v2621, 16
      %v2732 = vrot.slane %v2730, 5
      %v2733 = vsel %vm529, %v2728, %v2732
      %s2734 = scalar_lea.vmem %s4, 28
      %v2735 = vld [vmem:[%s2734] sm:$0x3]
      %v2736 = vunpack.c.l.b16 %v2635
      %v2737 = vunpack.c.l.b16 %v2649
      %v2738 = vunpack.c.l.b16 %v2663
      %v2739 = vunpack.c.l.b16 %v2677
      %v2740 = vunpack.c.l.b16 %v2691
      %v2741 = vunpack.c.l.b16 %v2705
      %v2742 = vunpack.c.l.b16 %v2719
      %v2743 = vunpack.c.l.b16 %v2733
      %v2744 = vpack.c.b16 %v2737, %v2736
      %v2745 = vpack.c.b16 %v2739, %v2738
      %v2746 = vpack.c.b16 %v2741, %v2740
      %v2747 = vpack.c.b16 %v2743, %v2742
      %v2749 = vsel %vm326, %v2744, 0
      %v2752 = vsel %vm326, %v2745, 0
      %v2755 = vsel %vm326, %v2746, 0
      %v2758 = vsel %vm326, %v2747, 0
      %v2761 = vand.u32 %v2735, %v342
      %2763 = vmatprep.subr.bf16.mxu0 0
      %2764 = vmatpush1.bf16.msra.mxu0 %v2761
      %2765 = vmatprep.subr.bf16.mxu0 0
      %2766 = vmatpush1.bf16.msra.mxu0 0
      %2767 = vmatprep.subr.bf16.mxu0 0
      %2768 = vmatpush1.bf16.msra.mxu0 0
      %2769 = vmatprep.subr.bf16.mxu0 0
      %2770 = vmatpush1.bf16.msra.mxu0 0
      %2771 = vmatprep.subr.bf16.mxu0 0
      %2772 = vmatpush1.bf16.msra.mxu0 0
      %2773 = vmatprep.subr.bf16.mxu0 0
      %2774 = vmatpush1.bf16.msra.mxu0 0
      %2775 = vmatprep.subr.bf16.mxu0 0
      %2776 = vmatpush1.bf16.msra.mxu0 0
      %2777 = vmatprep.subr.bf16.mxu0 0
      %2778 = vmatpush1.bf16.msra.mxu0 0
      %2779 = vmatprep.subr.bf16.mxu0 0
      %2780 = vmatpush1.bf16.msra.mxu0 0
      %2781 = vmatprep.subr.bf16.mxu0 0
      %2782 = vmatpush1.bf16.msra.mxu0 0
      %2783 = vmatprep.subr.bf16.mxu0 0
      %2784 = vmatpush1.bf16.msra.mxu0 0
      %2785 = vmatprep.subr.bf16.mxu0 0
      %2786 = vmatpush1.bf16.msra.mxu0 0
      %2787 = vmatprep.subr.bf16.mxu0 0
      %2788 = vmatpush1.bf16.msra.mxu0 0
      %2789 = vmatprep.subr.bf16.mxu0 0
      %2790 = vmatpush1.bf16.msra.mxu0 0
      %2791 = vmatprep.subr.bf16.mxu0 0
      %2792 = vmatpush1.bf16.msra.mxu0 0
      %2793 = vmatprep.subr.bf16.mxu0 0
      %2794 = vmatpush1.bf16.msra.mxu0 0
      %2795 = vmatprep.mubr.bf16.mxu0 0
      %2796 = vmatmul.mubr.bf16.gmra.mrb[0].mxu0 %v2749
      %v2797 = vpop.f32.mrb[0].mxu0
      %v2798 = vadd.f32 0.0, %v2797
      %v2799 = vpop.f32.mrb[0].mxu0
      %v2800 = vpop.f32.mrb[0].mxu0
      %v2801 = vadd.f32 0.0, %v2800
      %v2802 = vpop.f32.mrb[0].mxu0
      %2803 = vmatprep.mubr.bf16.mxu0 0
      %2804 = vmatmul.mubr.bf16.gmra.mrb[0].mxu0 %v2752
      %v2805 = vpop.f32.mrb[0].mxu0
      %v2806 = vadd.f32 0.0, %v2805
      %v2807 = vpop.f32.mrb[0].mxu0
      %v2808 = vpop.f32.mrb[0].mxu0
      %v2809 = vadd.f32 0.0, %v2808
      %v2810 = vpop.f32.mrb[0].mxu0
      %2811 = vmatprep.mubr.bf16.mxu0 0
      %2812 = vmatmul.mubr.bf16.gmra.mrb[0].mxu0 %v2755
      %v2813 = vpop.f32.mrb[0].mxu0
      %v2814 = vadd.f32 0.0, %v2813
      %v2815 = vpop.f32.mrb[0].mxu0
      %v2816 = vpop.f32.mrb[0].mxu0
      %v2817 = vadd.f32 0.0, %v2816
      %v2818 = vpop.f32.mrb[0].mxu0
      %2819 = vmatprep.mubr.bf16.mxu0 0
      %2820 = vmatmul.mubr.bf16.gmra.mrb[0].mxu0 %v2758
      %v2821 = vpop.f32.mrb[0].mxu0
      %v2822 = vadd.f32 0.0, %v2821
      %v2823 = vpop.f32.mrb[0].mxu0
      %v2824 = vpop.f32.mrb[0].mxu0
      %v2825 = vadd.f32 0.0, %v2824
      %v2826 = vpop.f32.mrb[0].mxu0
      %2827 = vdwg.mxu0
      %v2828 = vadd.f32 %v2598, %v2798
      %v2829 = vadd.f32 %v2599, %v2801
      %v2830 = vadd.f32 %v2600, %v2806
      %v2831 = vadd.f32 %v2601, %v2809
      %v2832 = vadd.f32 %v2602, %v2814
      %v2833 = vadd.f32 %v2603, %v2817
      %v2834 = vadd.f32 %v2604, %v2822
      %v2835 = vadd.f32 %v2605, %v2825
      %v2836 = vld [vmem:[%s2487] sm:$0xf]
      %v2837 = vld [vmem:[%s2487 + $0x4] sm:$0x1]
      %v2838 = vld [vmem:[%s2487 + $0x8] sm:$0xf]
      %v2839 = vld [vmem:[%s2487 + $0xc] sm:$0x1]
      %v2840 = vld [vmem:[%s2487 + $0x10] sm:$0xf]
      %v2841 = vld [vmem:[%s2487 + $0x14] sm:$0x1]
      %v2842 = vld [vmem:[%s2487 + $0x18] sm:$0xf]
      %v2843 = vld [vmem:[%s2487 + $0x1c] sm:$0x1]
      %v2844 = vld [vmem:[%s2487 + $0x20] sm:$0xf]
      %v2845 = vld [vmem:[%s2487 + $0x24] sm:$0x1]
      %v2846 = vld [vmem:[%s2487 + $0x28] sm:$0xf]
      %v2847 = vld [vmem:[%s2487 + $0x2c] sm:$0x1]
      %v2848 = vld [vmem:[%s2487 + $0x30] sm:$0xf]
      %v2849 = vld [vmem:[%s2487 + $0x34] sm:$0x1]
      %v2850 = vld [vmem:[%s2487 + $0x38] sm:$0xf]
      %v2851 = vld [vmem:[%s2487 + $0x3c] sm:$0x1]
      %v2853 = vshrl.u32 %v2836, 16
      %v2855 = vrot.slane %v2853, 4
      %v2856 = vshll.u32 %v2836, 16
      %v2858 = vrot.slane %v2856, 5
      %v2859 = vor.u32 %v2855, %v2858
      %v2860 = vrot.slane %v2859, 4
      %v2862 = vshll.u32 %v2837, 16
      %v2864 = vrot.slane %v2862, 5
      %v2865 = vsel %vm529, %v2860, %v2864
      %v2867 = vshrl.u32 %v2838, 16
      %v2869 = vrot.slane %v2867, 4
      %v2870 = vshll.u32 %v2838, 16
      %v2872 = vrot.slane %v2870, 5
      %v2873 = vor.u32 %v2869, %v2872
      %v2874 = vrot.slane %v2873, 4
      %v2876 = vshll.u32 %v2839, 16
      %v2878 = vrot.slane %v2876, 5
      %v2879 = vsel %vm529, %v2874, %v2878
      %v2881 = vshrl.u32 %v2840, 16
      %v2883 = vrot.slane %v2881, 4
      %v2884 = vshll.u32 %v2840, 16
      %v2886 = vrot.slane %v2884, 5
      %v2887 = vor.u32 %v2883, %v2886
      %v2888 = vrot.slane %v2887, 4
      %v2890 = vshll.u32 %v2841, 16
      %v2892 = vrot.slane %v2890, 5
      %v2893 = vsel %vm529, %v2888, %v2892
      %v2895 = vshrl.u32 %v2842, 16
      %v2897 = vrot.slane %v2895, 4
      %v2898 = vshll.u32 %v2842, 16
      %v2900 = vrot.slane %v2898, 5
      %v2901 = vor.u32 %v2897, %v2900
      %v2902 = vrot.slane %v2901, 4
      %v2904 = vshll.u32 %v2843, 16
      %v2906 = vrot.slane %v2904, 5
      %v2907 = vsel %vm529, %v2902, %v2906
      %v2909 = vshrl.u32 %v2844, 16
      %v2911 = vrot.slane %v2909, 4
      %v2912 = vshll.u32 %v2844, 16
      %v2914 = vrot.slane %v2912, 5
      %v2915 = vor.u32 %v2911, %v2914
      %v2916 = vrot.slane %v2915, 4
      %v2918 = vshll.u32 %v2845, 16
      %v2920 = vrot.slane %v2918, 5
      %v2921 = vsel %vm529, %v2916, %v2920
      %v2923 = vshrl.u32 %v2846, 16
      %v2925 = vrot.slane %v2923, 4
      %v2926 = vshll.u32 %v2846, 16
      %v2928 = vrot.slane %v2926, 5
      %v2929 = vor.u32 %v2925, %v2928
      %v2930 = vrot.slane %v2929, 4
      %v2932 = vshll.u32 %v2847, 16
      %v2934 = vrot.slane %v2932, 5
      %v2935 = vsel %vm529, %v2930, %v2934
      %v2937 = vshrl.u32 %v2848, 16
      %v2939 = vrot.slane %v2937, 4
      %v2940 = vshll.u32 %v2848, 16
      %v2942 = vrot.slane %v2940, 5
      %v2943 = vor.u32 %v2939, %v2942
      %v2944 = vrot.slane %v2943, 4
      %v2946 = vshll.u32 %v2849, 16
      %v2948 = vrot.slane %v2946, 5
      %v2949 = vsel %vm529, %v2944, %v2948
      %v2951 = vshrl.u32 %v2850, 16
      %v2953 = vrot.slane %v2951, 4
      %v2954 = vshll.u32 %v2850, 16
      %v2956 = vrot.slane %v2954, 5
      %v2957 = vor.u32 %v2953, %v2956
      %v2958 = vrot.slane %v2957, 4
      %v2960 = vshll.u32 %v2851, 16
      %v2962 = vrot.slane %v2960, 5
      %v2963 = vsel %vm529, %v2958, %v2962
      %s2964 = scalar_lea.vmem %s4, 30
      %v2965 = vld [vmem:[%s2964] sm:$0x3]
      %v2966 = vunpack.c.l.b16 %v2865
      %v2967 = vunpack.c.l.b16 %v2879
      %v2968 = vunpack.c.l.b16 %v2893
      %v2969 = vunpack.c.l.b16 %v2907
      %v2970 = vunpack.c.l.b16 %v2921
      %v2971 = vunpack.c.l.b16 %v2935
      %v2972 = vunpack.c.l.b16 %v2949
      %v2973 = vunpack.c.l.b16 %v2963
      %v2974 = vpack.c.b16 %v2967, %v2966
      %v2975 = vpack.c.b16 %v2969, %v2968
      %v2976 = vpack.c.b16 %v2971, %v2970
      %v2977 = vpack.c.b16 %v2973, %v2972
      %v2979 = vsel %vm326, %v2974, 0
      %v2982 = vsel %vm326, %v2975, 0
      %v2985 = vsel %vm326, %v2976, 0
      %v2988 = vsel %vm326, %v2977, 0
      %v2991 = vand.u32 %v2965, %v342
      %2993 = vmatprep.subr.bf16.mxu0 0
      %2994 = vmatpush1.bf16.msra.mxu0 %v2991
      %2995 = vmatprep.subr.bf16.mxu0 0
      %2996 = vmatpush1.bf16.msra.mxu0 0
      %2997 = vmatprep.subr.bf16.mxu0 0
      %2998 = vmatpush1.bf16.msra.mxu0 0
      %2999 = vmatprep.subr.bf16.mxu0 0
      %3000 = vmatpush1.bf16.msra.mxu0 0
      %3001 = vmatprep.subr.bf16.mxu0 0
      %3002 = vmatpush1.bf16.msra.mxu0 0
      %3003 = vmatprep.subr.bf16.mxu0 0
      %3004 = vmatpush1.bf16.msra.mxu0 0
      %3005 = vmatprep.subr.bf16.mxu0 0
      %3006 = vmatpush1.bf16.msra.mxu0 0
      %3007 = vmatprep.subr.bf16.mxu0 0
      %3008 = vmatpush1.bf16.msra.mxu0 0
      %3009 = vmatprep.subr.bf16.mxu0 0
      %3010 = vmatpush1.bf16.msra.mxu0 0
      %3011 = vmatprep.subr.bf16.mxu0 0
      %3012 = vmatpush1.bf16.msra.mxu0 0
      %3013 = vmatprep.subr.bf16.mxu0 0
      %3014 = vmatpush1.bf16.msra.mxu0 0
      %3015 = vmatprep.subr.bf16.mxu0 0
      %3016 = vmatpush1.bf16.msra.mxu0 0
      %3017 = vmatprep.subr.bf16.mxu0 0
      %3018 = vmatpush1.bf16.msra.mxu0 0
      %3019 = vmatprep.subr.bf16.mxu0 0
      %3020 = vmatpush1.bf16.msra.mxu0 0
      %3021 = vmatprep.subr.bf16.mxu0 0
      %3022 = vmatpush1.bf16.msra.mxu0 0
      %3023 = vmatprep.subr.bf16.mxu0 0
      %3024 = vmatpush1.bf16.msra.mxu0 0
      %3025 = vmatprep.mubr.bf16.mxu0 0
      %3026 = vmatmul.mubr.bf16.gmra.mrb[0].mxu0 %v2979
      %v3027 = vpop.f32.mrb[0].mxu0
      %v3028 = vadd.f32 0.0, %v3027
      %v3029 = vpop.f32.mrb[0].mxu0
      %v3030 = vpop.f32.mrb[0].mxu0
      %v3031 = vadd.f32 0.0, %v3030
      %v3032 = vpop.f32.mrb[0].mxu0
      %3033 = vmatprep.mubr.bf16.mxu0 0
      %3034 = vmatmul.mubr.bf16.gmra.mrb[0].mxu0 %v2982
      %v3035 = vpop.f32.mrb[0].mxu0
      %v3036 = vadd.f32 0.0, %v3035
      %v3037 = vpop.f32.mrb[0].mxu0
      %v3038 = vpop.f32.mrb[0].mxu0
      %v3039 = vadd.f32 0.0, %v3038
      %v3040 = vpop.f32.mrb[0].mxu0
      %3041 = vmatprep.mubr.bf16.mxu0 0
      %3042 = vmatmul.mubr.bf16.gmra.mrb[0].mxu0 %v2985
      %v3043 = vpop.f32.mrb[0].mxu0
      %v3044 = vadd.f32 0.0, %v3043
      %v3045 = vpop.f32.mrb[0].mxu0
      %v3046 = vpop.f32.mrb[0].mxu0
      %v3047 = vadd.f32 0.0, %v3046
      %v3048 = vpop.f32.mrb[0].mxu0
      %3049 = vmatprep.mubr.bf16.mxu0 0
      %3050 = vmatmul.mubr.bf16.gmra.mrb[0].mxu0 %v2988
      %v3051 = vpop.f32.mrb[0].mxu0
      %v3052 = vadd.f32 0.0, %v3051
      %v3053 = vpop.f32.mrb[0].mxu0
      %v3054 = vpop.f32.mrb[0].mxu0
      %v3055 = vadd.f32 0.0, %v3054
      %v3056 = vpop.f32.mrb[0].mxu0
      %3057 = vdwg.mxu0
      %v3058 = vadd.f32 %v2828, %v3028
      %v3059 = vadd.f32 %v2829, %v3031
      %v3060 = vadd.f32 %v2830, %v3036
      %v3061 = vadd.f32 %v2831, %v3039
      %v3062 = vadd.f32 %v2832, %v3044
      %v3063 = vadd.f32 %v2833, %v3047
      %v3064 = vadd.f32 %v2834, %v3052
      %v3065 = vadd.f32 %v2835, %v3055
      %vm3066 = vcmp.gt.f32.partialorder %v3058, 0.0
      %vm3067 = vcmp.gt.f32.partialorder %v3059, 0.0
      %vm3068 = vcmp.gt.f32.partialorder %v3060, 0.0
      %vm3069 = vcmp.gt.f32.partialorder %v3061, 0.0
      %vm3070 = vcmp.gt.f32.partialorder %v3062, 0.0
      %vm3071 = vcmp.gt.f32.partialorder %v3063, 0.0
      %vm3072 = vcmp.gt.f32.partialorder %v3064, 0.0
      %vm3073 = vcmp.gt.f32.partialorder %v3065, 0.0
      %v3074 = vmul.f32 %v3058, 0.2
      %v3075 = vmul.f32 %v3059, 0.2
      %v3076 = vmul.f32 %v3060, 0.2
      %v3077 = vmul.f32 %v3061, 0.2
      %v3078 = vmul.f32 %v3062, 0.2
      %v3079 = vmul.f32 %v3063, 0.2
      %v3080 = vmul.f32 %v3064, 0.2
      %v3081 = vmul.f32 %v3065, 0.2
      %v3082 = vsel %vm3066, %v3058, %v3074
      %v3083 = vsel %vm3067, %v3059, %v3075
      %v3084 = vsel %vm3068, %v3060, %v3076
      %v3085 = vsel %vm3069, %v3061, %v3077
      %v3086 = vsel %vm3070, %v3062, %v3078
      %v3087 = vsel %vm3071, %v3063, %v3079
      %v3088 = vsel %vm3072, %v3064, %v3080
      %v3089 = vsel %vm3073, %v3065, %v3081
      %v3090 = vpack.c.bf16 %v3083, %v3082
      %v3091 = vpack.c.bf16 %v3085, %v3084
      %v3092 = vpack.c.bf16 %v3087, %v3086
      %v3093 = vpack.c.bf16 %v3089, %v3088
      %v3098 = vunpack.c.l.b16 %v3090
      %v3099 = vunpack.c.h.b16 %v3090
      %v3100 = vunpack.c.l.b16 %v3091
      %v3101 = vunpack.c.h.b16 %v3091
      %v3102 = vunpack.c.l.b16 %v3092
      %v3103 = vunpack.c.h.b16 %v3092
      %v3104 = vunpack.c.l.b16 %v3093
      %v3105 = vunpack.c.h.b16 %v3093
      %v3106 = vpack.c.b16 %v3098, %v3098
      %v3107 = vpack.c.b16 %v3099, %v3099
      %v3108 = vpack.c.b16 %v3100, %v3100
      %v3109 = vpack.c.b16 %v3101, %v3101
      %v3110 = vpack.c.b16 %v3102, %v3102
      %v3111 = vpack.c.b16 %v3103, %v3103
      %v3112 = vpack.c.b16 %v3104, %v3104
      %v3113 = vpack.c.b16 %v3105, %v3105
      %3122 = vst [vmem:[%s284] sm:$0xf] %v3106
      %3123 = vst [vmem:[%s284 + $0x4] sm:$0xf] %v3107
      %3124 = vst [vmem:[%s284 + $0x8] sm:$0xf] %v3108
      %3125 = vst [vmem:[%s284 + $0xc] sm:$0xf] %v3109
      %3126 = vst [vmem:[%s284 + $0x10] sm:$0xf] %v3110
      %3127 = vst [vmem:[%s284 + $0x14] sm:$0xf] %v3111
      %3128 = vst [vmem:[%s284 + $0x18] sm:$0xf] %v3112
      %3129 = vst [vmem:[%s284 + $0x1c] sm:$0xf] %v3113
      %s3130 = smul.u32 8, %s16
      %p3131 = scmp.lt.s32.totalorder %s3130, 15
      %s3132 = scalar_select %p3131, %s3130, 15
      %s3133 = smul.addr %s3132, 4
      %s3134 = scalar_lea.vmem %s5, %s3133
      // Predicated region
      $region41: #{discriminator_forward.3} parent=39 // pred_check
        %p3135 = pneg %p159
      $region42: #{discriminator_forward.3} parent=39 // pred_check_branch
        %3137 = sbr.rel (%p3135) target = $region44
      $region43: #{discriminator_forward.3} parent=39 // pred_region
        %s3138 = smul.u32 8, %s16
      $region44: #{discriminator_forward.3} parent=39 // pred_fallthru
        _
    $region40: #{discriminator_forward.3} parent=5 // pred_fallthru
      _
    %p3139 = scmp.le.s32.totalorder 2, %s11
    // Predicated region
    $region45: #{discriminator_forward.3} parent=5 // pred_check
      %p3140 = pneg %p3139
    $region46: #{discriminator_forward.3} parent=5 // pred_check_branch
      %3142 = sbr.rel (%p3140) target = $region48
    $region47: #{discriminator_forward.3} parent=5 // pred_region
      %s3143 = ssub.s32 %s11, 2
      // Predicated region
      $region49: #{discriminator_forward.3} parent=47 // pred_check
        %p3144 = pneg %p165
      $region50: #{discriminator_forward.3} parent=47 // pred_check_branch
        %3146 = sbr.rel (%p3144) target = $region52
      $region51: #{discriminator_forward.3} parent=47 // pred_region
        %s3147 = smul.u32 8, %s17
        %p3148 = scmp.lt.s32.totalorder %s3147, 15
        %s3149 = scalar_select %p3148, %s3147, 15
        %s3150 = smul.addr %s3149, 4
        %s3151 = scalar_lea.vmem %s5, %s3150
      $region52: #{discriminator_forward.3} parent=47 // pred_fallthru
        _
    $region48: #{discriminator_forward.3} parent=5 // pred_fallthru
      _
  $region6: #{discriminator_forward.3} parent=0 // loop_footer
    %s15 = sadd.s32 1, %s11
  $region7: #{discriminator_forward.3} parent=0 // loop_footer_branch
    %10 = sbr.rel target = $region3
  $region8: #{discriminator_forward.3} parent=0 // loop_exit
    _

</llo_original>
